<compile_context>
chip_gen: v7x
topology: tpu7x:2x2x1
jax: 0.10.0
libtpu: 0.0.40
codegen_flags: <defaults>
</compile_context>

<pallas_src>
import functools

import jax
import jax.numpy as jnp
import numpy as np
from jax.experimental import pallas as pl

K4 = 4  # every conv / conv-transpose in the module uses kernel_size=4


# ---------------------------------------------------------------------------
# Pallas kernels (full-array VMEM blocks; everything fits trivially)
# ---------------------------------------------------------------------------
def _gemm_bias_act_kernel(a_ref, w_ref, b_ref, o_ref, *, relu):
    """o = a @ w + b (+ ReLU).  a:(M,K) bf16, w:(K,N) bf16, b:(1,N) f32."""
    acc = jnp.dot(a_ref[...], w_ref[...], preferred_element_type=jnp.float32)
    acc = acc + b_ref[...]
    if relu:
        acc = jnp.maximum(acc, 0.0)
    o_ref[...] = acc


def _gemm_kernel(a_ref, w_ref, o_ref):
    """o = a @ w (decoder patch GEMM; bias/ReLU applied after col2im)."""
    o_ref[...] = jnp.dot(a_ref[...], w_ref[...], preferred_element_type=jnp.float32)


def _latent_kernel(h_ref, eps_ref, wmu_ref, bmu_ref, wlv_ref, blv_ref,
                   wd_ref, bd_ref, mu_ref, lv_ref, d_ref):
    """Fused fc_mu + fc_logvar + reparameterize + fc_decode."""
    h = h_ref[...]                                                   # (B, 4F) bf16
    mu = jnp.dot(h, wmu_ref[...], preferred_element_type=jnp.float32) + bmu_ref[...]
    lv = jnp.dot(h, wlv_ref[...], preferred_element_type=jnp.float32) + blv_ref[...]
    z = mu + eps_ref[...] * jnp.exp(0.5 * lv)                        # VPU + EUP
    d = jnp.dot(z.astype(jnp.bfloat16), wd_ref[...],
                preferred_element_type=jnp.float32) + bd_ref[...]
    mu_ref[...] = mu
    lv_ref[...] = lv
    d_ref[...] = d


def _gemm_bias_act(a, w, b_row, relu):
    return pl.pallas_call(
        functools.partial(_gemm_bias_act_kernel, relu=relu),
        out_shape=jax.ShapeDtypeStruct((a.shape[0], w.shape[1]), jnp.float32),
    )(a, w, b_row)


def _gemm(a, w):
    return pl.pallas_call(
        _gemm_kernel,
        out_shape=jax.ShapeDtypeStruct((a.shape[0], w.shape[1]), jnp.float32),
    )(a, w)


# ---------------------------------------------------------------------------
# Conv / ConvTranspose built around the Pallas GEMMs
# ---------------------------------------------------------------------------
def conv2d(x_nhwc, w_mat, b_row, *, stride, padding, relu):
    """Standard conv (encoder).  w_mat: (kh*kw*Cin, Cout) bf16, pre-prepared."""
    if padding:
        x_nhwc = jnp.pad(
            x_nhwc, ((0, 0), (padding, padding), (padding, padding), (0, 0)))
    B, H, W, C = x_nhwc.shape
    OH = (H - K4) // stride + 1
    OW = (W - K4) // stride + 1
    # im2col emitted directly in the (B*OH*OW, kh*kw*Cin) layout the GEMM wants.
    taps = [x_nhwc[:, i:i + stride * OH:stride, j:j + stride * OW:stride, :]
            for i in range(K4) for j in range(K4)]
    a = jnp.stack(taps, axis=3).reshape(B * OH * OW, K4 * K4 * C)
    out = _gemm_bias_act(a.astype(jnp.bfloat16), w_mat, b_row, relu)
    return out.reshape(B, OH, OW, w_mat.shape[1])


def conv_transpose2d(x_nhwc, w_mat, b_vec, *, stride, padding, relu):
    """ConvTranspose lowered as (x @ W) -> col2im overlap-add.  No zero
    insertion: the GEMM contracts only over real input channels.
    w_mat: (Cin, kh*kw*Cout) bf16, column order (r, c, o), pre-prepared."""
    B, H, W, C = x_nhwc.shape
    O = w_mat.shape[1] // (K4 * K4)
    patches = _gemm(x_nhwc.reshape(B * H * W, C).astype(jnp.bfloat16), w_mat)
    patches = patches.reshape(B, H, W, K4, K4, O)
    HF = (H - 1) * stride + K4
    WF = (W - 1) * stride + K4
    out = jnp.zeros((B, HF, WF, O), jnp.float32)
    for r in range(K4):
        for c in range(K4):
            out = out.at[:, r:r + stride * (H - 1) + 1:stride,
                         c:c + stride * (W - 1) + 1:stride, :].add(
                             patches[:, :, :, r, c, :])
    if padding:
        out = out[:, padding:HF - padding, padding:WF - padding, :]
    out = out + b_vec
    if relu:
        out = jnp.maximum(out, 0.0)
    return out


# ---------------------------------------------------------------------------
# Parameters: torch-layout init + one-time GEMM-ready preparation
# ---------------------------------------------------------------------------
def init_params(key, in_channels, num_filters, latent_dim):
    """Random parameters in the PyTorch layouts of the reference module."""
    ks = jax.random.split(key, 9)
    w = lambda k, shape: 0.05 * jax.random.normal(k, shape, jnp.float32)
    F_ = num_filters
    flat = F_ * 2 * 2
    return dict(
        enc1_w=w(ks[0], (F_, in_channels, 4, 4)), enc1_b=jnp.zeros((F_,), jnp.float32),
        enc2_w=w(ks[1], (F_, F_, 4, 4)),          enc2_b=jnp.zeros((F_,), jnp.float32),
        enc3_w=w(ks[2], (F_, F_, 4, 4)),          enc3_b=jnp.zeros((F_,), jnp.float32),
        fc_mu_w=w(ks[3], (latent_dim, flat)),     fc_mu_b=jnp.zeros((latent_dim,), jnp.float32),
        fc_lv_w=w(ks[4], (latent_dim, flat)),     fc_lv_b=jnp.zeros((latent_dim,), jnp.float32),
        fc_dec_w=w(ks[5], (flat, latent_dim)),    fc_dec_b=jnp.zeros((flat,), jnp.float32),
        dec1_w=w(ks[6], (F_, F_, 4, 4)),          dec1_b=jnp.zeros((F_,), jnp.float32),
        dec2_w=w(ks[7], (F_, F_, 4, 4)),          dec2_b=jnp.zeros((F_,), jnp.float32),
        dec3_w=w(ks[8], (F_, in_channels, 4, 4)), dec3_b=jnp.zeros((in_channels,), jnp.float32),
    )


def prepare_params(tp):
    """One-time conversion (outside the jitted hot path) of torch-layout params
    into GEMM-ready bf16 operands; fc weights are additionally permuted so the
    flatten around the latent block is a free reshape (no activation transpose)."""
    F_ = tp["enc1_w"].shape[0]
    L = tp["fc_mu_w"].shape[0]

    def conv_w(w):          # (O, I, kh, kw) -> (kh*kw*I, O), tap-major K
        return jnp.transpose(w, (2, 3, 1, 0)).reshape(-1, w.shape[0]).astype(jnp.bfloat16)

    def convT_w(w):         # (I, O, kh, kw) -> (I, kh*kw*O), N order (r, c, o)
        I, O, kh, kw = w.shape
        return jnp.transpose(w, (0, 2, 3, 1)).reshape(I, kh * kw * O).astype(jnp.bfloat16)

    def fc_enc_w(w):        # torch (L, flat) over (f, q) -> (4*F, L), rows (q, f)
        return jnp.transpose(w.reshape(L, F_, 4), (2, 1, 0)).reshape(4 * F_, L).astype(jnp.bfloat16)

    # fc_decode: permute output columns from torch (f, q) order to (q, f) order
    # so the decoder consumes the result with a free reshape to NHWC.
    wdec = jnp.transpose(tp["fc_dec_w"].reshape(F_, 4, L), (2, 1, 0)).reshape(L, 4 * F_)
    bdec = jnp.transpose(tp["fc_dec_b"].reshape(F_, 4), (1, 0)).reshape(1, 4 * F_)

    row = lambda b: b.reshape(1, -1).astype(jnp.float32)
    return dict(
        enc1_wm=conv_w(tp["enc1_w"]), enc1_b=row(tp["enc1_b"]),
        enc2_wm=conv_w(tp["enc2_w"]), enc2_b=row(tp["enc2_b"]),
        enc3_wm=conv_w(tp["enc3_w"]), enc3_b=row(tp["enc3_b"]),
        fc_mu_wm=fc_enc_w(tp["fc_mu_w"]), fc_mu_b=row(tp["fc_mu_b"]),
        fc_lv_wm=fc_enc_w(tp["fc_lv_w"]), fc_lv_b=row(tp["fc_lv_b"]),
        fc_dec_wm=wdec.astype(jnp.bfloat16), fc_dec_b=bdec.astype(jnp.float32),
        dec1_wm=convT_w(tp["dec1_w"]), dec1_b=tp["dec1_b"],
        dec2_wm=convT_w(tp["dec2_w"]), dec2_b=tp["dec2_b"],
        dec3_wm=convT_w(tp["dec3_w"]), dec3_b=tp["dec3_b"],
    )


# ---------------------------------------------------------------------------
# Forward
# ---------------------------------------------------------------------------
def vae_forward(p, x_nchw, eps):
    """forward(x) -> (recon_x, mu, logvar).  x / recon_x are NCHW like torch."""
    B = x_nchw.shape[0]
    F_ = p["enc1_wm"].shape[1]
    L = p["fc_mu_wm"].shape[1]

    x = jnp.transpose(x_nchw, (0, 2, 3, 1))                   # NCHW -> NHWC

    # ---- encoder ----  (Dropout(0.2) layers are inference-mode identities)
    h = conv2d(x, p["enc1_wm"], p["enc1_b"], stride=2, padding=0, relu=True)
    h = conv2d(h, p["enc2_wm"], p["enc2_b"], stride=2, padding=1, relu=True)
    h = conv2d(h, p["enc3_wm"], p["enc3_b"], stride=3, padding=0, relu=True)  # (B,2,2,F)

    # fc weights were pre-permuted to consume the (h, w, f) flatten order,
    # so this is a free contiguous reshape (no transpose).
    h_flat = h.reshape(B, 2 * 2 * F_)

    # ---- fused latent block: fc_mu + fc_logvar + reparameterize + fc_decode ----
    mu, logvar, d = pl.pallas_call(
        _latent_kernel,
        out_shape=(jax.ShapeDtypeStruct((B, L), jnp.float32),
                   jax.ShapeDtypeStruct((B, L), jnp.float32),
                   jax.ShapeDtypeStruct((B, 2 * 2 * F_), jnp.float32)),
    )(h_flat.astype(jnp.bfloat16), eps,
      p["fc_mu_wm"], p["fc_mu_b"], p["fc_lv_wm"], p["fc_lv_b"],
      p["fc_dec_wm"], p["fc_dec_b"])

    # fc_decode output is already in (h, w, f) order -> NHWC via free reshape.
    d = d.reshape(B, 2, 2, F_)

    # ---- decoder ----
    d = conv_transpose2d(d, p["dec1_wm"], p["dec1_b"], stride=3, padding=0, relu=True)
    d = conv_transpose2d(d, p["dec2_wm"], p["dec2_b"], stride=2, padding=1, relu=True)
    d = conv_transpose2d(d, p["dec3_wm"], p["dec3_b"], stride=2, padding=0, relu=False)
    recon = jnp.transpose(d, (0, 3, 1, 2))                    # NHWC -> NCHW
    return recon, mu, logvar


# ---------------------------------------------------------------------------
# Pure-JAX (XLA) reference of the same forward, using the torch layouts
# ---------------------------------------------------------------------------
def _ref_forward(tp, x_nchw, eps):
    dn = ("NCHW", "OIHW", "NCHW")

    def conv(x, w, b, s, p):
        y = jax.lax.conv_general_dilated(x, w, (s, s), [(p, p), (p, p)],
                                         dimension_numbers=dn)
        return y + b.reshape(1, -1, 1, 1)

    def convT(x, w, b, s, p):
        # zero-insertion + flipped-kernel stride-1 conv == ConvTranspose2d
        w_f = jnp.transpose(jnp.flip(w, (2, 3)), (1, 0, 2, 3))
        y = jax.lax.conv_general_dilated(x, w_f, (1, 1),
                                         [(K4 - 1 - p, K4 - 1 - p)] * 2,
                                         lhs_dilation=(s, s),
                                         dimension_numbers=dn)
        return y + b.reshape(1, -1, 1, 1)

    B = x_nchw.shape[0]
    h = jax.nn.relu(conv(x_nchw, tp["enc1_w"], tp["enc1_b"], 2, 0))
    h = jax.nn.relu(conv(h, tp["enc2_w"], tp["enc2_b"], 2, 1))
    h = jax.nn.relu(conv(h, tp["enc3_w"], tp["enc3_b"], 3, 0))
    hf = h.reshape(B, -1)
    mu = hf @ tp["fc_mu_w"].T + tp["fc_mu_b"]
    lv = hf @ tp["fc_lv_w"].T + tp["fc_lv_b"]
    z = mu + eps * jnp.exp(0.5 * lv)
    d = (z @ tp["fc_dec_w"].T + tp["fc_dec_b"]).reshape(B, -1, 2, 2)
    d = jax.nn.relu(convT(d, tp["dec1_w"], tp["dec1_b"], 3, 0))
    d = jax.nn.relu(convT(d, tp["dec2_w"], tp["dec2_b"], 2, 1))
    d = convT(d, tp["dec3_w"], tp["dec3_b"], 2, 0)
    return d, mu, lv


if __name__ == "__main__":
    # The architecture (k=4 convs with strides 2,2,3) forces a 2x2 encoder
    # output, so the spatial input must be 34x34; channels / filters / latent
    # are scaled down to keep the example small.
    B, C_IN, HW, NUM_FILTERS, LATENT = 2, 4, 34, 32, 16

    key = jax.random.PRNGKey(0)
    kx, keps, kp = jax.random.split(key, 3)
    x = jax.random.normal(kx, (B, C_IN, HW, HW), jnp.float32)
    eps = jax.random.normal(keps, (B, LATENT), jnp.float32)     # reparam noise

    torch_params = init_params(kp, C_IN, NUM_FILTERS, LATENT)   # torch layouts
    params = prepare_params(torch_params)                       # once, off the hot path

    fwd = jax.jit(vae_forward)
    recon, mu, logvar = fwd(params, x, eps)
    jax.block_until_ready((recon, mu, logvar))

    assert recon.shape == (B, C_IN, 30, 30), recon.shape
    assert mu.shape == (B, LATENT) and logvar.shape == (B, LATENT)

    # Correctness check against the pure-JAX reference (loose tolerances to
    # absorb the intentional bf16 GEMM operands).
    recon_r, mu_r, logvar_r = _ref_forward(torch_params, x, eps)
    np.testing.assert_allclose(np.asarray(mu), np.asarray(mu_r), rtol=0.2, atol=1e-2)
    np.testing.assert_allclose(np.asarray(logvar), np.asarray(logvar_r), rtol=0.2, atol=1e-2)
    np.testing.assert_allclose(np.asarray(recon), np.asarray(recon_r), rtol=0.2, atol=2e-2)

    print("KERNEL_OK")
</pallas_src>

<mosaic_0001>
module attributes {stable_mosaic.version = 11 : i64} {
  func.func @_gemm_bias_act_kernel(%arg0: memref<512x64xbf16, #tpu.memory_space<vmem>>, %arg1: memref<64x32xbf16, #tpu.memory_space<vmem>>, %arg2: memref<1x32xf32, #tpu.memory_space<vmem>>, %arg3: memref<512x32xf32, #tpu.memory_space<vmem>>) attributes {dimension_semantics = [], scalar_prefetch = 0 : i64, scratch_operands = 0 : i64, tpu.core_type = #tpu.core_type<tc>} {
    %c0 = arith.constant 0 : index
    %c0_0 = arith.constant 0 : index
    %0 = vector.load %arg0[%c0, %c0_0] : memref<512x64xbf16, #tpu.memory_space<vmem>>, vector<512x64xbf16>
    %c0_1 = arith.constant 0 : index
    %c0_2 = arith.constant 0 : index
    %1 = vector.load %arg1[%c0_1, %c0_2] : memref<64x32xbf16, #tpu.memory_space<vmem>>, vector<64x32xbf16>
    %cst = arith.constant dense<0.000000e+00> : vector<512x32xf32>
    %2 = tpu.matmul %0, %1, %cst {dimension_numbers = #tpu.dot_dimension_numbers<[1], [0], [0], [1], [0, 0, 1, 1], [], []>} : vector<512x64xbf16>, vector<64x32xbf16>, vector<512x32xf32> -> vector<512x32xf32>
    %c0_3 = arith.constant 0 : index
    %c0_4 = arith.constant 0 : index
    %3 = vector.load %arg2[%c0_3, %c0_4] : memref<1x32xf32, #tpu.memory_space<vmem>>, vector<1x32xf32>
    %4 = vector.broadcast %3 : vector<1x32xf32> to vector<512x32xf32>
    %5 = arith.addf %2, %4 : vector<512x32xf32>
    %cst_5 = arith.constant 0.000000e+00 : f32
    %6 = vector.broadcast %cst_5 : f32 to vector<512x32xf32>
    %7 = arith.maximumf %5, %6 : vector<512x32xf32>
    %c0_6 = arith.constant 0 : index
    %c0_7 = arith.constant 0 : index
    %8 = vector.load %arg3[%c0_6, %c0_7] : memref<512x32xf32, #tpu.memory_space<vmem>>, vector<512x32xf32>
    tpu.vector_store %arg3[%c0_6, %c0_7], %7 {strides = array<i32>} : memref<512x32xf32, #tpu.memory_space<vmem>>, vector<512x32xf32>,
    return
  }
}

module attributes {stable_mosaic.version = 11 : i64} {
  func.func @_gemm_bias_act_kernel(%arg0: memref<128x512xbf16, #tpu.memory_space<vmem>>, %arg1: memref<512x32xbf16, #tpu.memory_space<vmem>>, %arg2: memref<1x32xf32, #tpu.memory_space<vmem>>, %arg3: memref<128x32xf32, #tpu.memory_space<vmem>>) attributes {dimension_semantics = [], scalar_prefetch = 0 : i64, scratch_operands = 0 : i64, tpu.core_type = #tpu.core_type<tc>} {
    %c0 = arith.constant 0 : index
    %c0_0 = arith.constant 0 : index
    %0 = vector.load %arg0[%c0, %c0_0] : memref<128x512xbf16, #tpu.memory_space<vmem>>, vector<128x512xbf16>
    %c0_1 = arith.constant 0 : index
    %c0_2 = arith.constant 0 : index
    %1 = vector.load %arg1[%c0_1, %c0_2] : memref<512x32xbf16, #tpu.memory_space<vmem>>, vector<512x32xbf16>
    %cst = arith.constant dense<0.000000e+00> : vector<128x32xf32>
    %2 = tpu.matmul %0, %1, %cst {dimension_numbers = #tpu.dot_dimension_numbers<[1], [0], [0], [1], [0, 0, 1, 1], [], []>} : vector<128x512xbf16>, vector<512x32xbf16>, vector<128x32xf32> -> vector<128x32xf32>
    %c0_3 = arith.constant 0 : index
    %c0_4 = arith.constant 0 : index
    %3 = vector.load %arg2[%c0_3, %c0_4] : memref<1x32xf32, #tpu.memory_space<vmem>>, vector<1x32xf32>
    %4 = vector.broadcast %3 : vector<1x32xf32> to vector<128x32xf32>
    %5 = arith.addf %2, %4 : vector<128x32xf32>
    %cst_5 = arith.constant 0.000000e+00 : f32
    %6 = vector.broadcast %cst_5 : f32 to vector<128x32xf32>
    %7 = arith.maximumf %5, %6 : vector<128x32xf32>
    %c0_6 = arith.constant 0 : index
    %c0_7 = arith.constant 0 : index
    %8 = vector.load %arg3[%c0_6, %c0_7] : memref<128x32xf32, #tpu.memory_space<vmem>>, vector<128x32xf32>
    tpu.vector_store %arg3[%c0_6, %c0_7], %7 {strides = array<i32>} : memref<128x32xf32, #tpu.memory_space<vmem>>, vector<128x32xf32>,
    return
  }
}

module attributes {stable_mosaic.version = 11 : i64} {
  func.func @_gemm_bias_act_kernel(%arg0: memref<8x512xbf16, #tpu.memory_space<vmem>>, %arg1: memref<512x32xbf16, #tpu.memory_space<vmem>>, %arg2: memref<1x32xf32, #tpu.memory_space<vmem>>, %arg3: memref<8x32xf32, #tpu.memory_space<vmem>>) attributes {dimension_semantics = [], scalar_prefetch = 0 : i64, scratch_operands = 0 : i64, tpu.core_type = #tpu.core_type<tc>} {
    %c0 = arith.constant 0 : index
    %c0_0 = arith.constant 0 : index
    %0 = vector.load %arg0[%c0, %c0_0] : memref<8x512xbf16, #tpu.memory_space<vmem>>, vector<8x512xbf16>
    %c0_1 = arith.constant 0 : index
    %c0_2 = arith.constant 0 : index
    %1 = vector.load %arg1[%c0_1, %c0_2] : memref<512x32xbf16, #tpu.memory_space<vmem>>, vector<512x32xbf16>
    %cst = arith.constant dense<0.000000e+00> : vector<8x32xf32>
    %2 = tpu.matmul %0, %1, %cst {dimension_numbers = #tpu.dot_dimension_numbers<[1], [0], [0], [1], [0, 0, 1, 1], [], []>} : vector<8x512xbf16>, vector<512x32xbf16>, vector<8x32xf32> -> vector<8x32xf32>
    %c0_3 = arith.constant 0 : index
    %c0_4 = arith.constant 0 : index
    %3 = vector.load %arg2[%c0_3, %c0_4] : memref<1x32xf32, #tpu.memory_space<vmem>>, vector<1x32xf32>
    %4 = vector.broadcast %3 : vector<1x32xf32> to vector<8x32xf32>
    %5 = arith.addf %2, %4 : vector<8x32xf32>
    %cst_5 = arith.constant 0.000000e+00 : f32
    %6 = vector.broadcast %cst_5 : f32 to vector<8x32xf32>
    %7 = arith.maximumf %5, %6 : vector<8x32xf32>
    %c0_6 = arith.constant 0 : index
    %c0_7 = arith.constant 0 : index
    %8 = vector.load %arg3[%c0_6, %c0_7] : memref<8x32xf32, #tpu.memory_space<vmem>>, vector<8x32xf32>
    tpu.vector_store %arg3[%c0_6, %c0_7], %7 {strides = array<i32>} : memref<8x32xf32, #tpu.memory_space<vmem>>, vector<8x32xf32>,
    return
  }
}

module attributes {stable_mosaic.version = 11 : i64} {
  func.func @_latent_kernel(%arg0: memref<2x128xbf16, #tpu.memory_space<vmem>>, %arg1: memref<2x16xf32, #tpu.memory_space<vmem>>, %arg2: memref<128x16xbf16, #tpu.memory_space<vmem>>, %arg3: memref<1x16xf32, #tpu.memory_space<vmem>>, %arg4: memref<128x16xbf16, #tpu.memory_space<vmem>>, %arg5: memref<1x16xf32, #tpu.memory_space<vmem>>, %arg6: memref<16x128xbf16, #tpu.memory_space<vmem>>, %arg7: memref<1x128xf32, #tpu.memory_space<vmem>>, %arg8: memref<2x16xf32, #tpu.memory_space<vmem>>, %arg9: memref<2x16xf32, #tpu.memory_space<vmem>>, %arg10: memref<2x128xf32, #tpu.memory_space<vmem>>) attributes {dimension_semantics = [], scalar_prefetch = 0 : i64, scratch_operands = 0 : i64, tpu.core_type = #tpu.core_type<tc>} {
    %c0 = arith.constant 0 : index
    %c0_0 = arith.constant 0 : index
    %0 = vector.load %arg0[%c0, %c0_0] : memref<2x128xbf16, #tpu.memory_space<vmem>>, vector<2x128xbf16>
    %c0_1 = arith.constant 0 : index
    %c0_2 = arith.constant 0 : index
    %1 = vector.load %arg2[%c0_1, %c0_2] : memref<128x16xbf16, #tpu.memory_space<vmem>>, vector<128x16xbf16>
    %cst = arith.constant dense<0.000000e+00> : vector<2x16xf32>
    %2 = tpu.matmul %0, %1, %cst {dimension_numbers = #tpu.dot_dimension_numbers<[1], [0], [0], [1], [0, 0, 1, 1], [], []>} : vector<2x128xbf16>, vector<128x16xbf16>, vector<2x16xf32> -> vector<2x16xf32>
    %c0_3 = arith.constant 0 : index
    %c0_4 = arith.constant 0 : index
    %3 = vector.load %arg3[%c0_3, %c0_4] : memref<1x16xf32, #tpu.memory_space<vmem>>, vector<1x16xf32>
    %4 = vector.broadcast %3 : vector<1x16xf32> to vector<2x16xf32>
    %5 = arith.addf %2, %4 : vector<2x16xf32>
    %c0_5 = arith.constant 0 : index
    %c0_6 = arith.constant 0 : index
    %6 = vector.load %arg4[%c0_5, %c0_6] : memref<128x16xbf16, #tpu.memory_space<vmem>>, vector<128x16xbf16>
    %cst_7 = arith.constant dense<0.000000e+00> : vector<2x16xf32>
    %7 = tpu.matmul %0, %6, %cst_7 {dimension_numbers = #tpu.dot_dimension_numbers<[1], [0], [0], [1], [0, 0, 1, 1], [], []>} : vector<2x128xbf16>, vector<128x16xbf16>, vector<2x16xf32> -> vector<2x16xf32>
    %c0_8 = arith.constant 0 : index
    %c0_9 = arith.constant 0 : index
    %8 = vector.load %arg5[%c0_8, %c0_9] : memref<1x16xf32, #tpu.memory_space<vmem>>, vector<1x16xf32>
    %9 = vector.broadcast %8 : vector<1x16xf32> to vector<2x16xf32>
    %10 = arith.addf %7, %9 : vector<2x16xf32>
    %c0_10 = arith.constant 0 : index
    %c0_11 = arith.constant 0 : index
    %11 = vector.load %arg1[%c0_10, %c0_11] : memref<2x16xf32, #tpu.memory_space<vmem>>, vector<2x16xf32>
    %cst_12 = arith.constant 5.000000e-01 : f32
    %12 = vector.broadcast %cst_12 : f32 to vector<2x16xf32>
    %13 = arith.mulf %12, %10 : vector<2x16xf32>
    %14 = math.exp %13 : vector<2x16xf32>
    %15 = arith.mulf %11, %14 : vector<2x16xf32>
    %16 = arith.addf %5, %15 : vector<2x16xf32>
    %17 = arith.truncf %16 : vector<2x16xf32> to vector<2x16xbf16>
    %c0_13 = arith.constant 0 : index
    %c0_14 = arith.constant 0 : index
    %18 = vector.load %arg6[%c0_13, %c0_14] : memref<16x128xbf16, #tpu.memory_space<vmem>>, vector<16x128xbf16>
    %cst_15 = arith.constant dense<0.000000e+00> : vector<2x128xf32>
    %19 = tpu.matmul %17, %18, %cst_15 {dimension_numbers = #tpu.dot_dimension_numbers<[1], [0], [0], [1], [0, 0, 1, 1], [], []>} : vector<2x16xbf16>, vector<16x128xbf16>, vector<2x128xf32> -> vector<2x128xf32>
    %c0_16 = arith.constant 0 : index
    %c0_17 = arith.constant 0 : index
    %20 = vector.load %arg7[%c0_16, %c0_17] : memref<1x128xf32, #tpu.memory_space<vmem>>, vector<1x128xf32>
    %21 = vector.broadcast %20 : vector<1x128xf32> to vector<2x128xf32>
    %22 = arith.addf %19, %21 : vector<2x128xf32>
    %c0_18 = arith.constant 0 : index
    %c0_19 = arith.constant 0 : index
    %23 = vector.load %arg8[%c0_18, %c0_19] : memref<2x16xf32, #tpu.memory_space<vmem>>, vector<2x16xf32>
    tpu.vector_store %arg8[%c0_18, %c0_19], %5 {strides = array<i32>} : memref<2x16xf32, #tpu.memory_space<vmem>>, vector<2x16xf32>,
    %c0_20 = arith.constant 0 : index
    %c0_21 = arith.constant 0 : index
    %24 = vector.load %arg9[%c0_20, %c0_21] : memref<2x16xf32, #tpu.memory_space<vmem>>, vector<2x16xf32>
    tpu.vector_store %arg9[%c0_20, %c0_21], %10 {strides = array<i32>} : memref<2x16xf32, #tpu.memory_space<vmem>>, vector<2x16xf32>,
    %c0_22 = arith.constant 0 : index
    %c0_23 = arith.constant 0 : index
    %25 = vector.load %arg10[%c0_22, %c0_23] : memref<2x128xf32, #tpu.memory_space<vmem>>, vector<2x128xf32>
    tpu.vector_store %arg10[%c0_22, %c0_23], %22 {strides = array<i32>} : memref<2x128xf32, #tpu.memory_space<vmem>>, vector<2x128xf32>,
    return
  }
}

module attributes {stable_mosaic.version = 11 : i64} {
  func.func @_gemm_kernel(%arg0: memref<8x32xbf16, #tpu.memory_space<vmem>>, %arg1: memref<32x512xbf16, #tpu.memory_space<vmem>>, %arg2: memref<8x512xf32, #tpu.memory_space<vmem>>) attributes {dimension_semantics = [], scalar_prefetch = 0 : i64, scratch_operands = 0 : i64, tpu.core_type = #tpu.core_type<tc>} {
    %c0 = arith.constant 0 : index
    %c0_0 = arith.constant 0 : index
    %0 = vector.load %arg0[%c0, %c0_0] : memref<8x32xbf16, #tpu.memory_space<vmem>>, vector<8x32xbf16>
    %c0_1 = arith.constant 0 : index
    %c0_2 = arith.constant 0 : index
    %1 = vector.load %arg1[%c0_1, %c0_2] : memref<32x512xbf16, #tpu.memory_space<vmem>>, vector<32x512xbf16>
    %cst = arith.constant dense<0.000000e+00> : vector<8x512xf32>
    %2 = tpu.matmul %0, %1, %cst {dimension_numbers = #tpu.dot_dimension_numbers<[1], [0], [0], [1], [0, 0, 1, 1], [], []>} : vector<8x32xbf16>, vector<32x512xbf16>, vector<8x512xf32> -> vector<8x512xf32>
    %c0_3 = arith.constant 0 : index
    %c0_4 = arith.constant 0 : index
    %3 = vector.load %arg2[%c0_3, %c0_4] : memref<8x512xf32, #tpu.memory_space<vmem>>, vector<8x512xf32>
    tpu.vector_store %arg2[%c0_3, %c0_4], %2 {strides = array<i32>} : memref<8x512xf32, #tpu.memory_space<vmem>>, vector<8x512xf32>,
    return
  }
}

module attributes {stable_mosaic.version = 11 : i64} {
  func.func @_gemm_kernel(%arg0: memref<98x32xbf16, #tpu.memory_space<vmem>>, %arg1: memref<32x512xbf16, #tpu.memory_space<vmem>>, %arg2: memref<98x512xf32, #tpu.memory_space<vmem>>) attributes {dimension_semantics = [], scalar_prefetch = 0 : i64, scratch_operands = 0 : i64, tpu.core_type = #tpu.core_type<tc>} {
    %c0 = arith.constant 0 : index
    %c0_0 = arith.constant 0 : index
    %0 = vector.load %arg0[%c0, %c0_0] : memref<98x32xbf16, #tpu.memory_space<vmem>>, vector<98x32xbf16>
    %c0_1 = arith.constant 0 : index
    %c0_2 = arith.constant 0 : index
    %1 = vector.load %arg1[%c0_1, %c0_2] : memref<32x512xbf16, #tpu.memory_space<vmem>>, vector<32x512xbf16>
    %cst = arith.constant dense<0.000000e+00> : vector<98x512xf32>
    %2 = tpu.matmul %0, %1, %cst {dimension_numbers = #tpu.dot_dimension_numbers<[1], [0], [0], [1], [0, 0, 1, 1], [], []>} : vector<98x32xbf16>, vector<32x512xbf16>, vector<98x512xf32> -> vector<98x512xf32>
    %c0_3 = arith.constant 0 : index
    %c0_4 = arith.constant 0 : index
    %3 = vector.load %arg2[%c0_3, %c0_4] : memref<98x512xf32, #tpu.memory_space<vmem>>, vector<98x512xf32>
    tpu.vector_store %arg2[%c0_3, %c0_4], %2 {strides = array<i32>} : memref<98x512xf32, #tpu.memory_space<vmem>>, vector<98x512xf32>,
    return
  }
}

module attributes {stable_mosaic.version = 11 : i64} {
  func.func @_gemm_kernel(%arg0: memref<392x32xbf16, #tpu.memory_space<vmem>>, %arg1: memref<32x64xbf16, #tpu.memory_space<vmem>>, %arg2: memref<392x64xf32, #tpu.memory_space<vmem>>) attributes {dimension_semantics = [], scalar_prefetch = 0 : i64, scratch_operands = 0 : i64, tpu.core_type = #tpu.core_type<tc>} {
    %c0 = arith.constant 0 : index
    %c0_0 = arith.constant 0 : index
    %0 = vector.load %arg0[%c0, %c0_0] : memref<392x32xbf16, #tpu.memory_space<vmem>>, vector<392x32xbf16>
    %c0_1 = arith.constant 0 : index
    %c0_2 = arith.constant 0 : index
    %1 = vector.load %arg1[%c0_1, %c0_2] : memref<32x64xbf16, #tpu.memory_space<vmem>>, vector<32x64xbf16>
    %cst = arith.constant dense<0.000000e+00> : vector<392x64xf32>
    %2 = tpu.matmul %0, %1, %cst {dimension_numbers = #tpu.dot_dimension_numbers<[1], [0], [0], [1], [0, 0, 1, 1], [], []>} : vector<392x32xbf16>, vector<32x64xbf16>, vector<392x64xf32> -> vector<392x64xf32>
    %c0_3 = arith.constant 0 : index
    %c0_4 = arith.constant 0 : index
    %3 = vector.load %arg2[%c0_3, %c0_4] : memref<392x64xf32, #tpu.memory_space<vmem>>, vector<392x64xf32>
    tpu.vector_store %arg2[%c0_3, %c0_4], %2 {strides = array<i32>} : memref<392x64xf32, #tpu.memory_space<vmem>>, vector<392x64xf32>,
    return
  }
}

</mosaic_0001>

<llo_original>
// kernel: vae_forward.7
$region0: #{vae_forward.7}
  #allocation0 [shape = 'u32[]', space=smem, size = 0x4, offset = 0x4, fixed_abs, tag = 'smem constant byte address 0x4 - core index']
  #allocation1 [shape = 'u32[144,128]{1,0:T(1,128)}', space=vmem, size = 0x12000, scoped, tag = 'internal scratch']
  %s0 = inlined_call_operand.vmem [shape: bf16[512,64], index: 0, kind: input, shape index: {}]
  %s1 = inlined_call_operand.vmem [shape: bf16[64,32], index: 1, kind: input, shape index: {}]
  %s2 = inlined_call_operand.vmem [shape: f32[1,32], index: 2, kind: input, shape index: {}]
  %s3 = inlined_call_operand.vmem [shape: f32[512,32], index: 3, kind: output, shape index: {}]
  %s4 = sld [smem:[#allocation0]]
  $region22: #{vae_forward.7} parent=0
    _
  %s6 = ssub.s32 1, %s4
  %s7 = scalar_select 0, %s6, %s4
  // Predicated region
  $region2: #{vae_forward.7} parent=0 // pred_check
    _
  $region3: #{vae_forward.7} parent=0 // pred_check_branch
    %9 = sbr.rel (0) target = $region5
  $region4: #{vae_forward.7} parent=0 // pred_region
    _
  $region5: #{vae_forward.7} parent=0 // pred_fallthru
    _
  // Predicated region
  $region6: #{vae_forward.7} parent=0 // pred_check
    _
  $region7: #{vae_forward.7} parent=0 // pred_check_branch
    %11 = sbr.rel (0) target = $region9
  $region8: #{vae_forward.7} parent=0 // pred_region
    _
  $region9: #{vae_forward.7} parent=0 // pred_fallthru
    _
  // Predicated region
  $region10: #{vae_forward.7} parent=0 // pred_check
    _
  $region11: #{vae_forward.7} parent=0 // pred_check_branch
    %13 = sbr.rel (0) target = $region13
  $region12: #{vae_forward.7} parent=0 // pred_region
    _
  $region13: #{vae_forward.7} parent=0 // pred_fallthru
    _
  %v15 = vld [vmem:[%s0] sm:$0xf]
  %v16 = vld [vmem:[%s0 + $0x4] sm:$0xf]
  %v17 = vld [vmem:[%s0 + $0x8] sm:$0xf]
  %v18 = vld [vmem:[%s0 + $0xc] sm:$0xf]
  %v19 = vld [vmem:[%s0 + $0x10] sm:$0xf]
  %v20 = vld [vmem:[%s0 + $0x14] sm:$0xf]
  %v21 = vld [vmem:[%s0 + $0x18] sm:$0xf]
  %v22 = vld [vmem:[%s0 + $0x1c] sm:$0xf]
  %v23 = vld [vmem:[%s0 + $0x20] sm:$0xf]
  %v24 = vld [vmem:[%s0 + $0x24] sm:$0xf]
  %v25 = vld [vmem:[%s0 + $0x28] sm:$0xf]
  %v26 = vld [vmem:[%s0 + $0x2c] sm:$0xf]
  %v27 = vld [vmem:[%s0 + $0x30] sm:$0xf]
  %v28 = vld [vmem:[%s0 + $0x34] sm:$0xf]
  %v29 = vld [vmem:[%s0 + $0x38] sm:$0xf]
  %v30 = vld [vmem:[%s0 + $0x3c] sm:$0xf]
  %v31 = vld [vmem:[%s0 + $0x40] sm:$0xf]
  %v32 = vld [vmem:[%s0 + $0x44] sm:$0xf]
  %v33 = vld [vmem:[%s0 + $0x48] sm:$0xf]
  %v34 = vld [vmem:[%s0 + $0x4c] sm:$0xf]
  %v35 = vld [vmem:[%s0 + $0x50] sm:$0xf]
  %v36 = vld [vmem:[%s0 + $0x54] sm:$0xf]
  %v37 = vld [vmem:[%s0 + $0x58] sm:$0xf]
  %v38 = vld [vmem:[%s0 + $0x5c] sm:$0xf]
  %v39 = vld [vmem:[%s0 + $0x60] sm:$0xf]
  %v40 = vld [vmem:[%s0 + $0x64] sm:$0xf]
  %v41 = vld [vmem:[%s0 + $0x68] sm:$0xf]
  %v42 = vld [vmem:[%s0 + $0x6c] sm:$0xf]
  %v43 = vld [vmem:[%s0 + $0x70] sm:$0xf]
  %v44 = vld [vmem:[%s0 + $0x74] sm:$0xf]
  %v45 = vld [vmem:[%s0 + $0x78] sm:$0xf]
  %v46 = vld [vmem:[%s0 + $0x7c] sm:$0xf]
  %v47 = vld [vmem:[%s0 + $0x80] sm:$0xf]
  %v48 = vld [vmem:[%s0 + $0x84] sm:$0xf]
  %v49 = vld [vmem:[%s0 + $0x88] sm:$0xf]
  %v50 = vld [vmem:[%s0 + $0x8c] sm:$0xf]
  %v51 = vld [vmem:[%s0 + $0x90] sm:$0xf]
  %v52 = vld [vmem:[%s0 + $0x94] sm:$0xf]
  %v53 = vld [vmem:[%s0 + $0x98] sm:$0xf]
  %v54 = vld [vmem:[%s0 + $0x9c] sm:$0xf]
  %v55 = vld [vmem:[%s0 + $0xa0] sm:$0xf]
  %v56 = vld [vmem:[%s0 + $0xa4] sm:$0xf]
  %v57 = vld [vmem:[%s0 + $0xa8] sm:$0xf]
  %v58 = vld [vmem:[%s0 + $0xac] sm:$0xf]
  %v59 = vld [vmem:[%s0 + $0xb0] sm:$0xf]
  %v60 = vld [vmem:[%s0 + $0xb4] sm:$0xf]
  %v61 = vld [vmem:[%s0 + $0xb8] sm:$0xf]
  %v62 = vld [vmem:[%s0 + $0xbc] sm:$0xf]
  %v63 = vld [vmem:[%s0 + $0xc0] sm:$0xf]
  %v64 = vld [vmem:[%s0 + $0xc4] sm:$0xf]
  %v65 = vld [vmem:[%s0 + $0xc8] sm:$0xf]
  %v66 = vld [vmem:[%s0 + $0xcc] sm:$0xf]
  %v67 = vld [vmem:[%s0 + $0xd0] sm:$0xf]
  %v68 = vld [vmem:[%s0 + $0xd4] sm:$0xf]
  %v69 = vld [vmem:[%s0 + $0xd8] sm:$0xf]
  %v70 = vld [vmem:[%s0 + $0xdc] sm:$0xf]
  %v71 = vld [vmem:[%s0 + $0xe0] sm:$0xf]
  %v72 = vld [vmem:[%s0 + $0xe4] sm:$0xf]
  %v73 = vld [vmem:[%s0 + $0xe8] sm:$0xf]
  %v74 = vld [vmem:[%s0 + $0xec] sm:$0xf]
  %v75 = vld [vmem:[%s0 + $0xf0] sm:$0xf]
  %v76 = vld [vmem:[%s0 + $0xf4] sm:$0xf]
  %v77 = vld [vmem:[%s0 + $0xf8] sm:$0xf]
  %v78 = vld [vmem:[%s0 + $0xfc] sm:$0xf]
  %v79 = vld [vmem:[%s1] sm:$0xf]
  %v80 = vld [vmem:[%s1 + $0x4] sm:$0xf]
  %v81 = vld [vmem:[%s1 + $0x8] sm:$0xf]
  %v82 = vld [vmem:[%s1 + $0xc] sm:$0xf]
  %v83 = vld [vmem:[%s1 + $0x10] sm:$0xf]
  %v84 = vld [vmem:[%s1 + $0x14] sm:$0xf]
  %v85 = vld [vmem:[%s1 + $0x18] sm:$0xf]
  %v86 = vld [vmem:[%s1 + $0x1c] sm:$0xf]
  %v87 = vld [vmem:[%s2] sm:$0x1]
  %v89 = vlaneseq
  %v90 = vshrl.u32 %v89, 7
  %v91 = vsub.s32 0, %v90
  %v92 = vrot.slane %v87, %v91
  %v158 = vunpack.c.l.b16 %v15
  %v159 = vunpack.c.l.b16 %v16
  %v160 = vunpack.c.l.b16 %v17
  %v161 = vunpack.c.l.b16 %v18
  %v162 = vunpack.c.l.b16 %v19
  %v163 = vunpack.c.l.b16 %v20
  %v164 = vunpack.c.l.b16 %v21
  %v165 = vunpack.c.l.b16 %v22
  %v166 = vunpack.c.l.b16 %v23
  %v167 = vunpack.c.l.b16 %v24
  %v168 = vunpack.c.l.b16 %v25
  %v169 = vunpack.c.l.b16 %v26
  %v170 = vunpack.c.l.b16 %v27
  %v171 = vunpack.c.l.b16 %v28
  %v172 = vunpack.c.l.b16 %v29
  %v173 = vunpack.c.l.b16 %v30
  %v174 = vunpack.c.l.b16 %v31
  %v175 = vunpack.c.l.b16 %v32
  %v176 = vunpack.c.l.b16 %v33
  %v177 = vunpack.c.l.b16 %v34
  %v178 = vunpack.c.l.b16 %v35
  %v179 = vunpack.c.l.b16 %v36
  %v180 = vunpack.c.l.b16 %v37
  %v181 = vunpack.c.l.b16 %v38
  %v182 = vunpack.c.l.b16 %v39
  %v183 = vunpack.c.l.b16 %v40
  %v184 = vunpack.c.l.b16 %v41
  %v185 = vunpack.c.l.b16 %v42
  %v186 = vunpack.c.l.b16 %v43
  %v187 = vunpack.c.l.b16 %v44
  %v188 = vunpack.c.l.b16 %v45
  %v189 = vunpack.c.l.b16 %v46
  %v190 = vunpack.c.l.b16 %v47
  %v191 = vunpack.c.l.b16 %v48
  %v192 = vunpack.c.l.b16 %v49
  %v193 = vunpack.c.l.b16 %v50
  %v194 = vunpack.c.l.b16 %v51
  %v195 = vunpack.c.l.b16 %v52
  %v196 = vunpack.c.l.b16 %v53
  %v197 = vunpack.c.l.b16 %v54
  %v198 = vunpack.c.l.b16 %v55
  %v199 = vunpack.c.l.b16 %v56
  %v200 = vunpack.c.l.b16 %v57
  %v201 = vunpack.c.l.b16 %v58
  %v202 = vunpack.c.l.b16 %v59
  %v203 = vunpack.c.l.b16 %v60
  %v204 = vunpack.c.l.b16 %v61
  %v205 = vunpack.c.l.b16 %v62
  %v206 = vunpack.c.l.b16 %v63
  %v207 = vunpack.c.l.b16 %v64
  %v208 = vunpack.c.l.b16 %v65
  %v209 = vunpack.c.l.b16 %v66
  %v210 = vunpack.c.l.b16 %v67
  %v211 = vunpack.c.l.b16 %v68
  %v212 = vunpack.c.l.b16 %v69
  %v213 = vunpack.c.l.b16 %v70
  %v214 = vunpack.c.l.b16 %v71
  %v215 = vunpack.c.l.b16 %v72
  %v216 = vunpack.c.l.b16 %v73
  %v217 = vunpack.c.l.b16 %v74
  %v218 = vunpack.c.l.b16 %v75
  %v219 = vunpack.c.l.b16 %v76
  %v220 = vunpack.c.l.b16 %v77
  %v221 = vunpack.c.l.b16 %v78
  %v222 = vpack.c.b16 %v159, %v158
  %v223 = vpack.c.b16 %v161, %v160
  %v224 = vpack.c.b16 %v163, %v162
  %v225 = vpack.c.b16 %v165, %v164
  %v226 = vpack.c.b16 %v167, %v166
  %v227 = vpack.c.b16 %v169, %v168
  %v228 = vpack.c.b16 %v171, %v170
  %v229 = vpack.c.b16 %v173, %v172
  %v230 = vpack.c.b16 %v175, %v174
  %v231 = vpack.c.b16 %v177, %v176
  %v232 = vpack.c.b16 %v179, %v178
  %v233 = vpack.c.b16 %v181, %v180
  %v234 = vpack.c.b16 %v183, %v182
  %v235 = vpack.c.b16 %v185, %v184
  %v236 = vpack.c.b16 %v187, %v186
  %v237 = vpack.c.b16 %v189, %v188
  %v238 = vpack.c.b16 %v191, %v190
  %v239 = vpack.c.b16 %v193, %v192
  %v240 = vpack.c.b16 %v195, %v194
  %v241 = vpack.c.b16 %v197, %v196
  %v242 = vpack.c.b16 %v199, %v198
  %v243 = vpack.c.b16 %v201, %v200
  %v244 = vpack.c.b16 %v203, %v202
  %v245 = vpack.c.b16 %v205, %v204
  %v246 = vpack.c.b16 %v207, %v206
  %v247 = vpack.c.b16 %v209, %v208
  %v248 = vpack.c.b16 %v211, %v210
  %v249 = vpack.c.b16 %v213, %v212
  %v250 = vpack.c.b16 %v215, %v214
  %v251 = vpack.c.b16 %v217, %v216
  %v252 = vpack.c.b16 %v219, %v218
  %v253 = vpack.c.b16 %v221, %v220
  %v262 = vunpack.c.l.b16 %v79
  %v263 = vunpack.c.l.b16 %v80
  %v264 = vunpack.c.l.b16 %v81
  %v265 = vunpack.c.l.b16 %v82
  %v266 = vunpack.c.l.b16 %v83
  %v267 = vunpack.c.l.b16 %v84
  %v268 = vunpack.c.l.b16 %v85
  %v269 = vunpack.c.l.b16 %v86
  %v270 = vpack.c.b16 %v263, %v262
  %v271 = vpack.c.b16 %v265, %v264
  %v272 = vpack.c.b16 %v267, %v266
  %v273 = vpack.c.b16 %v269, %v268
  %vm278 = vcmask 523264
  %v280 = vsel %vm278, %v222, 0
  %v283 = vsel %vm278, %v223, 0
  %v286 = vsel %vm278, %v224, 0
  %v289 = vsel %vm278, %v225, 0
  %v292 = vsel %vm278, %v226, 0
  %v295 = vsel %vm278, %v227, 0
  %v298 = vsel %vm278, %v228, 0
  %v301 = vsel %vm278, %v229, 0
  %v304 = vsel %vm278, %v230, 0
  %v307 = vsel %vm278, %v231, 0
  %v310 = vsel %vm278, %v232, 0
  %v313 = vsel %vm278, %v233, 0
  %v316 = vsel %vm278, %v234, 0
  %v319 = vsel %vm278, %v235, 0
  %v322 = vsel %vm278, %v236, 0
  %v325 = vsel %vm278, %v237, 0
  %v328 = vsel %vm278, %v238, 0
  %v331 = vsel %vm278, %v239, 0
  %v334 = vsel %vm278, %v240, 0
  %v337 = vsel %vm278, %v241, 0
  %v340 = vsel %vm278, %v242, 0
  %v343 = vsel %vm278, %v243, 0
  %v346 = vsel %vm278, %v244, 0
  %v349 = vsel %vm278, %v245, 0
  %v352 = vsel %vm278, %v246, 0
  %v355 = vsel %vm278, %v247, 0
  %v358 = vsel %vm278, %v248, 0
  %v361 = vsel %vm278, %v249, 0
  %v364 = vsel %vm278, %v250, 0
  %v367 = vsel %vm278, %v251, 0
  %v370 = vsel %vm278, %v252, 0
  %v373 = vsel %vm278, %v253, 0
  %375 = vmatprep.subr.bf16.mxu0 0
  %376 = vmatpush1.bf16.msra.mxu0 %v270
  %377 = vmatprep.subr.bf16.mxu0 0
  %378 = vmatpush1.bf16.msra.mxu0 %v271
  %379 = vmatprep.subr.bf16.mxu0 0
  %380 = vmatpush1.bf16.msra.mxu0 %v272
  %381 = vmatprep.subr.bf16.mxu0 0
  %382 = vmatpush1.bf16.msra.mxu0 %v273
  %383 = vmatprep.subr.bf16.mxu0 0
  %384 = vmatpush1.bf16.msra.mxu0 0
  %385 = vmatprep.subr.bf16.mxu0 0
  %386 = vmatpush1.bf16.msra.mxu0 0
  %387 = vmatprep.subr.bf16.mxu0 0
  %388 = vmatpush1.bf16.msra.mxu0 0
  %389 = vmatprep.subr.bf16.mxu0 0
  %390 = vmatpush1.bf16.msra.mxu0 0
  %391 = vmatprep.subr.bf16.mxu0 0
  %392 = vmatpush1.bf16.msra.mxu0 0
  %393 = vmatprep.subr.bf16.mxu0 0
  %394 = vmatpush1.bf16.msra.mxu0 0
  %395 = vmatprep.subr.bf16.mxu0 0
  %396 = vmatpush1.bf16.msra.mxu0 0
  %397 = vmatprep.subr.bf16.mxu0 0
  %398 = vmatpush1.bf16.msra.mxu0 0
  %399 = vmatprep.subr.bf16.mxu0 0
  %400 = vmatpush1.bf16.msra.mxu0 0
  %401 = vmatprep.subr.bf16.mxu0 0
  %402 = vmatpush1.bf16.msra.mxu0 0
  %403 = vmatprep.subr.bf16.mxu0 0
  %404 = vmatpush1.bf16.msra.mxu0 0
  %405 = vmatprep.subr.bf16.mxu0 0
  %406 = vmatpush1.bf16.msra.mxu0 0
  %407 = vmatprep.mubr.bf16.mxu0 0
  %408 = vmatmul.mubr.bf16.gmra.mrb[0].mxu0 %v280
  %v409 = vpop.f32.mrb[0].mxu0
  %v410 = vadd.f32 %v92, %v409
  %v411 = vpop.f32.mrb[0].mxu0
  %v412 = vpop.f32.mrb[0].mxu0
  %v413 = vadd.f32 %v92, %v412
  %v414 = vpop.f32.mrb[0].mxu0
  %415 = vmatprep.mubr.bf16.mxu0 0
  %416 = vmatmul.mubr.bf16.gmra.mrb[0].mxu0 %v283
  %v417 = vpop.f32.mrb[0].mxu0
  %v418 = vadd.f32 %v92, %v417
  %v419 = vpop.f32.mrb[0].mxu0
  %v420 = vpop.f32.mrb[0].mxu0
  %v421 = vadd.f32 %v92, %v420
  %v422 = vpop.f32.mrb[0].mxu0
  %423 = vmatprep.mubr.bf16.mxu0 0
  %424 = vmatmul.mubr.bf16.gmra.mrb[0].mxu0 %v286
  %v425 = vpop.f32.mrb[0].mxu0
  %v426 = vadd.f32 %v92, %v425
  %v427 = vpop.f32.mrb[0].mxu0
  %v428 = vpop.f32.mrb[0].mxu0
  %v429 = vadd.f32 %v92, %v428
  %v430 = vpop.f32.mrb[0].mxu0
  %431 = vmatprep.mubr.bf16.mxu0 0
  %432 = vmatmul.mubr.bf16.gmra.mrb[0].mxu0 %v289
  %v433 = vpop.f32.mrb[0].mxu0
  %v434 = vadd.f32 %v92, %v433
  %v435 = vpop.f32.mrb[0].mxu0
  %v436 = vpop.f32.mrb[0].mxu0
  %v437 = vadd.f32 %v92, %v436
  %v438 = vpop.f32.mrb[0].mxu0
  %439 = vmatprep.mubr.bf16.mxu0 0
  %440 = vmatmul.mubr.bf16.gmra.mrb[0].mxu0 %v292
  %v441 = vpop.f32.mrb[0].mxu0
  %v442 = vadd.f32 %v92, %v441
  %v443 = vpop.f32.mrb[0].mxu0
  %v444 = vpop.f32.mrb[0].mxu0
  %v445 = vadd.f32 %v92, %v444
  %v446 = vpop.f32.mrb[0].mxu0
  %447 = vmatprep.mubr.bf16.mxu0 0
  %448 = vmatmul.mubr.bf16.gmra.mrb[0].mxu0 %v295
  %v449 = vpop.f32.mrb[0].mxu0
  %v450 = vadd.f32 %v92, %v449
  %v451 = vpop.f32.mrb[0].mxu0
  %v452 = vpop.f32.mrb[0].mxu0
  %v453 = vadd.f32 %v92, %v452
  %v454 = vpop.f32.mrb[0].mxu0
  %455 = vmatprep.mubr.bf16.mxu0 0
  %456 = vmatmul.mubr.bf16.gmra.mrb[0].mxu0 %v298
  %v457 = vpop.f32.mrb[0].mxu0
  %v458 = vadd.f32 %v92, %v457
  %v459 = vpop.f32.mrb[0].mxu0
  %v460 = vpop.f32.mrb[0].mxu0
  %v461 = vadd.f32 %v92, %v460
  %v462 = vpop.f32.mrb[0].mxu0
  %463 = vmatprep.mubr.bf16.mxu0 0
  %464 = vmatmul.mubr.bf16.gmra.mrb[0].mxu0 %v301
  %v465 = vpop.f32.mrb[0].mxu0
  %v466 = vadd.f32 %v92, %v465
  %v467 = vpop.f32.mrb[0].mxu0
  %v468 = vpop.f32.mrb[0].mxu0
  %v469 = vadd.f32 %v92, %v468
  %v470 = vpop.f32.mrb[0].mxu0
  %471 = vmatprep.mubr.bf16.mxu0 0
  %472 = vmatmul.mubr.bf16.gmra.mrb[0].mxu0 %v304
  %v473 = vpop.f32.mrb[0].mxu0
  %v474 = vadd.f32 %v92, %v473
  %v475 = vpop.f32.mrb[0].mxu0
  %v476 = vpop.f32.mrb[0].mxu0
  %v477 = vadd.f32 %v92, %v476
  %v478 = vpop.f32.mrb[0].mxu0
  %479 = vmatprep.mubr.bf16.mxu0 0
  %480 = vmatmul.mubr.bf16.gmra.mrb[0].mxu0 %v307
  %v481 = vpop.f32.mrb[0].mxu0
  %v482 = vadd.f32 %v92, %v481
  %v483 = vpop.f32.mrb[0].mxu0
  %v484 = vpop.f32.mrb[0].mxu0
  %v485 = vadd.f32 %v92, %v484
  %v486 = vpop.f32.mrb[0].mxu0
  %487 = vmatprep.mubr.bf16.mxu0 0
  %488 = vmatmul.mubr.bf16.gmra.mrb[0].mxu0 %v310
  %v489 = vpop.f32.mrb[0].mxu0
  %v490 = vadd.f32 %v92, %v489
  %v491 = vpop.f32.mrb[0].mxu0
  %v492 = vpop.f32.mrb[0].mxu0
  %v493 = vadd.f32 %v92, %v492
  %v494 = vpop.f32.mrb[0].mxu0
  %495 = vmatprep.mubr.bf16.mxu0 0
  %496 = vmatmul.mubr.bf16.gmra.mrb[0].mxu0 %v313
  %v497 = vpop.f32.mrb[0].mxu0
  %v498 = vadd.f32 %v92, %v497
  %v499 = vpop.f32.mrb[0].mxu0
  %v500 = vpop.f32.mrb[0].mxu0
  %v501 = vadd.f32 %v92, %v500
  %v502 = vpop.f32.mrb[0].mxu0
  %503 = vmatprep.mubr.bf16.mxu0 0
  %504 = vmatmul.mubr.bf16.gmra.mrb[0].mxu0 %v316
  %v505 = vpop.f32.mrb[0].mxu0
  %v506 = vadd.f32 %v92, %v505
  %v507 = vpop.f32.mrb[0].mxu0
  %v508 = vpop.f32.mrb[0].mxu0
  %v509 = vadd.f32 %v92, %v508
  %v510 = vpop.f32.mrb[0].mxu0
  %511 = vmatprep.mubr.bf16.mxu0 0
  %512 = vmatmul.mubr.bf16.gmra.mrb[0].mxu0 %v319
  %v513 = vpop.f32.mrb[0].mxu0
  %v514 = vadd.f32 %v92, %v513
  %v515 = vpop.f32.mrb[0].mxu0
  %v516 = vpop.f32.mrb[0].mxu0
  %v517 = vadd.f32 %v92, %v516
  %v518 = vpop.f32.mrb[0].mxu0
  %519 = vmatprep.mubr.bf16.mxu0 0
  %520 = vmatmul.mubr.bf16.gmra.mrb[0].mxu0 %v322
  %v521 = vpop.f32.mrb[0].mxu0
  %v522 = vadd.f32 %v92, %v521
  %v523 = vpop.f32.mrb[0].mxu0
  %v524 = vpop.f32.mrb[0].mxu0
  %v525 = vadd.f32 %v92, %v524
  %v526 = vpop.f32.mrb[0].mxu0
  %527 = vmatprep.mubr.bf16.mxu0 0
  %528 = vmatmul.mubr.bf16.gmra.mrb[0].mxu0 %v325
  %v529 = vpop.f32.mrb[0].mxu0
  %v530 = vadd.f32 %v92, %v529
  %v531 = vpop.f32.mrb[0].mxu0
  %v532 = vpop.f32.mrb[0].mxu0
  %v533 = vadd.f32 %v92, %v532
  %v534 = vpop.f32.mrb[0].mxu0
  %535 = vmatprep.mubr.bf16.mxu0 0
  %536 = vmatmul.mubr.bf16.gmra.mrb[0].mxu0 %v328
  %v537 = vpop.f32.mrb[0].mxu0
  %v538 = vadd.f32 %v92, %v537
  %v539 = vpop.f32.mrb[0].mxu0
  %v540 = vpop.f32.mrb[0].mxu0
  %v541 = vadd.f32 %v92, %v540
  %v542 = vpop.f32.mrb[0].mxu0
  %543 = vmatprep.mubr.bf16.mxu0 0
  %544 = vmatmul.mubr.bf16.gmra.mrb[0].mxu0 %v331
  %v545 = vpop.f32.mrb[0].mxu0
  %v546 = vadd.f32 %v92, %v545
  %v547 = vpop.f32.mrb[0].mxu0
  %v548 = vpop.f32.mrb[0].mxu0
  %v549 = vadd.f32 %v92, %v548
  %v550 = vpop.f32.mrb[0].mxu0
  %551 = vmatprep.mubr.bf16.mxu0 0
  %552 = vmatmul.mubr.bf16.gmra.mrb[0].mxu0 %v334
  %v553 = vpop.f32.mrb[0].mxu0
  %v554 = vadd.f32 %v92, %v553
  %v555 = vpop.f32.mrb[0].mxu0
  %v556 = vpop.f32.mrb[0].mxu0
  %v557 = vadd.f32 %v92, %v556
  %v558 = vpop.f32.mrb[0].mxu0
  %559 = vmatprep.mubr.bf16.mxu0 0
  %560 = vmatmul.mubr.bf16.gmra.mrb[0].mxu0 %v337
  %v561 = vpop.f32.mrb[0].mxu0
  %v562 = vadd.f32 %v92, %v561
  %v563 = vpop.f32.mrb[0].mxu0
  %v564 = vpop.f32.mrb[0].mxu0
  %v565 = vadd.f32 %v92, %v564
  %v566 = vpop.f32.mrb[0].mxu0
  %567 = vmatprep.mubr.bf16.mxu0 0
  %568 = vmatmul.mubr.bf16.gmra.mrb[0].mxu0 %v340
  %v569 = vpop.f32.mrb[0].mxu0
  %v570 = vadd.f32 %v92, %v569
  %v571 = vpop.f32.mrb[0].mxu0
  %v572 = vpop.f32.mrb[0].mxu0
  %v573 = vadd.f32 %v92, %v572
  %v574 = vpop.f32.mrb[0].mxu0
  %575 = vmatprep.mubr.bf16.mxu0 0
  %576 = vmatmul.mubr.bf16.gmra.mrb[0].mxu0 %v343
  %v577 = vpop.f32.mrb[0].mxu0
  %v578 = vadd.f32 %v92, %v577
  %v579 = vpop.f32.mrb[0].mxu0
  %v580 = vpop.f32.mrb[0].mxu0
  %v581 = vadd.f32 %v92, %v580
  %v582 = vpop.f32.mrb[0].mxu0
  %583 = vmatprep.mubr.bf16.mxu0 0
  %584 = vmatmul.mubr.bf16.gmra.mrb[0].mxu0 %v346
  %v585 = vpop.f32.mrb[0].mxu0
  %v586 = vadd.f32 %v92, %v585
  %v587 = vpop.f32.mrb[0].mxu0
  %v588 = vpop.f32.mrb[0].mxu0
  %v589 = vadd.f32 %v92, %v588
  %v590 = vpop.f32.mrb[0].mxu0
  %591 = vmatprep.mubr.bf16.mxu0 0
  %592 = vmatmul.mubr.bf16.gmra.mrb[0].mxu0 %v349
  %v593 = vpop.f32.mrb[0].mxu0
  %v594 = vadd.f32 %v92, %v593
  %v595 = vpop.f32.mrb[0].mxu0
  %v596 = vpop.f32.mrb[0].mxu0
  %v597 = vadd.f32 %v92, %v596
  %v598 = vpop.f32.mrb[0].mxu0
  %599 = vmatprep.mubr.bf16.mxu0 0
  %600 = vmatmul.mubr.bf16.gmra.mrb[0].mxu0 %v352
  %v601 = vpop.f32.mrb[0].mxu0
  %v602 = vadd.f32 %v92, %v601
  %v603 = vpop.f32.mrb[0].mxu0
  %v604 = vpop.f32.mrb[0].mxu0
  %v605 = vadd.f32 %v92, %v604
  %v606 = vpop.f32.mrb[0].mxu0
  %607 = vmatprep.mubr.bf16.mxu0 0
  %608 = vmatmul.mubr.bf16.gmra.mrb[0].mxu0 %v355
  %v609 = vpop.f32.mrb[0].mxu0
  %v610 = vadd.f32 %v92, %v609
  %v611 = vpop.f32.mrb[0].mxu0
  %v612 = vpop.f32.mrb[0].mxu0
  %v613 = vadd.f32 %v92, %v612
  %v614 = vpop.f32.mrb[0].mxu0
  %615 = vmatprep.mubr.bf16.mxu0 0
  %616 = vmatmul.mubr.bf16.gmra.mrb[0].mxu0 %v358
  %v617 = vpop.f32.mrb[0].mxu0
  %v618 = vadd.f32 %v92, %v617
  %v619 = vpop.f32.mrb[0].mxu0
  %v620 = vpop.f32.mrb[0].mxu0
  %v621 = vadd.f32 %v92, %v620
  %v622 = vpop.f32.mrb[0].mxu0
  %623 = vmatprep.mubr.bf16.mxu0 0
  %624 = vmatmul.mubr.bf16.gmra.mrb[0].mxu0 %v361
  %v625 = vpop.f32.mrb[0].mxu0
  %v626 = vadd.f32 %v92, %v625
  %v627 = vpop.f32.mrb[0].mxu0
  %v628 = vpop.f32.mrb[0].mxu0
  %v629 = vadd.f32 %v92, %v628
  %v630 = vpop.f32.mrb[0].mxu0
  %631 = vmatprep.mubr.bf16.mxu0 0
  %632 = vmatmul.mubr.bf16.gmra.mrb[0].mxu0 %v364
  %v633 = vpop.f32.mrb[0].mxu0
  %v634 = vadd.f32 %v92, %v633
  %v635 = vpop.f32.mrb[0].mxu0
  %v636 = vpop.f32.mrb[0].mxu0
  %v637 = vadd.f32 %v92, %v636
  %v638 = vpop.f32.mrb[0].mxu0
  %639 = vmatprep.mubr.bf16.mxu0 0
  %640 = vmatmul.mubr.bf16.gmra.mrb[0].mxu0 %v367
  %v641 = vpop.f32.mrb[0].mxu0
  %v642 = vadd.f32 %v92, %v641
  %v643 = vpop.f32.mrb[0].mxu0
  %v644 = vpop.f32.mrb[0].mxu0
  %v645 = vadd.f32 %v92, %v644
  %v646 = vpop.f32.mrb[0].mxu0
  %647 = vmatprep.mubr.bf16.mxu0 0
  %648 = vmatmul.mubr.bf16.gmra.mrb[0].mxu0 %v370
  %v649 = vpop.f32.mrb[0].mxu0
  %v650 = vadd.f32 %v92, %v649
  %v651 = vpop.f32.mrb[0].mxu0
  %v652 = vpop.f32.mrb[0].mxu0
  %v653 = vadd.f32 %v92, %v652
  %v654 = vpop.f32.mrb[0].mxu0
  %655 = vmatprep.mubr.bf16.mxu0 0
  %656 = vmatmul.mubr.bf16.gmra.mrb[0].mxu0 %v373
  %v657 = vpop.f32.mrb[0].mxu0
  %v658 = vadd.f32 %v92, %v657
  %v659 = vpop.f32.mrb[0].mxu0
  %v660 = vpop.f32.mrb[0].mxu0
  %v661 = vadd.f32 %v92, %v660
  %v662 = vpop.f32.mrb[0].mxu0
  %663 = vdwg.mxu0
  %v664 = vmax.f32 %v410, 0.0
  %v665 = vmax.f32 %v413, 0.0
  %v666 = vmax.f32 %v418, 0.0
  %v667 = vmax.f32 %v421, 0.0
  %v668 = vmax.f32 %v426, 0.0
  %v669 = vmax.f32 %v429, 0.0
  %v670 = vmax.f32 %v434, 0.0
  %v671 = vmax.f32 %v437, 0.0
  %v672 = vmax.f32 %v442, 0.0
  %v673 = vmax.f32 %v445, 0.0
  %v674 = vmax.f32 %v450, 0.0
  %v675 = vmax.f32 %v453, 0.0
  %v676 = vmax.f32 %v458, 0.0
  %v677 = vmax.f32 %v461, 0.0
  %v678 = vmax.f32 %v466, 0.0
  %v679 = vmax.f32 %v469, 0.0
  %v680 = vmax.f32 %v474, 0.0
  %v681 = vmax.f32 %v477, 0.0
  %v682 = vmax.f32 %v482, 0.0
  %v683 = vmax.f32 %v485, 0.0
  %v684 = vmax.f32 %v490, 0.0
  %v685 = vmax.f32 %v493, 0.0
  %v686 = vmax.f32 %v498, 0.0
  %v687 = vmax.f32 %v501, 0.0
  %v688 = vmax.f32 %v506, 0.0
  %v689 = vmax.f32 %v509, 0.0
  %v690 = vmax.f32 %v514, 0.0
  %v691 = vmax.f32 %v517, 0.0
  %v692 = vmax.f32 %v522, 0.0
  %v693 = vmax.f32 %v525, 0.0
  %v694 = vmax.f32 %v530, 0.0
  %v695 = vmax.f32 %v533, 0.0
  %v696 = vmax.f32 %v538, 0.0
  %v697 = vmax.f32 %v541, 0.0
  %v698 = vmax.f32 %v546, 0.0
  %v699 = vmax.f32 %v549, 0.0
  %v700 = vmax.f32 %v554, 0.0
  %v701 = vmax.f32 %v557, 0.0
  %v702 = vmax.f32 %v562, 0.0
  %v703 = vmax.f32 %v565, 0.0
  %v704 = vmax.f32 %v570, 0.0
  %v705 = vmax.f32 %v573, 0.0
  %v706 = vmax.f32 %v578, 0.0
  %v707 = vmax.f32 %v581, 0.0
  %v708 = vmax.f32 %v586, 0.0
  %v709 = vmax.f32 %v589, 0.0
  %v710 = vmax.f32 %v594, 0.0
  %v711 = vmax.f32 %v597, 0.0
  %v712 = vmax.f32 %v602, 0.0
  %v713 = vmax.f32 %v605, 0.0
  %v714 = vmax.f32 %v610, 0.0
  %v715 = vmax.f32 %v613, 0.0
  %v716 = vmax.f32 %v618, 0.0
  %v717 = vmax.f32 %v621, 0.0
  %v718 = vmax.f32 %v626, 0.0
  %v719 = vmax.f32 %v629, 0.0
  %v720 = vmax.f32 %v634, 0.0
  %v721 = vmax.f32 %v637, 0.0
  %v722 = vmax.f32 %v642, 0.0
  %v723 = vmax.f32 %v645, 0.0
  %v724 = vmax.f32 %v650, 0.0
  %v725 = vmax.f32 %v653, 0.0
  %v726 = vmax.f32 %v658, 0.0
  %v727 = vmax.f32 %v661, 0.0
  %vm728 = vcmask 261120
  %729 = vst.msk [vmem:[%s3] sm:$0xff] %vm728, %v664
  %730 = vst.msk [vmem:[%s3 + $0x8] sm:$0xff] %vm728, %v665
  %731 = vst.msk [vmem:[%s3 + $0x10] sm:$0xff] %vm728, %v666
  %732 = vst.msk [vmem:[%s3 + $0x18] sm:$0xff] %vm728, %v667
  %733 = vst.msk [vmem:[%s3 + $0x20] sm:$0xff] %vm728, %v668
  %734 = vst.msk [vmem:[%s3 + $0x28] sm:$0xff] %vm728, %v669
  %735 = vst.msk [vmem:[%s3 + $0x30] sm:$0xff] %vm728, %v670
  %736 = vst.msk [vmem:[%s3 + $0x38] sm:$0xff] %vm728, %v671
  %737 = vst.msk [vmem:[%s3 + $0x40] sm:$0xff] %vm728, %v672
  %738 = vst.msk [vmem:[%s3 + $0x48] sm:$0xff] %vm728, %v673
  %739 = vst.msk [vmem:[%s3 + $0x50] sm:$0xff] %vm728, %v674
  %740 = vst.msk [vmem:[%s3 + $0x58] sm:$0xff] %vm728, %v675
  %741 = vst.msk [vmem:[%s3 + $0x60] sm:$0xff] %vm728, %v676
  %742 = vst.msk [vmem:[%s3 + $0x68] sm:$0xff] %vm728, %v677
  %743 = vst.msk [vmem:[%s3 + $0x70] sm:$0xff] %vm728, %v678
  %744 = vst.msk [vmem:[%s3 + $0x78] sm:$0xff] %vm728, %v679
  %745 = vst.msk [vmem:[%s3 + $0x80] sm:$0xff] %vm728, %v680
  %746 = vst.msk [vmem:[%s3 + $0x88] sm:$0xff] %vm728, %v681
  %747 = vst.msk [vmem:[%s3 + $0x90] sm:$0xff] %vm728, %v682
  %748 = vst.msk [vmem:[%s3 + $0x98] sm:$0xff] %vm728, %v683
  %749 = vst.msk [vmem:[%s3 + $0xa0] sm:$0xff] %vm728, %v684
  %750 = vst.msk [vmem:[%s3 + $0xa8] sm:$0xff] %vm728, %v685
  %751 = vst.msk [vmem:[%s3 + $0xb0] sm:$0xff] %vm728, %v686
  %752 = vst.msk [vmem:[%s3 + $0xb8] sm:$0xff] %vm728, %v687
  %753 = vst.msk [vmem:[%s3 + $0xc0] sm:$0xff] %vm728, %v688
  %754 = vst.msk [vmem:[%s3 + $0xc8] sm:$0xff] %vm728, %v689
  %755 = vst.msk [vmem:[%s3 + $0xd0] sm:$0xff] %vm728, %v690
  %756 = vst.msk [vmem:[%s3 + $0xd8] sm:$0xff] %vm728, %v691
  %757 = vst.msk [vmem:[%s3 + $0xe0] sm:$0xff] %vm728, %v692
  %758 = vst.msk [vmem:[%s3 + $0xe8] sm:$0xff] %vm728, %v693
  %759 = vst.msk [vmem:[%s3 + $0xf0] sm:$0xff] %vm728, %v694
  %760 = vst.msk [vmem:[%s3 + $0xf8] sm:$0xff] %vm728, %v695
  %761 = vst.msk [vmem:[%s3 + $0x100] sm:$0xff] %vm728, %v696
  %762 = vst.msk [vmem:[%s3 + $0x108] sm:$0xff] %vm728, %v697
  %763 = vst.msk [vmem:[%s3 + $0x110] sm:$0xff] %vm728, %v698
  %764 = vst.msk [vmem:[%s3 + $0x118] sm:$0xff] %vm728, %v699
  %765 = vst.msk [vmem:[%s3 + $0x120] sm:$0xff] %vm728, %v700
  %766 = vst.msk [vmem:[%s3 + $0x128] sm:$0xff] %vm728, %v701
  %767 = vst.msk [vmem:[%s3 + $0x130] sm:$0xff] %vm728, %v702
  %768 = vst.msk [vmem:[%s3 + $0x138] sm:$0xff] %vm728, %v703
  %769 = vst.msk [vmem:[%s3 + $0x140] sm:$0xff] %vm728, %v704
  %770 = vst.msk [vmem:[%s3 + $0x148] sm:$0xff] %vm728, %v705
  %771 = vst.msk [vmem:[%s3 + $0x150] sm:$0xff] %vm728, %v706
  %772 = vst.msk [vmem:[%s3 + $0x158] sm:$0xff] %vm728, %v707
  %773 = vst.msk [vmem:[%s3 + $0x160] sm:$0xff] %vm728, %v708
  %774 = vst.msk [vmem:[%s3 + $0x168] sm:$0xff] %vm728, %v709
  %775 = vst.msk [vmem:[%s3 + $0x170] sm:$0xff] %vm728, %v710
  %776 = vst.msk [vmem:[%s3 + $0x178] sm:$0xff] %vm728, %v711
  %777 = vst.msk [vmem:[%s3 + $0x180] sm:$0xff] %vm728, %v712
  %778 = vst.msk [vmem:[%s3 + $0x188] sm:$0xff] %vm728, %v713
  %779 = vst.msk [vmem:[%s3 + $0x190] sm:$0xff] %vm728, %v714
  %780 = vst.msk [vmem:[%s3 + $0x198] sm:$0xff] %vm728, %v715
  %781 = vst.msk [vmem:[%s3 + $0x1a0] sm:$0xff] %vm728, %v716
  %782 = vst.msk [vmem:[%s3 + $0x1a8] sm:$0xff] %vm728, %v717
  %783 = vst.msk [vmem:[%s3 + $0x1b0] sm:$0xff] %vm728, %v718
  %784 = vst.msk [vmem:[%s3 + $0x1b8] sm:$0xff] %vm728, %v719
  %785 = vst.msk [vmem:[%s3 + $0x1c0] sm:$0xff] %vm728, %v720
  %786 = vst.msk [vmem:[%s3 + $0x1c8] sm:$0xff] %vm728, %v721
  %787 = vst.msk [vmem:[%s3 + $0x1d0] sm:$0xff] %vm728, %v722
  %788 = vst.msk [vmem:[%s3 + $0x1d8] sm:$0xff] %vm728, %v723
  %789 = vst.msk [vmem:[%s3 + $0x1e0] sm:$0xff] %vm728, %v724
  %790 = vst.msk [vmem:[%s3 + $0x1e8] sm:$0xff] %vm728, %v725
  %791 = vst.msk [vmem:[%s3 + $0x1f0] sm:$0xff] %vm728, %v726
  %792 = vst.msk [vmem:[%s3 + $0x1f8] sm:$0xff] %vm728, %v727
  // Predicated region
  $region14: #{vae_forward.7} parent=0 // pred_check
    _
  $region15: #{vae_forward.7} parent=0 // pred_check_branch
    %794 = sbr.rel (0) target = $region17
  $region16: #{vae_forward.7} parent=0 // pred_region
    _
  $region17: #{vae_forward.7} parent=0 // pred_fallthru
    _
  // Predicated region
  $region18: #{vae_forward.7} parent=0 // pred_check
    _
  $region19: #{vae_forward.7} parent=0 // pred_check_branch
    %796 = sbr.rel (0) target = $region21
  $region20: #{vae_forward.7} parent=0 // pred_region
    _
  $region21: #{vae_forward.7} parent=0 // pred_fallthru
    _

// kernel: vae_forward.8
$region0: #{vae_forward.8}
  #allocation0 [shape = 'u32[]', space=smem, size = 0x4, offset = 0x4, fixed_abs, tag = 'smem constant byte address 0x4 - core index']
  #allocation1 [shape = 'u32[144,128]{1,0:T(1,128)}', space=vmem, size = 0x12000, scoped, tag = 'internal scratch']
  %s0 = inlined_call_operand.vmem [shape: bf16[128,512], index: 0, kind: input, shape index: {}]
  %s1 = inlined_call_operand.vmem [shape: bf16[512,32], index: 1, kind: input, shape index: {}]
  %s2 = inlined_call_operand.vmem [shape: f32[1,32], index: 2, kind: input, shape index: {}]
  %s3 = inlined_call_operand.vmem [shape: f32[128,32], index: 3, kind: output, shape index: {}]
  %s4 = sld [smem:[#allocation0]]
  $region22: #{vae_forward.8} parent=0
    _
  %s6 = ssub.s32 1, %s4
  %s7 = scalar_select 0, %s6, %s4
  // Predicated region
  $region2: #{vae_forward.8} parent=0 // pred_check
    _
  $region3: #{vae_forward.8} parent=0 // pred_check_branch
    %9 = sbr.rel (0) target = $region5
  $region4: #{vae_forward.8} parent=0 // pred_region
    _
  $region5: #{vae_forward.8} parent=0 // pred_fallthru
    _
  // Predicated region
  $region6: #{vae_forward.8} parent=0 // pred_check
    _
  $region7: #{vae_forward.8} parent=0 // pred_check_branch
    %11 = sbr.rel (0) target = $region9
  $region8: #{vae_forward.8} parent=0 // pred_region
    _
  $region9: #{vae_forward.8} parent=0 // pred_fallthru
    _
  // Predicated region
  $region10: #{vae_forward.8} parent=0 // pred_check
    _
  $region11: #{vae_forward.8} parent=0 // pred_check_branch
    %13 = sbr.rel (0) target = $region13
  $region12: #{vae_forward.8} parent=0 // pred_region
    _
  $region13: #{vae_forward.8} parent=0 // pred_fallthru
    _
  %v15 = vld [vmem:[%s0] sm:$0xff]
  %v16 = vld [vmem:[%s0 + $0x8] sm:$0xff]
  %v17 = vld [vmem:[%s0 + $0x10] sm:$0xff]
  %v18 = vld [vmem:[%s0 + $0x18] sm:$0xff]
  %v19 = vld [vmem:[%s0 + $0x20] sm:$0xff]
  %v20 = vld [vmem:[%s0 + $0x28] sm:$0xff]
  %v21 = vld [vmem:[%s0 + $0x30] sm:$0xff]
  %v22 = vld [vmem:[%s0 + $0x38] sm:$0xff]
  %v23 = vld [vmem:[%s0 + $0x40] sm:$0xff]
  %v24 = vld [vmem:[%s0 + $0x48] sm:$0xff]
  %v25 = vld [vmem:[%s0 + $0x50] sm:$0xff]
  %v26 = vld [vmem:[%s0 + $0x58] sm:$0xff]
  %v27 = vld [vmem:[%s0 + $0x60] sm:$0xff]
  %v28 = vld [vmem:[%s0 + $0x68] sm:$0xff]
  %v29 = vld [vmem:[%s0 + $0x70] sm:$0xff]
  %v30 = vld [vmem:[%s0 + $0x78] sm:$0xff]
  %v31 = vld [vmem:[%s0 + $0x80] sm:$0xff]
  %v32 = vld [vmem:[%s0 + $0x88] sm:$0xff]
  %v33 = vld [vmem:[%s0 + $0x90] sm:$0xff]
  %v34 = vld [vmem:[%s0 + $0x98] sm:$0xff]
  %v35 = vld [vmem:[%s0 + $0xa0] sm:$0xff]
  %v36 = vld [vmem:[%s0 + $0xa8] sm:$0xff]
  %v37 = vld [vmem:[%s0 + $0xb0] sm:$0xff]
  %v38 = vld [vmem:[%s0 + $0xb8] sm:$0xff]
  %v39 = vld [vmem:[%s0 + $0xc0] sm:$0xff]
  %v40 = vld [vmem:[%s0 + $0xc8] sm:$0xff]
  %v41 = vld [vmem:[%s0 + $0xd0] sm:$0xff]
  %v42 = vld [vmem:[%s0 + $0xd8] sm:$0xff]
  %v43 = vld [vmem:[%s0 + $0xe0] sm:$0xff]
  %v44 = vld [vmem:[%s0 + $0xe8] sm:$0xff]
  %v45 = vld [vmem:[%s0 + $0xf0] sm:$0xff]
  %v46 = vld [vmem:[%s0 + $0xf8] sm:$0xff]
  %v47 = vld [vmem:[%s1] sm:$0xf]
  %v48 = vld [vmem:[%s1 + $0x4] sm:$0xf]
  %v49 = vld [vmem:[%s1 + $0x8] sm:$0xf]
  %v50 = vld [vmem:[%s1 + $0xc] sm:$0xf]
  %v51 = vld [vmem:[%s1 + $0x10] sm:$0xf]
  %v52 = vld [vmem:[%s1 + $0x14] sm:$0xf]
  %v53 = vld [vmem:[%s1 + $0x18] sm:$0xf]
  %v54 = vld [vmem:[%s1 + $0x1c] sm:$0xf]
  %v55 = vld [vmem:[%s1 + $0x20] sm:$0xf]
  %v56 = vld [vmem:[%s1 + $0x24] sm:$0xf]
  %v57 = vld [vmem:[%s1 + $0x28] sm:$0xf]
  %v58 = vld [vmem:[%s1 + $0x2c] sm:$0xf]
  %v59 = vld [vmem:[%s1 + $0x30] sm:$0xf]
  %v60 = vld [vmem:[%s1 + $0x34] sm:$0xf]
  %v61 = vld [vmem:[%s1 + $0x38] sm:$0xf]
  %v62 = vld [vmem:[%s1 + $0x3c] sm:$0xf]
  %v63 = vld [vmem:[%s1 + $0x40] sm:$0xf]
  %v64 = vld [vmem:[%s1 + $0x44] sm:$0xf]
  %v65 = vld [vmem:[%s1 + $0x48] sm:$0xf]
  %v66 = vld [vmem:[%s1 + $0x4c] sm:$0xf]
  %v67 = vld [vmem:[%s1 + $0x50] sm:$0xf]
  %v68 = vld [vmem:[%s1 + $0x54] sm:$0xf]
  %v69 = vld [vmem:[%s1 + $0x58] sm:$0xf]
  %v70 = vld [vmem:[%s1 + $0x5c] sm:$0xf]
  %v71 = vld [vmem:[%s1 + $0x60] sm:$0xf]
  %v72 = vld [vmem:[%s1 + $0x64] sm:$0xf]
  %v73 = vld [vmem:[%s1 + $0x68] sm:$0xf]
  %v74 = vld [vmem:[%s1 + $0x6c] sm:$0xf]
  %v75 = vld [vmem:[%s1 + $0x70] sm:$0xf]
  %v76 = vld [vmem:[%s1 + $0x74] sm:$0xf]
  %v77 = vld [vmem:[%s1 + $0x78] sm:$0xf]
  %v78 = vld [vmem:[%s1 + $0x7c] sm:$0xf]
  %v79 = vld [vmem:[%s1 + $0x80] sm:$0xf]
  %v80 = vld [vmem:[%s1 + $0x84] sm:$0xf]
  %v81 = vld [vmem:[%s1 + $0x88] sm:$0xf]
  %v82 = vld [vmem:[%s1 + $0x8c] sm:$0xf]
  %v83 = vld [vmem:[%s1 + $0x90] sm:$0xf]
  %v84 = vld [vmem:[%s1 + $0x94] sm:$0xf]
  %v85 = vld [vmem:[%s1 + $0x98] sm:$0xf]
  %v86 = vld [vmem:[%s1 + $0x9c] sm:$0xf]
  %v87 = vld [vmem:[%s1 + $0xa0] sm:$0xf]
  %v88 = vld [vmem:[%s1 + $0xa4] sm:$0xf]
  %v89 = vld [vmem:[%s1 + $0xa8] sm:$0xf]
  %v90 = vld [vmem:[%s1 + $0xac] sm:$0xf]
  %v91 = vld [vmem:[%s1 + $0xb0] sm:$0xf]
  %v92 = vld [vmem:[%s1 + $0xb4] sm:$0xf]
  %v93 = vld [vmem:[%s1 + $0xb8] sm:$0xf]
  %v94 = vld [vmem:[%s1 + $0xbc] sm:$0xf]
  %v95 = vld [vmem:[%s1 + $0xc0] sm:$0xf]
  %v96 = vld [vmem:[%s1 + $0xc4] sm:$0xf]
  %v97 = vld [vmem:[%s1 + $0xc8] sm:$0xf]
  %v98 = vld [vmem:[%s1 + $0xcc] sm:$0xf]
  %v99 = vld [vmem:[%s1 + $0xd0] sm:$0xf]
  %v100 = vld [vmem:[%s1 + $0xd4] sm:$0xf]
  %v101 = vld [vmem:[%s1 + $0xd8] sm:$0xf]
  %v102 = vld [vmem:[%s1 + $0xdc] sm:$0xf]
  %v103 = vld [vmem:[%s1 + $0xe0] sm:$0xf]
  %v104 = vld [vmem:[%s1 + $0xe4] sm:$0xf]
  %v105 = vld [vmem:[%s1 + $0xe8] sm:$0xf]
  %v106 = vld [vmem:[%s1 + $0xec] sm:$0xf]
  %v107 = vld [vmem:[%s1 + $0xf0] sm:$0xf]
  %v108 = vld [vmem:[%s1 + $0xf4] sm:$0xf]
  %v109 = vld [vmem:[%s1 + $0xf8] sm:$0xf]
  %v110 = vld [vmem:[%s1 + $0xfc] sm:$0xf]
  %v111 = vld [vmem:[%s2] sm:$0x1]
  %v113 = vlaneseq
  %v114 = vshrl.u32 %v113, 7
  %v115 = vsub.s32 0, %v114
  %v116 = vrot.slane %v111, %v115
  %v150 = vunpack.c.l.b16 %v15
  %v151 = vunpack.c.h.b16 %v15
  %v152 = vunpack.c.l.b16 %v16
  %v153 = vunpack.c.h.b16 %v16
  %v154 = vunpack.c.l.b16 %v17
  %v155 = vunpack.c.h.b16 %v17
  %v156 = vunpack.c.l.b16 %v18
  %v157 = vunpack.c.h.b16 %v18
  %v158 = vunpack.c.l.b16 %v19
  %v159 = vunpack.c.h.b16 %v19
  %v160 = vunpack.c.l.b16 %v20
  %v161 = vunpack.c.h.b16 %v20
  %v162 = vunpack.c.l.b16 %v21
  %v163 = vunpack.c.h.b16 %v21
  %v164 = vunpack.c.l.b16 %v22
  %v165 = vunpack.c.h.b16 %v22
  %v166 = vunpack.c.l.b16 %v23
  %v167 = vunpack.c.h.b16 %v23
  %v168 = vunpack.c.l.b16 %v24
  %v169 = vunpack.c.h.b16 %v24
  %v170 = vunpack.c.l.b16 %v25
  %v171 = vunpack.c.h.b16 %v25
  %v172 = vunpack.c.l.b16 %v26
  %v173 = vunpack.c.h.b16 %v26
  %v174 = vunpack.c.l.b16 %v27
  %v175 = vunpack.c.h.b16 %v27
  %v176 = vunpack.c.l.b16 %v28
  %v177 = vunpack.c.h.b16 %v28
  %v178 = vunpack.c.l.b16 %v29
  %v179 = vunpack.c.h.b16 %v29
  %v180 = vunpack.c.l.b16 %v30
  %v181 = vunpack.c.h.b16 %v30
  %v182 = vunpack.c.l.b16 %v31
  %v183 = vunpack.c.h.b16 %v31
  %v184 = vunpack.c.l.b16 %v32
  %v185 = vunpack.c.h.b16 %v32
  %v186 = vunpack.c.l.b16 %v33
  %v187 = vunpack.c.h.b16 %v33
  %v188 = vunpack.c.l.b16 %v34
  %v189 = vunpack.c.h.b16 %v34
  %v190 = vunpack.c.l.b16 %v35
  %v191 = vunpack.c.h.b16 %v35
  %v192 = vunpack.c.l.b16 %v36
  %v193 = vunpack.c.h.b16 %v36
  %v194 = vunpack.c.l.b16 %v37
  %v195 = vunpack.c.h.b16 %v37
  %v196 = vunpack.c.l.b16 %v38
  %v197 = vunpack.c.h.b16 %v38
  %v198 = vunpack.c.l.b16 %v39
  %v199 = vunpack.c.h.b16 %v39
  %v200 = vunpack.c.l.b16 %v40
  %v201 = vunpack.c.h.b16 %v40
  %v202 = vunpack.c.l.b16 %v41
  %v203 = vunpack.c.h.b16 %v41
  %v204 = vunpack.c.l.b16 %v42
  %v205 = vunpack.c.h.b16 %v42
  %v206 = vunpack.c.l.b16 %v43
  %v207 = vunpack.c.h.b16 %v43
  %v208 = vunpack.c.l.b16 %v44
  %v209 = vunpack.c.h.b16 %v44
  %v210 = vunpack.c.l.b16 %v45
  %v211 = vunpack.c.h.b16 %v45
  %v212 = vunpack.c.l.b16 %v46
  %v213 = vunpack.c.h.b16 %v46
  %v214 = vpack.c.b16 %v154, %v150
  %v215 = vpack.c.b16 %v155, %v151
  %v216 = vpack.c.b16 %v156, %v152
  %v217 = vpack.c.b16 %v157, %v153
  %v218 = vpack.c.b16 %v162, %v158
  %v219 = vpack.c.b16 %v163, %v159
  %v220 = vpack.c.b16 %v164, %v160
  %v221 = vpack.c.b16 %v165, %v161
  %v222 = vpack.c.b16 %v170, %v166
  %v223 = vpack.c.b16 %v171, %v167
  %v224 = vpack.c.b16 %v172, %v168
  %v225 = vpack.c.b16 %v173, %v169
  %v226 = vpack.c.b16 %v178, %v174
  %v227 = vpack.c.b16 %v179, %v175
  %v228 = vpack.c.b16 %v180, %v176
  %v229 = vpack.c.b16 %v181, %v177
  %v230 = vpack.c.b16 %v186, %v182
  %v231 = vpack.c.b16 %v187, %v183
  %v232 = vpack.c.b16 %v188, %v184
  %v233 = vpack.c.b16 %v189, %v185
  %v234 = vpack.c.b16 %v194, %v190
  %v235 = vpack.c.b16 %v195, %v191
  %v236 = vpack.c.b16 %v196, %v192
  %v237 = vpack.c.b16 %v197, %v193
  %v238 = vpack.c.b16 %v202, %v198
  %v239 = vpack.c.b16 %v203, %v199
  %v240 = vpack.c.b16 %v204, %v200
  %v241 = vpack.c.b16 %v205, %v201
  %v242 = vpack.c.b16 %v210, %v206
  %v243 = vpack.c.b16 %v211, %v207
  %v244 = vpack.c.b16 %v212, %v208
  %v245 = vpack.c.b16 %v213, %v209
  %v342 = vunpack.c.l.b16 %v47
  %v343 = vunpack.c.l.b16 %v48
  %v344 = vunpack.c.l.b16 %v49
  %v345 = vunpack.c.l.b16 %v50
  %v346 = vunpack.c.l.b16 %v51
  %v347 = vunpack.c.l.b16 %v52
  %v348 = vunpack.c.l.b16 %v53
  %v349 = vunpack.c.l.b16 %v54
  %v350 = vunpack.c.l.b16 %v55
  %v351 = vunpack.c.l.b16 %v56
  %v352 = vunpack.c.l.b16 %v57
  %v353 = vunpack.c.l.b16 %v58
  %v354 = vunpack.c.l.b16 %v59
  %v355 = vunpack.c.l.b16 %v60
  %v356 = vunpack.c.l.b16 %v61
  %v357 = vunpack.c.l.b16 %v62
  %v358 = vunpack.c.l.b16 %v63
  %v359 = vunpack.c.l.b16 %v64
  %v360 = vunpack.c.l.b16 %v65
  %v361 = vunpack.c.l.b16 %v66
  %v362 = vunpack.c.l.b16 %v67
  %v363 = vunpack.c.l.b16 %v68
  %v364 = vunpack.c.l.b16 %v69
  %v365 = vunpack.c.l.b16 %v70
  %v366 = vunpack.c.l.b16 %v71
  %v367 = vunpack.c.l.b16 %v72
  %v368 = vunpack.c.l.b16 %v73
  %v369 = vunpack.c.l.b16 %v74
  %v370 = vunpack.c.l.b16 %v75
  %v371 = vunpack.c.l.b16 %v76
  %v372 = vunpack.c.l.b16 %v77
  %v373 = vunpack.c.l.b16 %v78
  %v374 = vunpack.c.l.b16 %v79
  %v375 = vunpack.c.l.b16 %v80
  %v376 = vunpack.c.l.b16 %v81
  %v377 = vunpack.c.l.b16 %v82
  %v378 = vunpack.c.l.b16 %v83
  %v379 = vunpack.c.l.b16 %v84
  %v380 = vunpack.c.l.b16 %v85
  %v381 = vunpack.c.l.b16 %v86
  %v382 = vunpack.c.l.b16 %v87
  %v383 = vunpack.c.l.b16 %v88
  %v384 = vunpack.c.l.b16 %v89
  %v385 = vunpack.c.l.b16 %v90
  %v386 = vunpack.c.l.b16 %v91
  %v387 = vunpack.c.l.b16 %v92
  %v388 = vunpack.c.l.b16 %v93
  %v389 = vunpack.c.l.b16 %v94
  %v390 = vunpack.c.l.b16 %v95
  %v391 = vunpack.c.l.b16 %v96
  %v392 = vunpack.c.l.b16 %v97
  %v393 = vunpack.c.l.b16 %v98
  %v394 = vunpack.c.l.b16 %v99
  %v395 = vunpack.c.l.b16 %v100
  %v396 = vunpack.c.l.b16 %v101
  %v397 = vunpack.c.l.b16 %v102
  %v398 = vunpack.c.l.b16 %v103
  %v399 = vunpack.c.l.b16 %v104
  %v400 = vunpack.c.l.b16 %v105
  %v401 = vunpack.c.l.b16 %v106
  %v402 = vunpack.c.l.b16 %v107
  %v403 = vunpack.c.l.b16 %v108
  %v404 = vunpack.c.l.b16 %v109
  %v405 = vunpack.c.l.b16 %v110
  %v406 = vpack.c.b16 %v343, %v342
  %v407 = vpack.c.b16 %v345, %v344
  %v408 = vpack.c.b16 %v347, %v346
  %v409 = vpack.c.b16 %v349, %v348
  %v410 = vpack.c.b16 %v351, %v350
  %v411 = vpack.c.b16 %v353, %v352
  %v412 = vpack.c.b16 %v355, %v354
  %v413 = vpack.c.b16 %v357, %v356
  %v414 = vpack.c.b16 %v359, %v358
  %v415 = vpack.c.b16 %v361, %v360
  %v416 = vpack.c.b16 %v363, %v362
  %v417 = vpack.c.b16 %v365, %v364
  %v418 = vpack.c.b16 %v367, %v366
  %v419 = vpack.c.b16 %v369, %v368
  %v420 = vpack.c.b16 %v371, %v370
  %v421 = vpack.c.b16 %v373, %v372
  %v422 = vpack.c.b16 %v375, %v374
  %v423 = vpack.c.b16 %v377, %v376
  %v424 = vpack.c.b16 %v379, %v378
  %v425 = vpack.c.b16 %v381, %v380
  %v426 = vpack.c.b16 %v383, %v382
  %v427 = vpack.c.b16 %v385, %v384
  %v428 = vpack.c.b16 %v387, %v386
  %v429 = vpack.c.b16 %v389, %v388
  %v430 = vpack.c.b16 %v391, %v390
  %v431 = vpack.c.b16 %v393, %v392
  %v432 = vpack.c.b16 %v395, %v394
  %v433 = vpack.c.b16 %v397, %v396
  %v434 = vpack.c.b16 %v399, %v398
  %v435 = vpack.c.b16 %v401, %v400
  %v436 = vpack.c.b16 %v403, %v402
  %v437 = vpack.c.b16 %v405, %v404
  %470 = vmatprep.subr.bf16.mxu0 0
  %471 = vmatpush1.bf16.msra.mxu0 %v406
  %472 = vmatprep.subr.bf16.mxu0 0
  %473 = vmatpush1.bf16.msra.mxu0 %v407
  %474 = vmatprep.subr.bf16.mxu0 0
  %475 = vmatpush1.bf16.msra.mxu0 %v408
  %476 = vmatprep.subr.bf16.mxu0 0
  %477 = vmatpush1.bf16.msra.mxu0 %v409
  %478 = vmatprep.subr.bf16.mxu0 0
  %479 = vmatpush1.bf16.msra.mxu0 %v410
  %480 = vmatprep.subr.bf16.mxu0 0
  %481 = vmatpush1.bf16.msra.mxu0 %v411
  %482 = vmatprep.subr.bf16.mxu0 0
  %483 = vmatpush1.bf16.msra.mxu0 %v412
  %484 = vmatprep.subr.bf16.mxu0 0
  %485 = vmatpush1.bf16.msra.mxu0 %v413
  %486 = vmatprep.subr.bf16.mxu0 0
  %487 = vmatpush1.bf16.msra.mxu0 %v414
  %488 = vmatprep.subr.bf16.mxu0 0
  %489 = vmatpush1.bf16.msra.mxu0 %v415
  %490 = vmatprep.subr.bf16.mxu0 0
  %491 = vmatpush1.bf16.msra.mxu0 %v416
  %492 = vmatprep.subr.bf16.mxu0 0
  %493 = vmatpush1.bf16.msra.mxu0 %v417
  %494 = vmatprep.subr.bf16.mxu0 0
  %495 = vmatpush1.bf16.msra.mxu0 %v418
  %496 = vmatprep.subr.bf16.mxu0 0
  %497 = vmatpush1.bf16.msra.mxu0 %v419
  %498 = vmatprep.subr.bf16.mxu0 0
  %499 = vmatpush1.bf16.msra.mxu0 %v420
  %500 = vmatprep.subr.bf16.mxu0 0
  %501 = vmatpush1.bf16.msra.mxu0 %v421
  %502 = vmatprep.mubr.bf16.mxu0 %v215
  %503 = vmatmul.mubr.bf16.gmra.mrb[0].mxu0 %v214
  %v504 = vpop.f32.mrb[0].mxu0
  %v505 = vadd.f32 %v116, %v504
  %v506 = vpop.f32.mrb[0].mxu0
  %v507 = vpop.f32.mrb[0].mxu0
  %v508 = vadd.f32 %v116, %v507
  %v509 = vpop.f32.mrb[0].mxu0
  %510 = vmatprep.mubr.bf16.mxu0 %v219
  %511 = vmatmul.mubr.bf16.gmra.mrb[0].mxu0 %v218
  %v512 = vpop.f32.mrb[0].mxu0
  %v513 = vadd.f32 %v116, %v512
  %v514 = vpop.f32.mrb[0].mxu0
  %v515 = vpop.f32.mrb[0].mxu0
  %v516 = vadd.f32 %v116, %v515
  %v517 = vpop.f32.mrb[0].mxu0
  %518 = vmatprep.mubr.bf16.mxu0 %v223
  %519 = vmatmul.mubr.bf16.gmra.mrb[0].mxu0 %v222
  %v520 = vpop.f32.mrb[0].mxu0
  %v521 = vadd.f32 %v116, %v520
  %v522 = vpop.f32.mrb[0].mxu0
  %v523 = vpop.f32.mrb[0].mxu0
  %v524 = vadd.f32 %v116, %v523
  %v525 = vpop.f32.mrb[0].mxu0
  %526 = vmatprep.mubr.bf16.mxu0 %v227
  %527 = vmatmul.mubr.bf16.gmra.mrb[0].mxu0 %v226
  %v528 = vpop.f32.mrb[0].mxu0
  %v529 = vadd.f32 %v116, %v528
  %v530 = vpop.f32.mrb[0].mxu0
  %v531 = vpop.f32.mrb[0].mxu0
  %v532 = vadd.f32 %v116, %v531
  %v533 = vpop.f32.mrb[0].mxu0
  %534 = vmatprep.mubr.bf16.mxu0 %v231
  %535 = vmatmul.mubr.bf16.gmra.mrb[0].mxu0 %v230
  %v536 = vpop.f32.mrb[0].mxu0
  %v537 = vadd.f32 %v116, %v536
  %v538 = vpop.f32.mrb[0].mxu0
  %v539 = vpop.f32.mrb[0].mxu0
  %v540 = vadd.f32 %v116, %v539
  %v541 = vpop.f32.mrb[0].mxu0
  %542 = vmatprep.mubr.bf16.mxu0 %v235
  %543 = vmatmul.mubr.bf16.gmra.mrb[0].mxu0 %v234
  %v544 = vpop.f32.mrb[0].mxu0
  %v545 = vadd.f32 %v116, %v544
  %v546 = vpop.f32.mrb[0].mxu0
  %v547 = vpop.f32.mrb[0].mxu0
  %v548 = vadd.f32 %v116, %v547
  %v549 = vpop.f32.mrb[0].mxu0
  %550 = vmatprep.mubr.bf16.mxu0 %v239
  %551 = vmatmul.mubr.bf16.gmra.mrb[0].mxu0 %v238
  %v552 = vpop.f32.mrb[0].mxu0
  %v553 = vadd.f32 %v116, %v552
  %v554 = vpop.f32.mrb[0].mxu0
  %v555 = vpop.f32.mrb[0].mxu0
  %v556 = vadd.f32 %v116, %v555
  %v557 = vpop.f32.mrb[0].mxu0
  %558 = vmatprep.mubr.bf16.mxu0 %v243
  %559 = vmatmul.mubr.bf16.gmra.mrb[0].mxu0 %v242
  %v560 = vpop.f32.mrb[0].mxu0
  %v561 = vadd.f32 %v116, %v560
  %v562 = vpop.f32.mrb[0].mxu0
  %v563 = vpop.f32.mrb[0].mxu0
  %v564 = vadd.f32 %v116, %v563
  %v565 = vpop.f32.mrb[0].mxu0
  %566 = vdwg.mxu0
  %567 = vmatprep.subr.bf16.mxu0 0
  %568 = vmatpush1.bf16.msra.mxu0 %v422
  %569 = vmatprep.subr.bf16.mxu0 0
  %570 = vmatpush1.bf16.msra.mxu0 %v423
  %571 = vmatprep.subr.bf16.mxu0 0
  %572 = vmatpush1.bf16.msra.mxu0 %v424
  %573 = vmatprep.subr.bf16.mxu0 0
  %574 = vmatpush1.bf16.msra.mxu0 %v425
  %575 = vmatprep.subr.bf16.mxu0 0
  %576 = vmatpush1.bf16.msra.mxu0 %v426
  %577 = vmatprep.subr.bf16.mxu0 0
  %578 = vmatpush1.bf16.msra.mxu0 %v427
  %579 = vmatprep.subr.bf16.mxu0 0
  %580 = vmatpush1.bf16.msra.mxu0 %v428
  %581 = vmatprep.subr.bf16.mxu0 0
  %582 = vmatpush1.bf16.msra.mxu0 %v429
  %583 = vmatprep.subr.bf16.mxu0 0
  %584 = vmatpush1.bf16.msra.mxu0 %v430
  %585 = vmatprep.subr.bf16.mxu0 0
  %586 = vmatpush1.bf16.msra.mxu0 %v431
  %587 = vmatprep.subr.bf16.mxu0 0
  %588 = vmatpush1.bf16.msra.mxu0 %v432
  %589 = vmatprep.subr.bf16.mxu0 0
  %590 = vmatpush1.bf16.msra.mxu0 %v433
  %591 = vmatprep.subr.bf16.mxu0 0
  %592 = vmatpush1.bf16.msra.mxu0 %v434
  %593 = vmatprep.subr.bf16.mxu0 0
  %594 = vmatpush1.bf16.msra.mxu0 %v435
  %595 = vmatprep.subr.bf16.mxu0 0
  %596 = vmatpush1.bf16.msra.mxu0 %v436
  %597 = vmatprep.subr.bf16.mxu0 0
  %598 = vmatpush1.bf16.msra.mxu0 %v437
  %599 = vmatprep.mubr.bf16.mxu0 %v217
  %600 = vmatmul.mubr.bf16.gmra.mrb[0].mxu0 %v216
  %v601 = vpop.f32.mrb[0].mxu0
  %v602 = vadd.f32 %v505, %v601
  %v603 = vpop.f32.mrb[0].mxu0
  %v604 = vpop.f32.mrb[0].mxu0
  %v605 = vadd.f32 %v508, %v604
  %v606 = vpop.f32.mrb[0].mxu0
  %607 = vmatprep.mubr.bf16.mxu0 %v221
  %608 = vmatmul.mubr.bf16.gmra.mrb[0].mxu0 %v220
  %v609 = vpop.f32.mrb[0].mxu0
  %v610 = vadd.f32 %v513, %v609
  %v611 = vpop.f32.mrb[0].mxu0
  %v612 = vpop.f32.mrb[0].mxu0
  %v613 = vadd.f32 %v516, %v612
  %v614 = vpop.f32.mrb[0].mxu0
  %615 = vmatprep.mubr.bf16.mxu0 %v225
  %616 = vmatmul.mubr.bf16.gmra.mrb[0].mxu0 %v224
  %v617 = vpop.f32.mrb[0].mxu0
  %v618 = vadd.f32 %v521, %v617
  %v619 = vpop.f32.mrb[0].mxu0
  %v620 = vpop.f32.mrb[0].mxu0
  %v621 = vadd.f32 %v524, %v620
  %v622 = vpop.f32.mrb[0].mxu0
  %623 = vmatprep.mubr.bf16.mxu0 %v229
  %624 = vmatmul.mubr.bf16.gmra.mrb[0].mxu0 %v228
  %v625 = vpop.f32.mrb[0].mxu0
  %v626 = vadd.f32 %v529, %v625
  %v627 = vpop.f32.mrb[0].mxu0
  %v628 = vpop.f32.mrb[0].mxu0
  %v629 = vadd.f32 %v532, %v628
  %v630 = vpop.f32.mrb[0].mxu0
  %631 = vmatprep.mubr.bf16.mxu0 %v233
  %632 = vmatmul.mubr.bf16.gmra.mrb[0].mxu0 %v232
  %v633 = vpop.f32.mrb[0].mxu0
  %v634 = vadd.f32 %v537, %v633
  %v635 = vpop.f32.mrb[0].mxu0
  %v636 = vpop.f32.mrb[0].mxu0
  %v637 = vadd.f32 %v540, %v636
  %v638 = vpop.f32.mrb[0].mxu0
  %639 = vmatprep.mubr.bf16.mxu0 %v237
  %640 = vmatmul.mubr.bf16.gmra.mrb[0].mxu0 %v236
  %v641 = vpop.f32.mrb[0].mxu0
  %v642 = vadd.f32 %v545, %v641
  %v643 = vpop.f32.mrb[0].mxu0
  %v644 = vpop.f32.mrb[0].mxu0
  %v645 = vadd.f32 %v548, %v644
  %v646 = vpop.f32.mrb[0].mxu0
  %647 = vmatprep.mubr.bf16.mxu0 %v241
  %648 = vmatmul.mubr.bf16.gmra.mrb[0].mxu0 %v240
  %v649 = vpop.f32.mrb[0].mxu0
  %v650 = vadd.f32 %v553, %v649
  %v651 = vpop.f32.mrb[0].mxu0
  %v652 = vpop.f32.mrb[0].mxu0
  %v653 = vadd.f32 %v556, %v652
  %v654 = vpop.f32.mrb[0].mxu0
  %655 = vmatprep.mubr.bf16.mxu0 %v245
  %656 = vmatmul.mubr.bf16.gmra.mrb[0].mxu0 %v244
  %v657 = vpop.f32.mrb[0].mxu0
  %v658 = vadd.f32 %v561, %v657
  %v659 = vpop.f32.mrb[0].mxu0
  %v660 = vpop.f32.mrb[0].mxu0
  %v661 = vadd.f32 %v564, %v660
  %v662 = vpop.f32.mrb[0].mxu0
  %663 = vdwg.mxu0
  %v664 = vmax.f32 %v602, 0.0
  %v665 = vmax.f32 %v605, 0.0
  %v666 = vmax.f32 %v610, 0.0
  %v667 = vmax.f32 %v613, 0.0
  %v668 = vmax.f32 %v618, 0.0
  %v669 = vmax.f32 %v621, 0.0
  %v670 = vmax.f32 %v626, 0.0
  %v671 = vmax.f32 %v629, 0.0
  %v672 = vmax.f32 %v634, 0.0
  %v673 = vmax.f32 %v637, 0.0
  %v674 = vmax.f32 %v642, 0.0
  %v675 = vmax.f32 %v645, 0.0
  %v676 = vmax.f32 %v650, 0.0
  %v677 = vmax.f32 %v653, 0.0
  %v678 = vmax.f32 %v658, 0.0
  %v679 = vmax.f32 %v661, 0.0
  %vm680 = vcmask 261120
  %681 = vst.msk [vmem:[%s3] sm:$0xff] %vm680, %v664
  %682 = vst.msk [vmem:[%s3 + $0x8] sm:$0xff] %vm680, %v665
  %683 = vst.msk [vmem:[%s3 + $0x10] sm:$0xff] %vm680, %v666
  %684 = vst.msk [vmem:[%s3 + $0x18] sm:$0xff] %vm680, %v667
  %685 = vst.msk [vmem:[%s3 + $0x20] sm:$0xff] %vm680, %v668
  %686 = vst.msk [vmem:[%s3 + $0x28] sm:$0xff] %vm680, %v669
  %687 = vst.msk [vmem:[%s3 + $0x30] sm:$0xff] %vm680, %v670
  %688 = vst.msk [vmem:[%s3 + $0x38] sm:$0xff] %vm680, %v671
  %689 = vst.msk [vmem:[%s3 + $0x40] sm:$0xff] %vm680, %v672
  %690 = vst.msk [vmem:[%s3 + $0x48] sm:$0xff] %vm680, %v673
  %691 = vst.msk [vmem:[%s3 + $0x50] sm:$0xff] %vm680, %v674
  %692 = vst.msk [vmem:[%s3 + $0x58] sm:$0xff] %vm680, %v675
  %693 = vst.msk [vmem:[%s3 + $0x60] sm:$0xff] %vm680, %v676
  %694 = vst.msk [vmem:[%s3 + $0x68] sm:$0xff] %vm680, %v677
  %695 = vst.msk [vmem:[%s3 + $0x70] sm:$0xff] %vm680, %v678
  %696 = vst.msk [vmem:[%s3 + $0x78] sm:$0xff] %vm680, %v679
  // Predicated region
  $region14: #{vae_forward.8} parent=0 // pred_check
    _
  $region15: #{vae_forward.8} parent=0 // pred_check_branch
    %698 = sbr.rel (0) target = $region17
  $region16: #{vae_forward.8} parent=0 // pred_region
    _
  $region17: #{vae_forward.8} parent=0 // pred_fallthru
    _
  // Predicated region
  $region18: #{vae_forward.8} parent=0 // pred_check
    _
  $region19: #{vae_forward.8} parent=0 // pred_check_branch
    %700 = sbr.rel (0) target = $region21
  $region20: #{vae_forward.8} parent=0 // pred_region
    _
  $region21: #{vae_forward.8} parent=0 // pred_fallthru
    _

// kernel: vae_forward.9
$region0: #{vae_forward.9}
  #allocation0 [shape = 'u32[]', space=smem, size = 0x4, offset = 0x4, fixed_abs, tag = 'smem constant byte address 0x4 - core index']
  #allocation1 [shape = 'u32[144,128]{1,0:T(1,128)}', space=vmem, size = 0x12000, scoped, tag = 'internal scratch']
  %s0 = inlined_call_operand.vmem [shape: bf16[8,512], index: 0, kind: input, shape index: {}]
  %s1 = inlined_call_operand.vmem [shape: bf16[512,32], index: 1, kind: input, shape index: {}]
  %s2 = inlined_call_operand.vmem [shape: f32[1,32], index: 2, kind: input, shape index: {}]
  %s3 = inlined_call_operand.vmem [shape: f32[8,32], index: 3, kind: output, shape index: {}]
  %s4 = sld [smem:[#allocation0]]
  $region22: #{vae_forward.9} parent=0
    _
  %s6 = ssub.s32 1, %s4
  %s7 = scalar_select 0, %s6, %s4
  // Predicated region
  $region2: #{vae_forward.9} parent=0 // pred_check
    _
  $region3: #{vae_forward.9} parent=0 // pred_check_branch
    %9 = sbr.rel (0) target = $region5
  $region4: #{vae_forward.9} parent=0 // pred_region
    _
  $region5: #{vae_forward.9} parent=0 // pred_fallthru
    _
  // Predicated region
  $region6: #{vae_forward.9} parent=0 // pred_check
    _
  $region7: #{vae_forward.9} parent=0 // pred_check_branch
    %11 = sbr.rel (0) target = $region9
  $region8: #{vae_forward.9} parent=0 // pred_region
    _
  $region9: #{vae_forward.9} parent=0 // pred_fallthru
    _
  // Predicated region
  $region10: #{vae_forward.9} parent=0 // pred_check
    _
  $region11: #{vae_forward.9} parent=0 // pred_check_branch
    %13 = sbr.rel (0) target = $region13
  $region12: #{vae_forward.9} parent=0 // pred_region
    _
  $region13: #{vae_forward.9} parent=0 // pred_fallthru
    _
  %v15 = vld [vmem:[%s0] sm:$0xff]
  %v16 = vld [vmem:[%s0 + $0x8] sm:$0xff]
  %v17 = vld [vmem:[%s1] sm:$0xf]
  %v18 = vld [vmem:[%s1 + $0x4] sm:$0xf]
  %v19 = vld [vmem:[%s1 + $0x8] sm:$0xf]
  %v20 = vld [vmem:[%s1 + $0xc] sm:$0xf]
  %v21 = vld [vmem:[%s1 + $0x10] sm:$0xf]
  %v22 = vld [vmem:[%s1 + $0x14] sm:$0xf]
  %v23 = vld [vmem:[%s1 + $0x18] sm:$0xf]
  %v24 = vld [vmem:[%s1 + $0x1c] sm:$0xf]
  %v25 = vld [vmem:[%s1 + $0x20] sm:$0xf]
  %v26 = vld [vmem:[%s1 + $0x24] sm:$0xf]
  %v27 = vld [vmem:[%s1 + $0x28] sm:$0xf]
  %v28 = vld [vmem:[%s1 + $0x2c] sm:$0xf]
  %v29 = vld [vmem:[%s1 + $0x30] sm:$0xf]
  %v30 = vld [vmem:[%s1 + $0x34] sm:$0xf]
  %v31 = vld [vmem:[%s1 + $0x38] sm:$0xf]
  %v32 = vld [vmem:[%s1 + $0x3c] sm:$0xf]
  %v33 = vld [vmem:[%s1 + $0x40] sm:$0xf]
  %v34 = vld [vmem:[%s1 + $0x44] sm:$0xf]
  %v35 = vld [vmem:[%s1 + $0x48] sm:$0xf]
  %v36 = vld [vmem:[%s1 + $0x4c] sm:$0xf]
  %v37 = vld [vmem:[%s1 + $0x50] sm:$0xf]
  %v38 = vld [vmem:[%s1 + $0x54] sm:$0xf]
  %v39 = vld [vmem:[%s1 + $0x58] sm:$0xf]
  %v40 = vld [vmem:[%s1 + $0x5c] sm:$0xf]
  %v41 = vld [vmem:[%s1 + $0x60] sm:$0xf]
  %v42 = vld [vmem:[%s1 + $0x64] sm:$0xf]
  %v43 = vld [vmem:[%s1 + $0x68] sm:$0xf]
  %v44 = vld [vmem:[%s1 + $0x6c] sm:$0xf]
  %v45 = vld [vmem:[%s1 + $0x70] sm:$0xf]
  %v46 = vld [vmem:[%s1 + $0x74] sm:$0xf]
  %v47 = vld [vmem:[%s1 + $0x78] sm:$0xf]
  %v48 = vld [vmem:[%s1 + $0x7c] sm:$0xf]
  %v49 = vld [vmem:[%s1 + $0x80] sm:$0xf]
  %v50 = vld [vmem:[%s1 + $0x84] sm:$0xf]
  %v51 = vld [vmem:[%s1 + $0x88] sm:$0xf]
  %v52 = vld [vmem:[%s1 + $0x8c] sm:$0xf]
  %v53 = vld [vmem:[%s1 + $0x90] sm:$0xf]
  %v54 = vld [vmem:[%s1 + $0x94] sm:$0xf]
  %v55 = vld [vmem:[%s1 + $0x98] sm:$0xf]
  %v56 = vld [vmem:[%s1 + $0x9c] sm:$0xf]
  %v57 = vld [vmem:[%s1 + $0xa0] sm:$0xf]
  %v58 = vld [vmem:[%s1 + $0xa4] sm:$0xf]
  %v59 = vld [vmem:[%s1 + $0xa8] sm:$0xf]
  %v60 = vld [vmem:[%s1 + $0xac] sm:$0xf]
  %v61 = vld [vmem:[%s1 + $0xb0] sm:$0xf]
  %v62 = vld [vmem:[%s1 + $0xb4] sm:$0xf]
  %v63 = vld [vmem:[%s1 + $0xb8] sm:$0xf]
  %v64 = vld [vmem:[%s1 + $0xbc] sm:$0xf]
  %v65 = vld [vmem:[%s1 + $0xc0] sm:$0xf]
  %v66 = vld [vmem:[%s1 + $0xc4] sm:$0xf]
  %v67 = vld [vmem:[%s1 + $0xc8] sm:$0xf]
  %v68 = vld [vmem:[%s1 + $0xcc] sm:$0xf]
  %v69 = vld [vmem:[%s1 + $0xd0] sm:$0xf]
  %v70 = vld [vmem:[%s1 + $0xd4] sm:$0xf]
  %v71 = vld [vmem:[%s1 + $0xd8] sm:$0xf]
  %v72 = vld [vmem:[%s1 + $0xdc] sm:$0xf]
  %v73 = vld [vmem:[%s1 + $0xe0] sm:$0xf]
  %v74 = vld [vmem:[%s1 + $0xe4] sm:$0xf]
  %v75 = vld [vmem:[%s1 + $0xe8] sm:$0xf]
  %v76 = vld [vmem:[%s1 + $0xec] sm:$0xf]
  %v77 = vld [vmem:[%s1 + $0xf0] sm:$0xf]
  %v78 = vld [vmem:[%s1 + $0xf4] sm:$0xf]
  %v79 = vld [vmem:[%s1 + $0xf8] sm:$0xf]
  %v80 = vld [vmem:[%s1 + $0xfc] sm:$0xf]
  %v81 = vld [vmem:[%s2] sm:$0x1]
  %v83 = vlaneseq
  %v84 = vshrl.u32 %v83, 7
  %v85 = vsub.s32 0, %v84
  %v86 = vrot.slane %v81, %v85
  %v90 = vunpack.c.l.b16 %v15
  %v91 = vunpack.c.h.b16 %v15
  %v92 = vunpack.c.l.b16 %v16
  %v93 = vunpack.c.h.b16 %v16
  %v94 = vpack.c.b16 %v90, %v90
  %v95 = vpack.c.b16 %v91, %v91
  %v96 = vpack.c.b16 %v92, %v92
  %v97 = vpack.c.b16 %v93, %v93
  %v166 = vunpack.c.l.b16 %v17
  %v167 = vunpack.c.l.b16 %v18
  %v168 = vunpack.c.l.b16 %v19
  %v169 = vunpack.c.l.b16 %v20
  %v170 = vunpack.c.l.b16 %v21
  %v171 = vunpack.c.l.b16 %v22
  %v172 = vunpack.c.l.b16 %v23
  %v173 = vunpack.c.l.b16 %v24
  %v174 = vunpack.c.l.b16 %v25
  %v175 = vunpack.c.l.b16 %v26
  %v176 = vunpack.c.l.b16 %v27
  %v177 = vunpack.c.l.b16 %v28
  %v178 = vunpack.c.l.b16 %v29
  %v179 = vunpack.c.l.b16 %v30
  %v180 = vunpack.c.l.b16 %v31
  %v181 = vunpack.c.l.b16 %v32
  %v182 = vunpack.c.l.b16 %v33
  %v183 = vunpack.c.l.b16 %v34
  %v184 = vunpack.c.l.b16 %v35
  %v185 = vunpack.c.l.b16 %v36
  %v186 = vunpack.c.l.b16 %v37
  %v187 = vunpack.c.l.b16 %v38
  %v188 = vunpack.c.l.b16 %v39
  %v189 = vunpack.c.l.b16 %v40
  %v190 = vunpack.c.l.b16 %v41
  %v191 = vunpack.c.l.b16 %v42
  %v192 = vunpack.c.l.b16 %v43
  %v193 = vunpack.c.l.b16 %v44
  %v194 = vunpack.c.l.b16 %v45
  %v195 = vunpack.c.l.b16 %v46
  %v196 = vunpack.c.l.b16 %v47
  %v197 = vunpack.c.l.b16 %v48
  %v198 = vunpack.c.l.b16 %v49
  %v199 = vunpack.c.l.b16 %v50
  %v200 = vunpack.c.l.b16 %v51
  %v201 = vunpack.c.l.b16 %v52
  %v202 = vunpack.c.l.b16 %v53
  %v203 = vunpack.c.l.b16 %v54
  %v204 = vunpack.c.l.b16 %v55
  %v205 = vunpack.c.l.b16 %v56
  %v206 = vunpack.c.l.b16 %v57
  %v207 = vunpack.c.l.b16 %v58
  %v208 = vunpack.c.l.b16 %v59
  %v209 = vunpack.c.l.b16 %v60
  %v210 = vunpack.c.l.b16 %v61
  %v211 = vunpack.c.l.b16 %v62
  %v212 = vunpack.c.l.b16 %v63
  %v213 = vunpack.c.l.b16 %v64
  %v214 = vunpack.c.l.b16 %v65
  %v215 = vunpack.c.l.b16 %v66
  %v216 = vunpack.c.l.b16 %v67
  %v217 = vunpack.c.l.b16 %v68
  %v218 = vunpack.c.l.b16 %v69
  %v219 = vunpack.c.l.b16 %v70
  %v220 = vunpack.c.l.b16 %v71
  %v221 = vunpack.c.l.b16 %v72
  %v222 = vunpack.c.l.b16 %v73
  %v223 = vunpack.c.l.b16 %v74
  %v224 = vunpack.c.l.b16 %v75
  %v225 = vunpack.c.l.b16 %v76
  %v226 = vunpack.c.l.b16 %v77
  %v227 = vunpack.c.l.b16 %v78
  %v228 = vunpack.c.l.b16 %v79
  %v229 = vunpack.c.l.b16 %v80
  %v230 = vpack.c.b16 %v167, %v166
  %v231 = vpack.c.b16 %v169, %v168
  %v232 = vpack.c.b16 %v171, %v170
  %v233 = vpack.c.b16 %v173, %v172
  %v234 = vpack.c.b16 %v175, %v174
  %v235 = vpack.c.b16 %v177, %v176
  %v236 = vpack.c.b16 %v179, %v178
  %v237 = vpack.c.b16 %v181, %v180
  %v238 = vpack.c.b16 %v183, %v182
  %v239 = vpack.c.b16 %v185, %v184
  %v240 = vpack.c.b16 %v187, %v186
  %v241 = vpack.c.b16 %v189, %v188
  %v242 = vpack.c.b16 %v191, %v190
  %v243 = vpack.c.b16 %v193, %v192
  %v244 = vpack.c.b16 %v195, %v194
  %v245 = vpack.c.b16 %v197, %v196
  %v246 = vpack.c.b16 %v199, %v198
  %v247 = vpack.c.b16 %v201, %v200
  %v248 = vpack.c.b16 %v203, %v202
  %v249 = vpack.c.b16 %v205, %v204
  %v250 = vpack.c.b16 %v207, %v206
  %v251 = vpack.c.b16 %v209, %v208
  %v252 = vpack.c.b16 %v211, %v210
  %v253 = vpack.c.b16 %v213, %v212
  %v254 = vpack.c.b16 %v215, %v214
  %v255 = vpack.c.b16 %v217, %v216
  %v256 = vpack.c.b16 %v219, %v218
  %v257 = vpack.c.b16 %v221, %v220
  %v258 = vpack.c.b16 %v223, %v222
  %v259 = vpack.c.b16 %v225, %v224
  %v260 = vpack.c.b16 %v227, %v226
  %v261 = vpack.c.b16 %v229, %v228
  %294 = vmatprep.subr.bf16.mxu0 0
  %295 = vmatpush1.bf16.msra.mxu0 %v230
  %296 = vmatprep.subr.bf16.mxu0 0
  %297 = vmatpush1.bf16.msra.mxu0 %v231
  %298 = vmatprep.subr.bf16.mxu0 0
  %299 = vmatpush1.bf16.msra.mxu0 %v232
  %300 = vmatprep.subr.bf16.mxu0 0
  %301 = vmatpush1.bf16.msra.mxu0 %v233
  %302 = vmatprep.subr.bf16.mxu0 0
  %303 = vmatpush1.bf16.msra.mxu0 %v234
  %304 = vmatprep.subr.bf16.mxu0 0
  %305 = vmatpush1.bf16.msra.mxu0 %v235
  %306 = vmatprep.subr.bf16.mxu0 0
  %307 = vmatpush1.bf16.msra.mxu0 %v236
  %308 = vmatprep.subr.bf16.mxu0 0
  %309 = vmatpush1.bf16.msra.mxu0 %v237
  %310 = vmatprep.subr.bf16.mxu0 0
  %311 = vmatpush1.bf16.msra.mxu0 %v238
  %312 = vmatprep.subr.bf16.mxu0 0
  %313 = vmatpush1.bf16.msra.mxu0 %v239
  %314 = vmatprep.subr.bf16.mxu0 0
  %315 = vmatpush1.bf16.msra.mxu0 %v240
  %316 = vmatprep.subr.bf16.mxu0 0
  %317 = vmatpush1.bf16.msra.mxu0 %v241
  %318 = vmatprep.subr.bf16.mxu0 0
  %319 = vmatpush1.bf16.msra.mxu0 %v242
  %320 = vmatprep.subr.bf16.mxu0 0
  %321 = vmatpush1.bf16.msra.mxu0 %v243
  %322 = vmatprep.subr.bf16.mxu0 0
  %323 = vmatpush1.bf16.msra.mxu0 %v244
  %324 = vmatprep.subr.bf16.mxu0 0
  %325 = vmatpush1.bf16.msra.mxu0 %v245
  %326 = vmatprep.mubr.bf16.mxu0 %v95
  %327 = vmatmul.mubr.bf16.gmra.mrb[0].mxu0 %v94
  %v328 = vpop.f32.mrb[0].mxu0
  %v329 = vadd.f32 %v86, %v328
  %v330 = vpop.f32.mrb[0].mxu0
  %v331 = vpop.f32.mrb[0].mxu0
  %v332 = vpop.f32.mrb[0].mxu0
  %333 = vdwg.mxu0
  %334 = vmatprep.subr.bf16.mxu0 0
  %335 = vmatpush1.bf16.msra.mxu0 %v246
  %336 = vmatprep.subr.bf16.mxu0 0
  %337 = vmatpush1.bf16.msra.mxu0 %v247
  %338 = vmatprep.subr.bf16.mxu0 0
  %339 = vmatpush1.bf16.msra.mxu0 %v248
  %340 = vmatprep.subr.bf16.mxu0 0
  %341 = vmatpush1.bf16.msra.mxu0 %v249
  %342 = vmatprep.subr.bf16.mxu0 0
  %343 = vmatpush1.bf16.msra.mxu0 %v250
  %344 = vmatprep.subr.bf16.mxu0 0
  %345 = vmatpush1.bf16.msra.mxu0 %v251
  %346 = vmatprep.subr.bf16.mxu0 0
  %347 = vmatpush1.bf16.msra.mxu0 %v252
  %348 = vmatprep.subr.bf16.mxu0 0
  %349 = vmatpush1.bf16.msra.mxu0 %v253
  %350 = vmatprep.subr.bf16.mxu0 0
  %351 = vmatpush1.bf16.msra.mxu0 %v254
  %352 = vmatprep.subr.bf16.mxu0 0
  %353 = vmatpush1.bf16.msra.mxu0 %v255
  %354 = vmatprep.subr.bf16.mxu0 0
  %355 = vmatpush1.bf16.msra.mxu0 %v256
  %356 = vmatprep.subr.bf16.mxu0 0
  %357 = vmatpush1.bf16.msra.mxu0 %v257
  %358 = vmatprep.subr.bf16.mxu0 0
  %359 = vmatpush1.bf16.msra.mxu0 %v258
  %360 = vmatprep.subr.bf16.mxu0 0
  %361 = vmatpush1.bf16.msra.mxu0 %v259
  %362 = vmatprep.subr.bf16.mxu0 0
  %363 = vmatpush1.bf16.msra.mxu0 %v260
  %364 = vmatprep.subr.bf16.mxu0 0
  %365 = vmatpush1.bf16.msra.mxu0 %v261
  %366 = vmatprep.mubr.bf16.mxu0 %v97
  %367 = vmatmul.mubr.bf16.gmra.mrb[0].mxu0 %v96
  %v368 = vpop.f32.mrb[0].mxu0
  %v369 = vadd.f32 %v329, %v368
  %v370 = vpop.f32.mrb[0].mxu0
  %v371 = vpop.f32.mrb[0].mxu0
  %v372 = vpop.f32.mrb[0].mxu0
  %373 = vdwg.mxu0
  %v374 = vmax.f32 %v369, 0.0
  %vm375 = vcmask 261120
  %376 = vst.msk [vmem:[%s3] sm:$0xff] %vm375, %v374
  // Predicated region
  $region14: #{vae_forward.9} parent=0 // pred_check
    _
  $region15: #{vae_forward.9} parent=0 // pred_check_branch
    %378 = sbr.rel (0) target = $region17
  $region16: #{vae_forward.9} parent=0 // pred_region
    _
  $region17: #{vae_forward.9} parent=0 // pred_fallthru
    _
  // Predicated region
  $region18: #{vae_forward.9} parent=0 // pred_check
    _
  $region19: #{vae_forward.9} parent=0 // pred_check_branch
    %380 = sbr.rel (0) target = $region21
  $region20: #{vae_forward.9} parent=0 // pred_region
    _
  $region21: #{vae_forward.9} parent=0 // pred_fallthru
    _

// kernel: vae_forward.10
$region0: #{vae_forward.10}
  #allocation0 [shape = 'u32[]', space=smem, size = 0x4, offset = 0x4, fixed_abs, tag = 'smem constant byte address 0x4 - core index']
  #allocation1 [shape = 'u32[144,128]{1,0:T(1,128)}', space=vmem, size = 0x12000, scoped, tag = 'internal scratch']
  %s0 = inlined_call_operand.vmem [shape: bf16[2,128], index: 0, kind: input, shape index: {}]
  %s1 = inlined_call_operand.vmem [shape: f32[2,16], index: 1, kind: input, shape index: {}]
  %s2 = inlined_call_operand.vmem [shape: bf16[128,16], index: 2, kind: input, shape index: {}]
  %s3 = inlined_call_operand.vmem [shape: f32[1,16], index: 3, kind: input, shape index: {}]
  %s4 = inlined_call_operand.vmem [shape: bf16[128,16], index: 4, kind: input, shape index: {}]
  %s5 = inlined_call_operand.vmem [shape: f32[1,16], index: 5, kind: input, shape index: {}]
  %s6 = inlined_call_operand.vmem [shape: bf16[16,128], index: 6, kind: input, shape index: {}]
  %s7 = inlined_call_operand.vmem [shape: f32[1,128], index: 7, kind: input, shape index: {}]
  %s8 = inlined_call_operand.hbm [shape: f32[2,16], index: 8, kind: output, shape index: {0}]
  %s9 = inlined_call_operand.hbm [shape: f32[2,16], index: 9, kind: output, shape index: {1}]
  %s10 = inlined_call_operand.vmem [shape: f32[2,128], index: 10, kind: output, shape index: {2}]
  %11 = xla_tuple %s8, %s9, %s10
  %s12 = sld [smem:[#allocation0]]
  $region58: #{vae_forward.10} parent=0
    _
  %s14 = ssub.s32 1, %s12
  %s15 = scalar_select 0, %s14, %s12
  $region1: #{vae_forward.10} parent=0
    #allocation2 [shape = 'u8[1024]{0}', space=vmem, size = 0x400, scoped, tag = 'output window, operand 0, single buffered']
    #allocation3 [shape = 's32[1]{0}', space=sflag, size = 0x4, scoped, tag = 'scoped memory for vae_forward.10']
    #allocation4 [shape = 'u8[1024]{0}', space=vmem, size = 0x400, scoped, tag = 'output window, operand 1, single buffered']
    #allocation5 [shape = 's32[1]{0}', space=sflag, size = 0x4, scoped, tag = 'scoped memory for vae_forward.10']
    %16 = vsyncpa [#allocation3], 0
    %17 = vsyncpa [#allocation5], 0
    // Predicated region
    $region2: #{vae_forward.10} parent=1 // pred_check
      _
    $region3: #{vae_forward.10} parent=1 // pred_check_branch
      %19 = sbr.rel (0) target = $region5
    $region4: #{vae_forward.10} parent=1 // pred_region
      _
    $region5: #{vae_forward.10} parent=1 // pred_fallthru
      _
    // Predicated region
    $region6: #{vae_forward.10} parent=1 // pred_check
      _
    $region7: #{vae_forward.10} parent=1 // pred_check_branch
      %21 = sbr.rel (0) target = $region9
    $region8: #{vae_forward.10} parent=1 // pred_region
      _
    $region9: #{vae_forward.10} parent=1 // pred_fallthru
      _
    // Predicated region
    $region10: #{vae_forward.10} parent=1 // pred_check
      _
    $region11: #{vae_forward.10} parent=1 // pred_check_branch
      %23 = sbr.rel (0) target = $region13
    $region12: #{vae_forward.10} parent=1 // pred_region
      _
    $region13: #{vae_forward.10} parent=1 // pred_fallthru
      _
    // Predicated region
    $region14: #{vae_forward.10} parent=1 // pred_check
      _
    $region15: #{vae_forward.10} parent=1 // pred_check_branch
      %25 = sbr.rel (0) target = $region17
    $region16: #{vae_forward.10} parent=1 // pred_region
      _
    $region17: #{vae_forward.10} parent=1 // pred_fallthru
      _
    // Predicated region
    $region18: #{vae_forward.10} parent=1 // pred_check
      _
    $region19: #{vae_forward.10} parent=1 // pred_check_branch
      %27 = sbr.rel (0) target = $region21
    $region20: #{vae_forward.10} parent=1 // pred_region
      _
    $region21: #{vae_forward.10} parent=1 // pred_fallthru
      _
    // Predicated region
    $region22: #{vae_forward.10} parent=1 // pred_check
      _
    $region23: #{vae_forward.10} parent=1 // pred_check_branch
      %29 = sbr.rel (0) target = $region25
    $region24: #{vae_forward.10} parent=1 // pred_region
      _
    $region25: #{vae_forward.10} parent=1 // pred_fallthru
      _
    // Predicated region
    $region26: #{vae_forward.10} parent=1 // pred_check
      _
    $region27: #{vae_forward.10} parent=1 // pred_check_branch
      %31 = sbr.rel (0) target = $region29
    $region28: #{vae_forward.10} parent=1 // pred_region
      _
    $region29: #{vae_forward.10} parent=1 // pred_fallthru
      _
    // Predicated region
    $region30: #{vae_forward.10} parent=1 // pred_check
      _
    $region31: #{vae_forward.10} parent=1 // pred_check_branch
      %33 = sbr.rel (0) target = $region33
    $region32: #{vae_forward.10} parent=1 // pred_region
      _
    $region33: #{vae_forward.10} parent=1 // pred_fallthru
      _
    %v35 = vld [vmem:[%s0] sm:$0x1]
    %v36 = vld [vmem:[%s2] sm:$0xf]
    %v37 = vld [vmem:[%s2 + $0x4] sm:$0xf]
    %v38 = vld [vmem:[%s2 + $0x8] sm:$0xf]
    %v39 = vld [vmem:[%s2 + $0xc] sm:$0xf]
    %v40 = vld [vmem:[%s2 + $0x10] sm:$0xf]
    %v41 = vld [vmem:[%s2 + $0x14] sm:$0xf]
    %v42 = vld [vmem:[%s2 + $0x18] sm:$0xf]
    %v43 = vld [vmem:[%s2 + $0x1c] sm:$0xf]
    %v44 = vld [vmem:[%s2 + $0x20] sm:$0xf]
    %v45 = vld [vmem:[%s2 + $0x24] sm:$0xf]
    %v46 = vld [vmem:[%s2 + $0x28] sm:$0xf]
    %v47 = vld [vmem:[%s2 + $0x2c] sm:$0xf]
    %v48 = vld [vmem:[%s2 + $0x30] sm:$0xf]
    %v49 = vld [vmem:[%s2 + $0x34] sm:$0xf]
    %v50 = vld [vmem:[%s2 + $0x38] sm:$0xf]
    %v51 = vld [vmem:[%s2 + $0x3c] sm:$0xf]
    %v52 = vld [vmem:[%s3] sm:$0x1]
    %v54 = vlaneseq
    %v55 = vshrl.u32 %v54, 7
    %v56 = vsub.s32 0, %v55
    %v57 = vrot.slane %v52, %v56
    %v75 = vunpack.c.l.b16 %v36
    %v76 = vunpack.c.l.b16 %v37
    %v77 = vunpack.c.l.b16 %v38
    %v78 = vunpack.c.l.b16 %v39
    %v79 = vunpack.c.l.b16 %v40
    %v80 = vunpack.c.l.b16 %v41
    %v81 = vunpack.c.l.b16 %v42
    %v82 = vunpack.c.l.b16 %v43
    %v83 = vunpack.c.l.b16 %v44
    %v84 = vunpack.c.l.b16 %v45
    %v85 = vunpack.c.l.b16 %v46
    %v86 = vunpack.c.l.b16 %v47
    %v87 = vunpack.c.l.b16 %v48
    %v88 = vunpack.c.l.b16 %v49
    %v89 = vunpack.c.l.b16 %v50
    %v90 = vunpack.c.l.b16 %v51
    %v91 = vpack.c.b16 %v76, %v75
    %v92 = vpack.c.b16 %v78, %v77
    %v93 = vpack.c.b16 %v80, %v79
    %v94 = vpack.c.b16 %v82, %v81
    %v95 = vpack.c.b16 %v84, %v83
    %v96 = vpack.c.b16 %v86, %v85
    %v97 = vpack.c.b16 %v88, %v87
    %v98 = vpack.c.b16 %v90, %v89
    %107 = vmatprep.subr.bf16.mxu0 0
    %108 = vmatpush1.bf16.msra.mxu0 %v91
    %109 = vmatprep.subr.bf16.mxu0 0
    %110 = vmatpush1.bf16.msra.mxu0 %v92
    %111 = vmatprep.subr.bf16.mxu0 0
    %112 = vmatpush1.bf16.msra.mxu0 %v93
    %113 = vmatprep.subr.bf16.mxu0 0
    %114 = vmatpush1.bf16.msra.mxu0 %v94
    %115 = vmatprep.subr.bf16.mxu0 0
    %116 = vmatpush1.bf16.msra.mxu0 %v95
    %117 = vmatprep.subr.bf16.mxu0 0
    %118 = vmatpush1.bf16.msra.mxu0 %v96
    %119 = vmatprep.subr.bf16.mxu0 0
    %120 = vmatpush1.bf16.msra.mxu0 %v97
    %121 = vmatprep.subr.bf16.mxu0 0
    %122 = vmatpush1.bf16.msra.mxu0 %v98
    %123 = vmatprep.subr.bf16.mxu0 0
    %124 = vmatpush1.bf16.msra.mxu0 0
    %125 = vmatprep.subr.bf16.mxu0 0
    %126 = vmatpush1.bf16.msra.mxu0 0
    %127 = vmatprep.subr.bf16.mxu0 0
    %128 = vmatpush1.bf16.msra.mxu0 0
    %129 = vmatprep.subr.bf16.mxu0 0
    %130 = vmatpush1.bf16.msra.mxu0 0
    %131 = vmatprep.subr.bf16.mxu0 0
    %132 = vmatpush1.bf16.msra.mxu0 0
    %133 = vmatprep.subr.bf16.mxu0 0
    %134 = vmatpush1.bf16.msra.mxu0 0
    %135 = vmatprep.subr.bf16.mxu0 0
    %136 = vmatpush1.bf16.msra.mxu0 0
    %137 = vmatprep.subr.bf16.mxu0 0
    %138 = vmatpush1.bf16.msra.mxu0 0
    %139 = vmatprep.mubr.bf16.mxu0 0
    %140 = vmatmul.mubr.bf16.gmra.mrb[0].mxu0 %v35
    %v141 = vpop.f32.mrb[0].mxu0
    %v142 = vadd.f32 %v57, %v141
    %v143 = vpop.f32.mrb[0].mxu0
    %v144 = vpop.f32.mrb[0].mxu0
    %v145 = vpop.f32.mrb[0].mxu0
    %146 = vdwg.mxu0
    %v147 = vld [vmem:[%s4] sm:$0xf]
    %v148 = vld [vmem:[%s4 + $0x4] sm:$0xf]
    %v149 = vld [vmem:[%s4 + $0x8] sm:$0xf]
    %v150 = vld [vmem:[%s4 + $0xc] sm:$0xf]
    %v151 = vld [vmem:[%s4 + $0x10] sm:$0xf]
    %v152 = vld [vmem:[%s4 + $0x14] sm:$0xf]
    %v153 = vld [vmem:[%s4 + $0x18] sm:$0xf]
    %v154 = vld [vmem:[%s4 + $0x1c] sm:$0xf]
    %v155 = vld [vmem:[%s4 + $0x20] sm:$0xf]
    %v156 = vld [vmem:[%s4 + $0x24] sm:$0xf]
    %v157 = vld [vmem:[%s4 + $0x28] sm:$0xf]
    %v158 = vld [vmem:[%s4 + $0x2c] sm:$0xf]
    %v159 = vld [vmem:[%s4 + $0x30] sm:$0xf]
    %v160 = vld [vmem:[%s4 + $0x34] sm:$0xf]
    %v161 = vld [vmem:[%s4 + $0x38] sm:$0xf]
    %v162 = vld [vmem:[%s4 + $0x3c] sm:$0xf]
    %v163 = vld [vmem:[%s5] sm:$0x1]
    %v165 = vlaneseq
    %v166 = vshrl.u32 %v165, 7
    %v167 = vsub.s32 0, %v166
    %v168 = vrot.slane %v163, %v167
    %v186 = vunpack.c.l.b16 %v147
    %v187 = vunpack.c.l.b16 %v148
    %v188 = vunpack.c.l.b16 %v149
    %v189 = vunpack.c.l.b16 %v150
    %v190 = vunpack.c.l.b16 %v151
    %v191 = vunpack.c.l.b16 %v152
    %v192 = vunpack.c.l.b16 %v153
    %v193 = vunpack.c.l.b16 %v154
    %v194 = vunpack.c.l.b16 %v155
    %v195 = vunpack.c.l.b16 %v156
    %v196 = vunpack.c.l.b16 %v157
    %v197 = vunpack.c.l.b16 %v158
    %v198 = vunpack.c.l.b16 %v159
    %v199 = vunpack.c.l.b16 %v160
    %v200 = vunpack.c.l.b16 %v161
    %v201 = vunpack.c.l.b16 %v162
    %v202 = vpack.c.b16 %v187, %v186
    %v203 = vpack.c.b16 %v189, %v188
    %v204 = vpack.c.b16 %v191, %v190
    %v205 = vpack.c.b16 %v193, %v192
    %v206 = vpack.c.b16 %v195, %v194
    %v207 = vpack.c.b16 %v197, %v196
    %v208 = vpack.c.b16 %v199, %v198
    %v209 = vpack.c.b16 %v201, %v200
    %218 = vmatprep.subr.bf16.mxu0 0
    %219 = vmatpush1.bf16.msra.mxu0 %v202
    %220 = vmatprep.subr.bf16.mxu0 0
    %221 = vmatpush1.bf16.msra.mxu0 %v203
    %222 = vmatprep.subr.bf16.mxu0 0
    %223 = vmatpush1.bf16.msra.mxu0 %v204
    %224 = vmatprep.subr.bf16.mxu0 0
    %225 = vmatpush1.bf16.msra.mxu0 %v205
    %226 = vmatprep.subr.bf16.mxu0 0
    %227 = vmatpush1.bf16.msra.mxu0 %v206
    %228 = vmatprep.subr.bf16.mxu0 0
    %229 = vmatpush1.bf16.msra.mxu0 %v207
    %230 = vmatprep.subr.bf16.mxu0 0
    %231 = vmatpush1.bf16.msra.mxu0 %v208
    %232 = vmatprep.subr.bf16.mxu0 0
    %233 = vmatpush1.bf16.msra.mxu0 %v209
    %234 = vmatprep.subr.bf16.mxu0 0
    %235 = vmatpush1.bf16.msra.mxu0 0
    %236 = vmatprep.subr.bf16.mxu0 0
    %237 = vmatpush1.bf16.msra.mxu0 0
    %238 = vmatprep.subr.bf16.mxu0 0
    %239 = vmatpush1.bf16.msra.mxu0 0
    %240 = vmatprep.subr.bf16.mxu0 0
    %241 = vmatpush1.bf16.msra.mxu0 0
    %242 = vmatprep.subr.bf16.mxu0 0
    %243 = vmatpush1.bf16.msra.mxu0 0
    %244 = vmatprep.subr.bf16.mxu0 0
    %245 = vmatpush1.bf16.msra.mxu0 0
    %246 = vmatprep.subr.bf16.mxu0 0
    %247 = vmatpush1.bf16.msra.mxu0 0
    %248 = vmatprep.subr.bf16.mxu0 0
    %249 = vmatpush1.bf16.msra.mxu0 0
    %250 = vmatprep.mubr.bf16.mxu0 0
    %251 = vmatmul.mubr.bf16.gmra.mrb[0].mxu0 %v35
    %v252 = vpop.f32.mrb[0].mxu0
    %v253 = vadd.f32 %v168, %v252
    %v254 = vpop.f32.mrb[0].mxu0
    %v255 = vpop.f32.mrb[0].mxu0
    %v256 = vpop.f32.mrb[0].mxu0
    %257 = vdwg.mxu0
    %v258 = vld [vmem:[%s1] sm:$0x3]
    %v259 = vmul.f32 %v253, 0.5
    %v260 = vmul.f32 %v259, 1.442695
    %v261 = vpow.pop %v260
    %v262 = vmul.f32 %v258, %v261
    %v263 = vadd.f32 %v142, %v262
    %v264 = vpack.c.bf16 %v263, %v263
    %v265 = vld [vmem:[%s6] sm:$0xf]
    %v266 = vld [vmem:[%s6 + $0x4] sm:$0xf]
    %v267 = vld [vmem:[%s7] sm:$0x1]
    %v269 = vlaneseq
    %v270 = vshrl.u32 %v269, 7
    %v271 = vsub.s32 0, %v270
    %v272 = vrot.slane %v267, %v271
    %v276 = vunpack.c.l.b16 %v265
    %v277 = vunpack.c.l.b16 %v266
    %v278 = vpack.c.b16 %v277, %v276
    %vm280 = vcmask 130048
    %v282 = vsel %vm280, %v264, 0
    %284 = vmatprep.subr.bf16.mxu0 0
    %285 = vmatpush1.bf16.msra.mxu0 %v278
    %286 = vmatprep.subr.bf16.mxu0 0
    %287 = vmatpush1.bf16.msra.mxu0 0
    %288 = vmatprep.subr.bf16.mxu0 0
    %289 = vmatpush1.bf16.msra.mxu0 0
    %290 = vmatprep.subr.bf16.mxu0 0
    %291 = vmatpush1.bf16.msra.mxu0 0
    %292 = vmatprep.subr.bf16.mxu0 0
    %293 = vmatpush1.bf16.msra.mxu0 0
    %294 = vmatprep.subr.bf16.mxu0 0
    %295 = vmatpush1.bf16.msra.mxu0 0
    %296 = vmatprep.subr.bf16.mxu0 0
    %297 = vmatpush1.bf16.msra.mxu0 0
    %298 = vmatprep.subr.bf16.mxu0 0
    %299 = vmatpush1.bf16.msra.mxu0 0
    %300 = vmatprep.subr.bf16.mxu0 0
    %301 = vmatpush1.bf16.msra.mxu0 0
    %302 = vmatprep.subr.bf16.mxu0 0
    %303 = vmatpush1.bf16.msra.mxu0 0
    %304 = vmatprep.subr.bf16.mxu0 0
    %305 = vmatpush1.bf16.msra.mxu0 0
    %306 = vmatprep.subr.bf16.mxu0 0
    %307 = vmatpush1.bf16.msra.mxu0 0
    %308 = vmatprep.subr.bf16.mxu0 0
    %309 = vmatpush1.bf16.msra.mxu0 0
    %310 = vmatprep.subr.bf16.mxu0 0
    %311 = vmatpush1.bf16.msra.mxu0 0
    %312 = vmatprep.subr.bf16.mxu0 0
    %313 = vmatpush1.bf16.msra.mxu0 0
    %314 = vmatprep.subr.bf16.mxu0 0
    %315 = vmatpush1.bf16.msra.mxu0 0
    %316 = vmatprep.mubr.bf16.mxu0 0
    %317 = vmatmul.mubr.bf16.gmra.mrb[0].mxu0 %v282
    %v318 = vpop.f32.mrb[0].mxu0
    %v319 = vadd.f32 %v272, %v318
    %v320 = vpop.f32.mrb[0].mxu0
    %v321 = vpop.f32.mrb[0].mxu0
    %v322 = vpop.f32.mrb[0].mxu0
    %323 = vdwg.mxu0
    %vm324 = vcmask 123904
    %325 = vst.msk [vmem:[#allocation2] sm:$0x3] %vm324, %v142
    %326 = vst.msk [vmem:[#allocation4] sm:$0x3] %vm324, %v253
    %327 = vst [vmem:[%s10] sm:$0x3] %v319
    // Predicated region
    $region34: #{vae_forward.10} parent=1 // pred_check
      _
    $region35: #{vae_forward.10} parent=1 // pred_check_branch
      %329 = sbr.rel (0) target = $region37
    $region36: #{vae_forward.10} parent=1 // pred_region
      %s331 = ssub.s32 32, 32
      %332 = vsyncadd [#allocation3], %s331
      %s334 = sshll.u32 [#allocation2], 4
      %s335 = int_to_ptr.vmem [resolvable:$true] %s334
      %337 = dma.vmem_to_hbm [thread:$0]  %s335, 32, %s8, [#allocation3]
    $region37: #{vae_forward.10} parent=1 // pred_fallthru
      _
    // Predicated region
    $region38: #{vae_forward.10} parent=1 // pred_check
      _
    $region39: #{vae_forward.10} parent=1 // pred_check_branch
      %339 = sbr.rel (0) target = $region41
    $region40: #{vae_forward.10} parent=1 // pred_region
      %s341 = ssub.s32 32, 32
      %342 = vsyncadd [#allocation5], %s341
      %s344 = sshll.u32 [#allocation4], 4
      %s345 = int_to_ptr.vmem [resolvable:$true] %s344
      %347 = dma.vmem_to_hbm [thread:$0]  %s345, 32, %s9, [#allocation5]
    $region41: #{vae_forward.10} parent=1 // pred_fallthru
      _
    // Predicated region
    $region42: #{vae_forward.10} parent=1 // pred_check
      _
    $region43: #{vae_forward.10} parent=1 // pred_check_branch
      %349 = sbr.rel (0) target = $region45
    $region44: #{vae_forward.10} parent=1 // pred_region
      _
    $region45: #{vae_forward.10} parent=1 // pred_fallthru
      _
    // Predicated region
    $region46: #{vae_forward.10} parent=1 // pred_check
      _
    $region47: #{vae_forward.10} parent=1 // pred_check_branch
      %351 = sbr.rel (0) target = $region49
    $region48: #{vae_forward.10} parent=1 // pred_region
      %352 = dma.done [#allocation3], 32
    $region49: #{vae_forward.10} parent=1 // pred_fallthru
      _
    // Predicated region
    $region50: #{vae_forward.10} parent=1 // pred_check
      _
    $region51: #{vae_forward.10} parent=1 // pred_check_branch
      %354 = sbr.rel (0) target = $region53
    $region52: #{vae_forward.10} parent=1 // pred_region
      %355 = dma.done [#allocation5], 32
    $region53: #{vae_forward.10} parent=1 // pred_fallthru
      _
    // Predicated region
    $region54: #{vae_forward.10} parent=1 // pred_check
      _
    $region55: #{vae_forward.10} parent=1 // pred_check_branch
      %357 = sbr.rel (0) target = $region57
    $region56: #{vae_forward.10} parent=1 // pred_region
      _
    $region57: #{vae_forward.10} parent=1 // pred_fallthru
      _
    %358 = vsyncpa [#allocation3], 1
    %359 = vsyncpa [#allocation5], 1

// kernel: vae_forward.11
$region0: #{vae_forward.11}
  #allocation0 [shape = 'u32[]', space=smem, size = 0x4, offset = 0x4, fixed_abs, tag = 'smem constant byte address 0x4 - core index']
  #allocation1 [shape = 'u32[144,128]{1,0:T(1,128)}', space=vmem, size = 0x12000, scoped, tag = 'internal scratch']
  %s0 = inlined_call_operand.vmem [shape: bf16[8,32], index: 0, kind: input, shape index: {}]
  %s1 = inlined_call_operand.vmem [shape: bf16[32,512], index: 1, kind: input, shape index: {}]
  %s2 = inlined_call_operand.vmem [shape: f32[8,512], index: 2, kind: output, shape index: {}]
  %s3 = sld [smem:[#allocation0]]
  $region18: #{vae_forward.11} parent=0
    _
  %s5 = ssub.s32 1, %s3
  %s6 = scalar_select 0, %s5, %s3
  // Predicated region
  $region2: #{vae_forward.11} parent=0 // pred_check
    _
  $region3: #{vae_forward.11} parent=0 // pred_check_branch
    %8 = sbr.rel (0) target = $region5
  $region4: #{vae_forward.11} parent=0 // pred_region
    _
  $region5: #{vae_forward.11} parent=0 // pred_fallthru
    _
  // Predicated region
  $region6: #{vae_forward.11} parent=0 // pred_check
    _
  $region7: #{vae_forward.11} parent=0 // pred_check_branch
    %10 = sbr.rel (0) target = $region9
  $region8: #{vae_forward.11} parent=0 // pred_region
    _
  $region9: #{vae_forward.11} parent=0 // pred_fallthru
    _
  %v12 = vld [vmem:[%s0] sm:$0xf]
  %v13 = vld [vmem:[%s1] sm:$0xff]
  %v14 = vld [vmem:[%s1 + $0x8] sm:$0xff]
  %v15 = vld [vmem:[%s1 + $0x10] sm:$0xff]
  %v16 = vld [vmem:[%s1 + $0x18] sm:$0xff]
  %v17 = vld [vmem:[%s1 + $0x20] sm:$0xff]
  %v18 = vld [vmem:[%s1 + $0x28] sm:$0xff]
  %v19 = vld [vmem:[%s1 + $0x30] sm:$0xff]
  %v20 = vld [vmem:[%s1 + $0x38] sm:$0xff]
  %v29 = vunpack.c.l.b16 %v13
  %v30 = vunpack.c.h.b16 %v13
  %v31 = vunpack.c.l.b16 %v14
  %v32 = vunpack.c.h.b16 %v14
  %v33 = vunpack.c.l.b16 %v15
  %v34 = vunpack.c.h.b16 %v15
  %v35 = vunpack.c.l.b16 %v16
  %v36 = vunpack.c.h.b16 %v16
  %v37 = vunpack.c.l.b16 %v17
  %v38 = vunpack.c.h.b16 %v17
  %v39 = vunpack.c.l.b16 %v18
  %v40 = vunpack.c.h.b16 %v18
  %v41 = vunpack.c.l.b16 %v19
  %v42 = vunpack.c.h.b16 %v19
  %v43 = vunpack.c.l.b16 %v20
  %v44 = vunpack.c.h.b16 %v20
  %v45 = vpack.c.b16 %v33, %v29
  %v46 = vpack.c.b16 %v34, %v30
  %v47 = vpack.c.b16 %v35, %v31
  %v48 = vpack.c.b16 %v36, %v32
  %v49 = vpack.c.b16 %v41, %v37
  %v50 = vpack.c.b16 %v42, %v38
  %v51 = vpack.c.b16 %v43, %v39
  %v52 = vpack.c.b16 %v44, %v40
  %vm61 = vcmask 261120
  %v63 = vsel %vm61, %v12, 0
  %65 = vmatprep.subr.bf16.mxu0 %v46
  %66 = vmatpush1.bf16.msra.mxu0 %v45
  %67 = vmatprep.subr.bf16.mxu0 %v50
  %68 = vmatpush1.bf16.msra.mxu0 %v49
  %69 = vmatprep.subr.bf16.mxu0 0
  %70 = vmatpush1.bf16.msra.mxu0 0
  %71 = vmatprep.subr.bf16.mxu0 0
  %72 = vmatpush1.bf16.msra.mxu0 0
  %73 = vmatprep.subr.bf16.mxu0 0
  %74 = vmatpush1.bf16.msra.mxu0 0
  %75 = vmatprep.subr.bf16.mxu0 0
  %76 = vmatpush1.bf16.msra.mxu0 0
  %77 = vmatprep.subr.bf16.mxu0 0
  %78 = vmatpush1.bf16.msra.mxu0 0
  %79 = vmatprep.subr.bf16.mxu0 0
  %80 = vmatpush1.bf16.msra.mxu0 0
  %81 = vmatprep.subr.bf16.mxu0 0
  %82 = vmatpush1.bf16.msra.mxu0 0
  %83 = vmatprep.subr.bf16.mxu0 0
  %84 = vmatpush1.bf16.msra.mxu0 0
  %85 = vmatprep.subr.bf16.mxu0 0
  %86 = vmatpush1.bf16.msra.mxu0 0
  %87 = vmatprep.subr.bf16.mxu0 0
  %88 = vmatpush1.bf16.msra.mxu0 0
  %89 = vmatprep.subr.bf16.mxu0 0
  %90 = vmatpush1.bf16.msra.mxu0 0
  %91 = vmatprep.subr.bf16.mxu0 0
  %92 = vmatpush1.bf16.msra.mxu0 0
  %93 = vmatprep.subr.bf16.mxu0 0
  %94 = vmatpush1.bf16.msra.mxu0 0
  %95 = vmatprep.subr.bf16.mxu0 0
  %96 = vmatpush1.bf16.msra.mxu0 0
  %97 = vmatprep.mubr.bf16.mxu0 0
  %98 = vmatmul.mubr.bf16.gmra.mrb[0].mxu0 %v63
  %v99 = vpop.f32.mrb[0].mxu0
  %v100 = vadd.f32 0.0, %v99
  %v101 = vpop.f32.mrb[0].mxu0
  %v102 = vadd.f32 0.0, %v101
  %v103 = vpop.f32.mrb[0].mxu0
  %v104 = vpop.f32.mrb[0].mxu0
  %105 = vdwg.mxu0
  %106 = vmatprep.subr.bf16.mxu0 %v48
  %107 = vmatpush1.bf16.msra.mxu0 %v47
  %108 = vmatprep.subr.bf16.mxu0 %v52
  %109 = vmatpush1.bf16.msra.mxu0 %v51
  %110 = vmatprep.subr.bf16.mxu0 0
  %111 = vmatpush1.bf16.msra.mxu0 0
  %112 = vmatprep.subr.bf16.mxu0 0
  %113 = vmatpush1.bf16.msra.mxu0 0
  %114 = vmatprep.subr.bf16.mxu0 0
  %115 = vmatpush1.bf16.msra.mxu0 0
  %116 = vmatprep.subr.bf16.mxu0 0
  %117 = vmatpush1.bf16.msra.mxu0 0
  %118 = vmatprep.subr.bf16.mxu0 0
  %119 = vmatpush1.bf16.msra.mxu0 0
  %120 = vmatprep.subr.bf16.mxu0 0
  %121 = vmatpush1.bf16.msra.mxu0 0
  %122 = vmatprep.subr.bf16.mxu0 0
  %123 = vmatpush1.bf16.msra.mxu0 0
  %124 = vmatprep.subr.bf16.mxu0 0
  %125 = vmatpush1.bf16.msra.mxu0 0
  %126 = vmatprep.subr.bf16.mxu0 0
  %127 = vmatpush1.bf16.msra.mxu0 0
  %128 = vmatprep.subr.bf16.mxu0 0
  %129 = vmatpush1.bf16.msra.mxu0 0
  %130 = vmatprep.subr.bf16.mxu0 0
  %131 = vmatpush1.bf16.msra.mxu0 0
  %132 = vmatprep.subr.bf16.mxu0 0
  %133 = vmatpush1.bf16.msra.mxu0 0
  %134 = vmatprep.subr.bf16.mxu0 0
  %135 = vmatpush1.bf16.msra.mxu0 0
  %136 = vmatprep.subr.bf16.mxu0 0
  %137 = vmatpush1.bf16.msra.mxu0 0
  %138 = vmatprep.mubr.bf16.mxu0 0
  %139 = vmatmul.mubr.bf16.gmra.mrb[0].mxu0 %v63
  %v140 = vpop.f32.mrb[0].mxu0
  %v141 = vadd.f32 0.0, %v140
  %v142 = vpop.f32.mrb[0].mxu0
  %v143 = vadd.f32 0.0, %v142
  %v144 = vpop.f32.mrb[0].mxu0
  %v145 = vpop.f32.mrb[0].mxu0
  %146 = vdwg.mxu0
  %147 = vst [vmem:[%s2] sm:$0xff] %v100
  %148 = vst [vmem:[%s2 + $0x8] sm:$0xff] %v102
  %149 = vst [vmem:[%s2 + $0x10] sm:$0xff] %v141
  %150 = vst [vmem:[%s2 + $0x18] sm:$0xff] %v143
  // Predicated region
  $region10: #{vae_forward.11} parent=0 // pred_check
    _
  $region11: #{vae_forward.11} parent=0 // pred_check_branch
    %152 = sbr.rel (0) target = $region13
  $region12: #{vae_forward.11} parent=0 // pred_region
    _
  $region13: #{vae_forward.11} parent=0 // pred_fallthru
    _
  // Predicated region
  $region14: #{vae_forward.11} parent=0 // pred_check
    _
  $region15: #{vae_forward.11} parent=0 // pred_check_branch
    %154 = sbr.rel (0) target = $region17
  $region16: #{vae_forward.11} parent=0 // pred_region
    _
  $region17: #{vae_forward.11} parent=0 // pred_fallthru
    _

// kernel: vae_forward.12
$region0: #{vae_forward.12}
  #allocation0 [shape = 'u32[]', space=smem, size = 0x4, offset = 0x4, fixed_abs, tag = 'smem constant byte address 0x4 - core index']
  #allocation1 [shape = 'u32[144,128]{1,0:T(1,128)}', space=vmem, size = 0x12000, scoped, tag = 'internal scratch']
  %s0 = inlined_call_operand.vmem [shape: bf16[98,32], index: 0, kind: input, shape index: {}]
  %s1 = inlined_call_operand.vmem [shape: bf16[32,512], index: 1, kind: input, shape index: {}]
  %s2 = inlined_call_operand.vmem [shape: f32[98,512], index: 2, kind: output, shape index: {}]
  %s3 = sld [smem:[#allocation0]]
  $region18: #{vae_forward.12} parent=0
    _
  %s5 = ssub.s32 1, %s3
  %s6 = scalar_select 0, %s5, %s3
  // Predicated region
  $region2: #{vae_forward.12} parent=0 // pred_check
    _
  $region3: #{vae_forward.12} parent=0 // pred_check_branch
    %8 = sbr.rel (0) target = $region5
  $region4: #{vae_forward.12} parent=0 // pred_region
    _
  $region5: #{vae_forward.12} parent=0 // pred_fallthru
    _
  // Predicated region
  $region6: #{vae_forward.12} parent=0 // pred_check
    _
  $region7: #{vae_forward.12} parent=0 // pred_check_branch
    %10 = sbr.rel (0) target = $region9
  $region8: #{vae_forward.12} parent=0 // pred_region
    _
  $region9: #{vae_forward.12} parent=0 // pred_fallthru
    _
  %v12 = vld [vmem:[%s0] sm:$0xf]
  %v13 = vld [vmem:[%s0 + $0x4] sm:$0xf]
  %v14 = vld [vmem:[%s0 + $0x8] sm:$0xf]
  %v15 = vld [vmem:[%s0 + $0xc] sm:$0xf]
  %v16 = vld [vmem:[%s0 + $0x10] sm:$0xf]
  %v17 = vld [vmem:[%s0 + $0x14] sm:$0xf]
  %v18 = vld [vmem:[%s0 + $0x18] sm:$0xf]
  %v19 = vld [vmem:[%s0 + $0x1c] sm:$0xf]
  %v20 = vld [vmem:[%s0 + $0x20] sm:$0xf]
  %v21 = vld [vmem:[%s0 + $0x24] sm:$0xf]
  %v22 = vld [vmem:[%s0 + $0x28] sm:$0xf]
  %v23 = vld [vmem:[%s0 + $0x2c] sm:$0xf]
  %v24 = vld [vmem:[%s0 + $0x30] sm:$0x1]
  %v25 = vld [vmem:[%s1] sm:$0xff]
  %v26 = vld [vmem:[%s1 + $0x8] sm:$0xff]
  %v27 = vld [vmem:[%s1 + $0x10] sm:$0xff]
  %v28 = vld [vmem:[%s1 + $0x18] sm:$0xff]
  %v29 = vld [vmem:[%s1 + $0x20] sm:$0xff]
  %v30 = vld [vmem:[%s1 + $0x28] sm:$0xff]
  %v31 = vld [vmem:[%s1 + $0x30] sm:$0xff]
  %v32 = vld [vmem:[%s1 + $0x38] sm:$0xff]
  %v46 = vunpack.c.l.b16 %v12
  %v47 = vunpack.c.l.b16 %v13
  %v48 = vunpack.c.l.b16 %v14
  %v49 = vunpack.c.l.b16 %v15
  %v50 = vunpack.c.l.b16 %v16
  %v51 = vunpack.c.l.b16 %v17
  %v52 = vunpack.c.l.b16 %v18
  %v53 = vunpack.c.l.b16 %v19
  %v54 = vunpack.c.l.b16 %v20
  %v55 = vunpack.c.l.b16 %v21
  %v56 = vunpack.c.l.b16 %v22
  %v57 = vunpack.c.l.b16 %v23
  %v58 = vunpack.c.l.b16 %v24
  %v59 = vpack.c.b16 %v47, %v46
  %v60 = vpack.c.b16 %v49, %v48
  %v61 = vpack.c.b16 %v51, %v50
  %v62 = vpack.c.b16 %v53, %v52
  %v63 = vpack.c.b16 %v55, %v54
  %v64 = vpack.c.b16 %v57, %v56
  %v65 = vpack.c.b16 %v58, %v58
  %v74 = vunpack.c.l.b16 %v25
  %v75 = vunpack.c.h.b16 %v25
  %v76 = vunpack.c.l.b16 %v26
  %v77 = vunpack.c.h.b16 %v26
  %v78 = vunpack.c.l.b16 %v27
  %v79 = vunpack.c.h.b16 %v27
  %v80 = vunpack.c.l.b16 %v28
  %v81 = vunpack.c.h.b16 %v28
  %v82 = vunpack.c.l.b16 %v29
  %v83 = vunpack.c.h.b16 %v29
  %v84 = vunpack.c.l.b16 %v30
  %v85 = vunpack.c.h.b16 %v30
  %v86 = vunpack.c.l.b16 %v31
  %v87 = vunpack.c.h.b16 %v31
  %v88 = vunpack.c.l.b16 %v32
  %v89 = vunpack.c.h.b16 %v32
  %v90 = vpack.c.b16 %v78, %v74
  %v91 = vpack.c.b16 %v79, %v75
  %v92 = vpack.c.b16 %v80, %v76
  %v93 = vpack.c.b16 %v81, %v77
  %v94 = vpack.c.b16 %v86, %v82
  %v95 = vpack.c.b16 %v87, %v83
  %v96 = vpack.c.b16 %v88, %v84
  %v97 = vpack.c.b16 %v89, %v85
  %vm106 = vcmask 261120
  %v108 = vsel %vm106, %v59, 0
  %v111 = vsel %vm106, %v60, 0
  %v114 = vsel %vm106, %v61, 0
  %v117 = vsel %vm106, %v62, 0
  %v120 = vsel %vm106, %v63, 0
  %v123 = vsel %vm106, %v64, 0
  %v126 = vsel %vm106, %v65, 0
  %128 = vmatprep.subr.bf16.mxu0 %v91
  %129 = vmatpush1.bf16.msra.mxu0 %v90
  %130 = vmatprep.subr.bf16.mxu0 %v95
  %131 = vmatpush1.bf16.msra.mxu0 %v94
  %132 = vmatprep.subr.bf16.mxu0 0
  %133 = vmatpush1.bf16.msra.mxu0 0
  %134 = vmatprep.subr.bf16.mxu0 0
  %135 = vmatpush1.bf16.msra.mxu0 0
  %136 = vmatprep.subr.bf16.mxu0 0
  %137 = vmatpush1.bf16.msra.mxu0 0
  %138 = vmatprep.subr.bf16.mxu0 0
  %139 = vmatpush1.bf16.msra.mxu0 0
  %140 = vmatprep.subr.bf16.mxu0 0
  %141 = vmatpush1.bf16.msra.mxu0 0
  %142 = vmatprep.subr.bf16.mxu0 0
  %143 = vmatpush1.bf16.msra.mxu0 0
  %144 = vmatprep.subr.bf16.mxu0 0
  %145 = vmatpush1.bf16.msra.mxu0 0
  %146 = vmatprep.subr.bf16.mxu0 0
  %147 = vmatpush1.bf16.msra.mxu0 0
  %148 = vmatprep.subr.bf16.mxu0 0
  %149 = vmatpush1.bf16.msra.mxu0 0
  %150 = vmatprep.subr.bf16.mxu0 0
  %151 = vmatpush1.bf16.msra.mxu0 0
  %152 = vmatprep.subr.bf16.mxu0 0
  %153 = vmatpush1.bf16.msra.mxu0 0
  %154 = vmatprep.subr.bf16.mxu0 0
  %155 = vmatpush1.bf16.msra.mxu0 0
  %156 = vmatprep.subr.bf16.mxu0 0
  %157 = vmatpush1.bf16.msra.mxu0 0
  %158 = vmatprep.subr.bf16.mxu0 0
  %159 = vmatpush1.bf16.msra.mxu0 0
  %160 = vmatprep.mubr.bf16.mxu0 0
  %161 = vmatmul.mubr.bf16.gmra.mrb[0].mxu0 %v108
  %v162 = vpop.f32.mrb[0].mxu0
  %v163 = vadd.f32 0.0, %v162
  %v164 = vpop.f32.mrb[0].mxu0
  %v165 = vadd.f32 0.0, %v164
  %v166 = vpop.f32.mrb[0].mxu0
  %v167 = vadd.f32 0.0, %v166
  %v168 = vpop.f32.mrb[0].mxu0
  %v169 = vadd.f32 0.0, %v168
  %170 = vmatprep.mubr.bf16.mxu0 0
  %171 = vmatmul.mubr.bf16.gmra.mrb[0].mxu0 %v111
  %v172 = vpop.f32.mrb[0].mxu0
  %v173 = vadd.f32 0.0, %v172
  %v174 = vpop.f32.mrb[0].mxu0
  %v175 = vadd.f32 0.0, %v174
  %v176 = vpop.f32.mrb[0].mxu0
  %v177 = vadd.f32 0.0, %v176
  %v178 = vpop.f32.mrb[0].mxu0
  %v179 = vadd.f32 0.0, %v178
  %180 = vmatprep.mubr.bf16.mxu0 0
  %181 = vmatmul.mubr.bf16.gmra.mrb[0].mxu0 %v114
  %v182 = vpop.f32.mrb[0].mxu0
  %v183 = vadd.f32 0.0, %v182
  %v184 = vpop.f32.mrb[0].mxu0
  %v185 = vadd.f32 0.0, %v184
  %v186 = vpop.f32.mrb[0].mxu0
  %v187 = vadd.f32 0.0, %v186
  %v188 = vpop.f32.mrb[0].mxu0
  %v189 = vadd.f32 0.0, %v188
  %190 = vmatprep.mubr.bf16.mxu0 0
  %191 = vmatmul.mubr.bf16.gmra.mrb[0].mxu0 %v117
  %v192 = vpop.f32.mrb[0].mxu0
  %v193 = vadd.f32 0.0, %v192
  %v194 = vpop.f32.mrb[0].mxu0
  %v195 = vadd.f32 0.0, %v194
  %v196 = vpop.f32.mrb[0].mxu0
  %v197 = vadd.f32 0.0, %v196
  %v198 = vpop.f32.mrb[0].mxu0
  %v199 = vadd.f32 0.0, %v198
  %200 = vmatprep.mubr.bf16.mxu0 0
  %201 = vmatmul.mubr.bf16.gmra.mrb[0].mxu0 %v120
  %v202 = vpop.f32.mrb[0].mxu0
  %v203 = vadd.f32 0.0, %v202
  %v204 = vpop.f32.mrb[0].mxu0
  %v205 = vadd.f32 0.0, %v204
  %v206 = vpop.f32.mrb[0].mxu0
  %v207 = vadd.f32 0.0, %v206
  %v208 = vpop.f32.mrb[0].mxu0
  %v209 = vadd.f32 0.0, %v208
  %210 = vmatprep.mubr.bf16.mxu0 0
  %211 = vmatmul.mubr.bf16.gmra.mrb[0].mxu0 %v123
  %v212 = vpop.f32.mrb[0].mxu0
  %v213 = vadd.f32 0.0, %v212
  %v214 = vpop.f32.mrb[0].mxu0
  %v215 = vadd.f32 0.0, %v214
  %v216 = vpop.f32.mrb[0].mxu0
  %v217 = vadd.f32 0.0, %v216
  %v218 = vpop.f32.mrb[0].mxu0
  %v219 = vadd.f32 0.0, %v218
  %220 = vmatprep.mubr.bf16.mxu0 0
  %221 = vmatmul.mubr.bf16.gmra.mrb[0].mxu0 %v126
  %v222 = vpop.f32.mrb[0].mxu0
  %v223 = vadd.f32 0.0, %v222
  %v224 = vpop.f32.mrb[0].mxu0
  %v225 = vadd.f32 0.0, %v224
  %v226 = vpop.f32.mrb[0].mxu0
  %v227 = vpop.f32.mrb[0].mxu0
  %228 = vdwg.mxu0
  %229 = vmatprep.subr.bf16.mxu0 %v93
  %230 = vmatpush1.bf16.msra.mxu0 %v92
  %231 = vmatprep.subr.bf16.mxu0 %v97
  %232 = vmatpush1.bf16.msra.mxu0 %v96
  %233 = vmatprep.subr.bf16.mxu0 0
  %234 = vmatpush1.bf16.msra.mxu0 0
  %235 = vmatprep.subr.bf16.mxu0 0
  %236 = vmatpush1.bf16.msra.mxu0 0
  %237 = vmatprep.subr.bf16.mxu0 0
  %238 = vmatpush1.bf16.msra.mxu0 0
  %239 = vmatprep.subr.bf16.mxu0 0
  %240 = vmatpush1.bf16.msra.mxu0 0
  %241 = vmatprep.subr.bf16.mxu0 0
  %242 = vmatpush1.bf16.msra.mxu0 0
  %243 = vmatprep.subr.bf16.mxu0 0
  %244 = vmatpush1.bf16.msra.mxu0 0
  %245 = vmatprep.subr.bf16.mxu0 0
  %246 = vmatpush1.bf16.msra.mxu0 0
  %247 = vmatprep.subr.bf16.mxu0 0
  %248 = vmatpush1.bf16.msra.mxu0 0
  %249 = vmatprep.subr.bf16.mxu0 0
  %250 = vmatpush1.bf16.msra.mxu0 0
  %251 = vmatprep.subr.bf16.mxu0 0
  %252 = vmatpush1.bf16.msra.mxu0 0
  %253 = vmatprep.subr.bf16.mxu0 0
  %254 = vmatpush1.bf16.msra.mxu0 0
  %255 = vmatprep.subr.bf16.mxu0 0
  %256 = vmatpush1.bf16.msra.mxu0 0
  %257 = vmatprep.subr.bf16.mxu0 0
  %258 = vmatpush1.bf16.msra.mxu0 0
  %259 = vmatprep.subr.bf16.mxu0 0
  %260 = vmatpush1.bf16.msra.mxu0 0
  %261 = vmatprep.mubr.bf16.mxu0 0
  %262 = vmatmul.mubr.bf16.gmra.mrb[0].mxu0 %v108
  %v263 = vpop.f32.mrb[0].mxu0
  %v264 = vadd.f32 0.0, %v263
  %v265 = vpop.f32.mrb[0].mxu0
  %v266 = vadd.f32 0.0, %v265
  %v267 = vpop.f32.mrb[0].mxu0
  %v268 = vadd.f32 0.0, %v267
  %v269 = vpop.f32.mrb[0].mxu0
  %v270 = vadd.f32 0.0, %v269
  %271 = vmatprep.mubr.bf16.mxu0 0
  %272 = vmatmul.mubr.bf16.gmra.mrb[0].mxu0 %v111
  %v273 = vpop.f32.mrb[0].mxu0
  %v274 = vadd.f32 0.0, %v273
  %v275 = vpop.f32.mrb[0].mxu0
  %v276 = vadd.f32 0.0, %v275
  %v277 = vpop.f32.mrb[0].mxu0
  %v278 = vadd.f32 0.0, %v277
  %v279 = vpop.f32.mrb[0].mxu0
  %v280 = vadd.f32 0.0, %v279
  %281 = vmatprep.mubr.bf16.mxu0 0
  %282 = vmatmul.mubr.bf16.gmra.mrb[0].mxu0 %v114
  %v283 = vpop.f32.mrb[0].mxu0
  %v284 = vadd.f32 0.0, %v283
  %v285 = vpop.f32.mrb[0].mxu0
  %v286 = vadd.f32 0.0, %v285
  %v287 = vpop.f32.mrb[0].mxu0
  %v288 = vadd.f32 0.0, %v287
  %v289 = vpop.f32.mrb[0].mxu0
  %v290 = vadd.f32 0.0, %v289
  %291 = vmatprep.mubr.bf16.mxu0 0
  %292 = vmatmul.mubr.bf16.gmra.mrb[0].mxu0 %v117
  %v293 = vpop.f32.mrb[0].mxu0
  %v294 = vadd.f32 0.0, %v293
  %v295 = vpop.f32.mrb[0].mxu0
  %v296 = vadd.f32 0.0, %v295
  %v297 = vpop.f32.mrb[0].mxu0
  %v298 = vadd.f32 0.0, %v297
  %v299 = vpop.f32.mrb[0].mxu0
  %v300 = vadd.f32 0.0, %v299
  %301 = vmatprep.mubr.bf16.mxu0 0
  %302 = vmatmul.mubr.bf16.gmra.mrb[0].mxu0 %v120
  %v303 = vpop.f32.mrb[0].mxu0
  %v304 = vadd.f32 0.0, %v303
  %v305 = vpop.f32.mrb[0].mxu0
  %v306 = vadd.f32 0.0, %v305
  %v307 = vpop.f32.mrb[0].mxu0
  %v308 = vadd.f32 0.0, %v307
  %v309 = vpop.f32.mrb[0].mxu0
  %v310 = vadd.f32 0.0, %v309
  %311 = vmatprep.mubr.bf16.mxu0 0
  %312 = vmatmul.mubr.bf16.gmra.mrb[0].mxu0 %v123
  %v313 = vpop.f32.mrb[0].mxu0
  %v314 = vadd.f32 0.0, %v313
  %v315 = vpop.f32.mrb[0].mxu0
  %v316 = vadd.f32 0.0, %v315
  %v317 = vpop.f32.mrb[0].mxu0
  %v318 = vadd.f32 0.0, %v317
  %v319 = vpop.f32.mrb[0].mxu0
  %v320 = vadd.f32 0.0, %v319
  %321 = vmatprep.mubr.bf16.mxu0 0
  %322 = vmatmul.mubr.bf16.gmra.mrb[0].mxu0 %v126
  %v323 = vpop.f32.mrb[0].mxu0
  %v324 = vadd.f32 0.0, %v323
  %v325 = vpop.f32.mrb[0].mxu0
  %v326 = vadd.f32 0.0, %v325
  %v327 = vpop.f32.mrb[0].mxu0
  %v328 = vpop.f32.mrb[0].mxu0
  %329 = vdwg.mxu0
  %330 = vst [vmem:[%s2] sm:$0xff] %v163
  %331 = vst [vmem:[%s2 + $0x8] sm:$0xff] %v165
  %332 = vst [vmem:[%s2 + $0x10] sm:$0xff] %v264
  %333 = vst [vmem:[%s2 + $0x18] sm:$0xff] %v266
  %334 = vst [vmem:[%s2 + $0x20] sm:$0xff] %v167
  %335 = vst [vmem:[%s2 + $0x28] sm:$0xff] %v169
  %336 = vst [vmem:[%s2 + $0x30] sm:$0xff] %v268
  %337 = vst [vmem:[%s2 + $0x38] sm:$0xff] %v270
  %338 = vst [vmem:[%s2 + $0x40] sm:$0xff] %v173
  %339 = vst [vmem:[%s2 + $0x48] sm:$0xff] %v175
  %340 = vst [vmem:[%s2 + $0x50] sm:$0xff] %v274
  %341 = vst [vmem:[%s2 + $0x58] sm:$0xff] %v276
  %342 = vst [vmem:[%s2 + $0x60] sm:$0xff] %v177
  %343 = vst [vmem:[%s2 + $0x68] sm:$0xff] %v179
  %344 = vst [vmem:[%s2 + $0x70] sm:$0xff] %v278
  %345 = vst [vmem:[%s2 + $0x78] sm:$0xff] %v280
  %346 = vst [vmem:[%s2 + $0x80] sm:$0xff] %v183
  %347 = vst [vmem:[%s2 + $0x88] sm:$0xff] %v185
  %348 = vst [vmem:[%s2 + $0x90] sm:$0xff] %v284
  %349 = vst [vmem:[%s2 + $0x98] sm:$0xff] %v286
  %350 = vst [vmem:[%s2 + $0xa0] sm:$0xff] %v187
  %351 = vst [vmem:[%s2 + $0xa8] sm:$0xff] %v189
  %352 = vst [vmem:[%s2 + $0xb0] sm:$0xff] %v288
  %353 = vst [vmem:[%s2 + $0xb8] sm:$0xff] %v290
  %354 = vst [vmem:[%s2 + $0xc0] sm:$0xff] %v193
  %355 = vst [vmem:[%s2 + $0xc8] sm:$0xff] %v195
  %356 = vst [vmem:[%s2 + $0xd0] sm:$0xff] %v294
  %357 = vst [vmem:[%s2 + $0xd8] sm:$0xff] %v296
  %358 = vst [vmem:[%s2 + $0xe0] sm:$0xff] %v197
  %359 = vst [vmem:[%s2 + $0xe8] sm:$0xff] %v199
  %360 = vst [vmem:[%s2 + $0xf0] sm:$0xff] %v298
  %361 = vst [vmem:[%s2 + $0xf8] sm:$0xff] %v300
  %362 = vst [vmem:[%s2 + $0x100] sm:$0xff] %v203
  %363 = vst [vmem:[%s2 + $0x108] sm:$0xff] %v205
  %364 = vst [vmem:[%s2 + $0x110] sm:$0xff] %v304
  %365 = vst [vmem:[%s2 + $0x118] sm:$0xff] %v306
  %366 = vst [vmem:[%s2 + $0x120] sm:$0xff] %v207
  %367 = vst [vmem:[%s2 + $0x128] sm:$0xff] %v209
  %368 = vst [vmem:[%s2 + $0x130] sm:$0xff] %v308
  %369 = vst [vmem:[%s2 + $0x138] sm:$0xff] %v310
  %370 = vst [vmem:[%s2 + $0x140] sm:$0xff] %v213
  %371 = vst [vmem:[%s2 + $0x148] sm:$0xff] %v215
  %372 = vst [vmem:[%s2 + $0x150] sm:$0xff] %v314
  %373 = vst [vmem:[%s2 + $0x158] sm:$0xff] %v316
  %374 = vst [vmem:[%s2 + $0x160] sm:$0xff] %v217
  %375 = vst [vmem:[%s2 + $0x168] sm:$0xff] %v219
  %376 = vst [vmem:[%s2 + $0x170] sm:$0xff] %v318
  %377 = vst [vmem:[%s2 + $0x178] sm:$0xff] %v320
  %378 = vst [vmem:[%s2 + $0x180] sm:$0x3] %v223
  %379 = vst [vmem:[%s2 + $0x188] sm:$0x3] %v225
  %380 = vst [vmem:[%s2 + $0x190] sm:$0x3] %v324
  %381 = vst [vmem:[%s2 + $0x198] sm:$0x3] %v326
  // Predicated region
  $region10: #{vae_forward.12} parent=0 // pred_check
    _
  $region11: #{vae_forward.12} parent=0 // pred_check_branch
    %383 = sbr.rel (0) target = $region13
  $region12: #{vae_forward.12} parent=0 // pred_region
    _
  $region13: #{vae_forward.12} parent=0 // pred_fallthru
    _
  // Predicated region
  $region14: #{vae_forward.12} parent=0 // pred_check
    _
  $region15: #{vae_forward.12} parent=0 // pred_check_branch
    %385 = sbr.rel (0) target = $region17
  $region16: #{vae_forward.12} parent=0 // pred_region
    _
  $region17: #{vae_forward.12} parent=0 // pred_fallthru
    _

// kernel: vae_forward.13
$region0: #{vae_forward.13}
  #allocation0 [shape = 'u32[]', space=smem, size = 0x4, offset = 0x4, fixed_abs, tag = 'smem constant byte address 0x4 - core index']
  #allocation1 [shape = 'u32[144,128]{1,0:T(1,128)}', space=vmem, size = 0x12000, scoped, tag = 'internal scratch']
  %s0 = inlined_call_operand.vmem [shape: bf16[392,32], index: 0, kind: input, shape index: {}]
  %s1 = inlined_call_operand.vmem [shape: bf16[32,64], index: 1, kind: input, shape index: {}]
  %s2 = inlined_call_operand.vmem [shape: f32[392,64], index: 2, kind: output, shape index: {}]
  %s3 = sld [smem:[#allocation0]]
  $region18: #{vae_forward.13} parent=0
    _
  %s5 = ssub.s32 1, %s3
  %s6 = scalar_select 0, %s5, %s3
  // Predicated region
  $region2: #{vae_forward.13} parent=0 // pred_check
    _
  $region3: #{vae_forward.13} parent=0 // pred_check_branch
    %8 = sbr.rel (0) target = $region5
  $region4: #{vae_forward.13} parent=0 // pred_region
    _
  $region5: #{vae_forward.13} parent=0 // pred_fallthru
    _
  // Predicated region
  $region6: #{vae_forward.13} parent=0 // pred_check
    _
  $region7: #{vae_forward.13} parent=0 // pred_check_branch
    %10 = sbr.rel (0) target = $region9
  $region8: #{vae_forward.13} parent=0 // pred_region
    _
  $region9: #{vae_forward.13} parent=0 // pred_fallthru
    _
  %v12 = vld [vmem:[%s0] sm:$0xf]
  %v13 = vld [vmem:[%s0 + $0x4] sm:$0xf]
  %v14 = vld [vmem:[%s0 + $0x8] sm:$0xf]
  %v15 = vld [vmem:[%s0 + $0xc] sm:$0xf]
  %v16 = vld [vmem:[%s0 + $0x10] sm:$0xf]
  %v17 = vld [vmem:[%s0 + $0x14] sm:$0xf]
  %v18 = vld [vmem:[%s0 + $0x18] sm:$0xf]
  %v19 = vld [vmem:[%s0 + $0x1c] sm:$0xf]
  %v20 = vld [vmem:[%s0 + $0x20] sm:$0xf]
  %v21 = vld [vmem:[%s0 + $0x24] sm:$0xf]
  %v22 = vld [vmem:[%s0 + $0x28] sm:$0xf]
  %v23 = vld [vmem:[%s0 + $0x2c] sm:$0xf]
  %v24 = vld [vmem:[%s0 + $0x30] sm:$0xf]
  %v25 = vld [vmem:[%s0 + $0x34] sm:$0xf]
  %v26 = vld [vmem:[%s0 + $0x38] sm:$0xf]
  %v27 = vld [vmem:[%s0 + $0x3c] sm:$0xf]
  %v28 = vld [vmem:[%s0 + $0x40] sm:$0xf]
  %v29 = vld [vmem:[%s0 + $0x44] sm:$0xf]
  %v30 = vld [vmem:[%s0 + $0x48] sm:$0xf]
  %v31 = vld [vmem:[%s0 + $0x4c] sm:$0xf]
  %v32 = vld [vmem:[%s0 + $0x50] sm:$0xf]
  %v33 = vld [vmem:[%s0 + $0x54] sm:$0xf]
  %v34 = vld [vmem:[%s0 + $0x58] sm:$0xf]
  %v35 = vld [vmem:[%s0 + $0x5c] sm:$0xf]
  %v36 = vld [vmem:[%s0 + $0x60] sm:$0xf]
  %v37 = vld [vmem:[%s0 + $0x64] sm:$0xf]
  %v38 = vld [vmem:[%s0 + $0x68] sm:$0xf]
  %v39 = vld [vmem:[%s0 + $0x6c] sm:$0xf]
  %v40 = vld [vmem:[%s0 + $0x70] sm:$0xf]
  %v41 = vld [vmem:[%s0 + $0x74] sm:$0xf]
  %v42 = vld [vmem:[%s0 + $0x78] sm:$0xf]
  %v43 = vld [vmem:[%s0 + $0x7c] sm:$0xf]
  %v44 = vld [vmem:[%s0 + $0x80] sm:$0xf]
  %v45 = vld [vmem:[%s0 + $0x84] sm:$0xf]
  %v46 = vld [vmem:[%s0 + $0x88] sm:$0xf]
  %v47 = vld [vmem:[%s0 + $0x8c] sm:$0xf]
  %v48 = vld [vmem:[%s0 + $0x90] sm:$0xf]
  %v49 = vld [vmem:[%s0 + $0x94] sm:$0xf]
  %v50 = vld [vmem:[%s0 + $0x98] sm:$0xf]
  %v51 = vld [vmem:[%s0 + $0x9c] sm:$0xf]
  %v52 = vld [vmem:[%s0 + $0xa0] sm:$0xf]
  %v53 = vld [vmem:[%s0 + $0xa4] sm:$0xf]
  %v54 = vld [vmem:[%s0 + $0xa8] sm:$0xf]
  %v55 = vld [vmem:[%s0 + $0xac] sm:$0xf]
  %v56 = vld [vmem:[%s0 + $0xb0] sm:$0xf]
  %v57 = vld [vmem:[%s0 + $0xb4] sm:$0xf]
  %v58 = vld [vmem:[%s0 + $0xb8] sm:$0xf]
  %v59 = vld [vmem:[%s0 + $0xbc] sm:$0xf]
  %v60 = vld [vmem:[%s0 + $0xc0] sm:$0xf]
  %v61 = vld [vmem:[%s1] sm:$0xf]
  %v62 = vld [vmem:[%s1 + $0x4] sm:$0xf]
  %v63 = vld [vmem:[%s1 + $0x8] sm:$0xf]
  %v64 = vld [vmem:[%s1 + $0xc] sm:$0xf]
  %v114 = vunpack.c.l.b16 %v12
  %v115 = vunpack.c.l.b16 %v13
  %v116 = vunpack.c.l.b16 %v14
  %v117 = vunpack.c.l.b16 %v15
  %v118 = vunpack.c.l.b16 %v16
  %v119 = vunpack.c.l.b16 %v17
  %v120 = vunpack.c.l.b16 %v18
  %v121 = vunpack.c.l.b16 %v19
  %v122 = vunpack.c.l.b16 %v20
  %v123 = vunpack.c.l.b16 %v21
  %v124 = vunpack.c.l.b16 %v22
  %v125 = vunpack.c.l.b16 %v23
  %v126 = vunpack.c.l.b16 %v24
  %v127 = vunpack.c.l.b16 %v25
  %v128 = vunpack.c.l.b16 %v26
  %v129 = vunpack.c.l.b16 %v27
  %v130 = vunpack.c.l.b16 %v28
  %v131 = vunpack.c.l.b16 %v29
  %v132 = vunpack.c.l.b16 %v30
  %v133 = vunpack.c.l.b16 %v31
  %v134 = vunpack.c.l.b16 %v32
  %v135 = vunpack.c.l.b16 %v33
  %v136 = vunpack.c.l.b16 %v34
  %v137 = vunpack.c.l.b16 %v35
  %v138 = vunpack.c.l.b16 %v36
  %v139 = vunpack.c.l.b16 %v37
  %v140 = vunpack.c.l.b16 %v38
  %v141 = vunpack.c.l.b16 %v39
  %v142 = vunpack.c.l.b16 %v40
  %v143 = vunpack.c.l.b16 %v41
  %v144 = vunpack.c.l.b16 %v42
  %v145 = vunpack.c.l.b16 %v43
  %v146 = vunpack.c.l.b16 %v44
  %v147 = vunpack.c.l.b16 %v45
  %v148 = vunpack.c.l.b16 %v46
  %v149 = vunpack.c.l.b16 %v47
  %v150 = vunpack.c.l.b16 %v48
  %v151 = vunpack.c.l.b16 %v49
  %v152 = vunpack.c.l.b16 %v50
  %v153 = vunpack.c.l.b16 %v51
  %v154 = vunpack.c.l.b16 %v52
  %v155 = vunpack.c.l.b16 %v53
  %v156 = vunpack.c.l.b16 %v54
  %v157 = vunpack.c.l.b16 %v55
  %v158 = vunpack.c.l.b16 %v56
  %v159 = vunpack.c.l.b16 %v57
  %v160 = vunpack.c.l.b16 %v58
  %v161 = vunpack.c.l.b16 %v59
  %v162 = vunpack.c.l.b16 %v60
  %v163 = vpack.c.b16 %v115, %v114
  %v164 = vpack.c.b16 %v117, %v116
  %v165 = vpack.c.b16 %v119, %v118
  %v166 = vpack.c.b16 %v121, %v120
  %v167 = vpack.c.b16 %v123, %v122
  %v168 = vpack.c.b16 %v125, %v124
  %v169 = vpack.c.b16 %v127, %v126
  %v170 = vpack.c.b16 %v129, %v128
  %v171 = vpack.c.b16 %v131, %v130
  %v172 = vpack.c.b16 %v133, %v132
  %v173 = vpack.c.b16 %v135, %v134
  %v174 = vpack.c.b16 %v137, %v136
  %v175 = vpack.c.b16 %v139, %v138
  %v176 = vpack.c.b16 %v141, %v140
  %v177 = vpack.c.b16 %v143, %v142
  %v178 = vpack.c.b16 %v145, %v144
  %v179 = vpack.c.b16 %v147, %v146
  %v180 = vpack.c.b16 %v149, %v148
  %v181 = vpack.c.b16 %v151, %v150
  %v182 = vpack.c.b16 %v153, %v152
  %v183 = vpack.c.b16 %v155, %v154
  %v184 = vpack.c.b16 %v157, %v156
  %v185 = vpack.c.b16 %v159, %v158
  %v186 = vpack.c.b16 %v161, %v160
  %v187 = vpack.c.b16 %v162, %v162
  %v192 = vunpack.c.l.b16 %v61
  %v193 = vunpack.c.l.b16 %v62
  %v194 = vunpack.c.l.b16 %v63
  %v195 = vunpack.c.l.b16 %v64
  %v196 = vpack.c.b16 %v193, %v192
  %v197 = vpack.c.b16 %v195, %v194
  %vm200 = vcmask 261120
  %v202 = vsel %vm200, %v163, 0
  %v205 = vsel %vm200, %v164, 0
  %v208 = vsel %vm200, %v165, 0
  %v211 = vsel %vm200, %v166, 0
  %v214 = vsel %vm200, %v167, 0
  %v217 = vsel %vm200, %v168, 0
  %v220 = vsel %vm200, %v169, 0
  %v223 = vsel %vm200, %v170, 0
  %v226 = vsel %vm200, %v171, 0
  %v229 = vsel %vm200, %v172, 0
  %v232 = vsel %vm200, %v173, 0
  %v235 = vsel %vm200, %v174, 0
  %v238 = vsel %vm200, %v175, 0
  %v241 = vsel %vm200, %v176, 0
  %v244 = vsel %vm200, %v177, 0
  %v247 = vsel %vm200, %v178, 0
  %v250 = vsel %vm200, %v179, 0
  %v253 = vsel %vm200, %v180, 0
  %v256 = vsel %vm200, %v181, 0
  %v259 = vsel %vm200, %v182, 0
  %v262 = vsel %vm200, %v183, 0
  %v265 = vsel %vm200, %v184, 0
  %v268 = vsel %vm200, %v185, 0
  %v271 = vsel %vm200, %v186, 0
  %v274 = vsel %vm200, %v187, 0
  %276 = vmatprep.subr.bf16.mxu0 0
  %277 = vmatpush1.bf16.msra.mxu0 %v196
  %278 = vmatprep.subr.bf16.mxu0 0
  %279 = vmatpush1.bf16.msra.mxu0 %v197
  %280 = vmatprep.subr.bf16.mxu0 0
  %281 = vmatpush1.bf16.msra.mxu0 0
  %282 = vmatprep.subr.bf16.mxu0 0
  %283 = vmatpush1.bf16.msra.mxu0 0
  %284 = vmatprep.subr.bf16.mxu0 0
  %285 = vmatpush1.bf16.msra.mxu0 0
  %286 = vmatprep.subr.bf16.mxu0 0
  %287 = vmatpush1.bf16.msra.mxu0 0
  %288 = vmatprep.subr.bf16.mxu0 0
  %289 = vmatpush1.bf16.msra.mxu0 0
  %290 = vmatprep.subr.bf16.mxu0 0
  %291 = vmatpush1.bf16.msra.mxu0 0
  %292 = vmatprep.subr.bf16.mxu0 0
  %293 = vmatpush1.bf16.msra.mxu0 0
  %294 = vmatprep.subr.bf16.mxu0 0
  %295 = vmatpush1.bf16.msra.mxu0 0
  %296 = vmatprep.subr.bf16.mxu0 0
  %297 = vmatpush1.bf16.msra.mxu0 0
  %298 = vmatprep.subr.bf16.mxu0 0
  %299 = vmatpush1.bf16.msra.mxu0 0
  %300 = vmatprep.subr.bf16.mxu0 0
  %301 = vmatpush1.bf16.msra.mxu0 0
  %302 = vmatprep.subr.bf16.mxu0 0
  %303 = vmatpush1.bf16.msra.mxu0 0
  %304 = vmatprep.subr.bf16.mxu0 0
  %305 = vmatpush1.bf16.msra.mxu0 0
  %306 = vmatprep.subr.bf16.mxu0 0
  %307 = vmatpush1.bf16.msra.mxu0 0
  %308 = vmatprep.mubr.bf16.mxu0 0
  %309 = vmatmul.mubr.bf16.gmra.mrb[0].mxu0 %v202
  %v310 = vpop.f32.mrb[0].mxu0
  %v311 = vadd.f32 0.0, %v310
  %v312 = vpop.f32.mrb[0].mxu0
  %v313 = vpop.f32.mrb[0].mxu0
  %v314 = vadd.f32 0.0, %v313
  %v315 = vpop.f32.mrb[0].mxu0
  %316 = vmatprep.mubr.bf16.mxu0 0
  %317 = vmatmul.mubr.bf16.gmra.mrb[0].mxu0 %v205
  %v318 = vpop.f32.mrb[0].mxu0
  %v319 = vadd.f32 0.0, %v318
  %v320 = vpop.f32.mrb[0].mxu0
  %v321 = vpop.f32.mrb[0].mxu0
  %v322 = vadd.f32 0.0, %v321
  %v323 = vpop.f32.mrb[0].mxu0
  %324 = vmatprep.mubr.bf16.mxu0 0
  %325 = vmatmul.mubr.bf16.gmra.mrb[0].mxu0 %v208
  %v326 = vpop.f32.mrb[0].mxu0
  %v327 = vadd.f32 0.0, %v326
  %v328 = vpop.f32.mrb[0].mxu0
  %v329 = vpop.f32.mrb[0].mxu0
  %v330 = vadd.f32 0.0, %v329
  %v331 = vpop.f32.mrb[0].mxu0
  %332 = vmatprep.mubr.bf16.mxu0 0
  %333 = vmatmul.mubr.bf16.gmra.mrb[0].mxu0 %v211
  %v334 = vpop.f32.mrb[0].mxu0
  %v335 = vadd.f32 0.0, %v334
  %v336 = vpop.f32.mrb[0].mxu0
  %v337 = vpop.f32.mrb[0].mxu0
  %v338 = vadd.f32 0.0, %v337
  %v339 = vpop.f32.mrb[0].mxu0
  %340 = vmatprep.mubr.bf16.mxu0 0
  %341 = vmatmul.mubr.bf16.gmra.mrb[0].mxu0 %v214
  %v342 = vpop.f32.mrb[0].mxu0
  %v343 = vadd.f32 0.0, %v342
  %v344 = vpop.f32.mrb[0].mxu0
  %v345 = vpop.f32.mrb[0].mxu0
  %v346 = vadd.f32 0.0, %v345
  %v347 = vpop.f32.mrb[0].mxu0
  %348 = vmatprep.mubr.bf16.mxu0 0
  %349 = vmatmul.mubr.bf16.gmra.mrb[0].mxu0 %v217
  %v350 = vpop.f32.mrb[0].mxu0
  %v351 = vadd.f32 0.0, %v350
  %v352 = vpop.f32.mrb[0].mxu0
  %v353 = vpop.f32.mrb[0].mxu0
  %v354 = vadd.f32 0.0, %v353
  %v355 = vpop.f32.mrb[0].mxu0
  %356 = vmatprep.mubr.bf16.mxu0 0
  %357 = vmatmul.mubr.bf16.gmra.mrb[0].mxu0 %v220
  %v358 = vpop.f32.mrb[0].mxu0
  %v359 = vadd.f32 0.0, %v358
  %v360 = vpop.f32.mrb[0].mxu0
  %v361 = vpop.f32.mrb[0].mxu0
  %v362 = vadd.f32 0.0, %v361
  %v363 = vpop.f32.mrb[0].mxu0
  %364 = vmatprep.mubr.bf16.mxu0 0
  %365 = vmatmul.mubr.bf16.gmra.mrb[0].mxu0 %v223
  %v366 = vpop.f32.mrb[0].mxu0
  %v367 = vadd.f32 0.0, %v366
  %v368 = vpop.f32.mrb[0].mxu0
  %v369 = vpop.f32.mrb[0].mxu0
  %v370 = vadd.f32 0.0, %v369
  %v371 = vpop.f32.mrb[0].mxu0
  %372 = vmatprep.mubr.bf16.mxu0 0
  %373 = vmatmul.mubr.bf16.gmra.mrb[0].mxu0 %v226
  %v374 = vpop.f32.mrb[0].mxu0
  %v375 = vadd.f32 0.0, %v374
  %v376 = vpop.f32.mrb[0].mxu0
  %v377 = vpop.f32.mrb[0].mxu0
  %v378 = vadd.f32 0.0, %v377
  %v379 = vpop.f32.mrb[0].mxu0
  %380 = vmatprep.mubr.bf16.mxu0 0
  %381 = vmatmul.mubr.bf16.gmra.mrb[0].mxu0 %v229
  %v382 = vpop.f32.mrb[0].mxu0
  %v383 = vadd.f32 0.0, %v382
  %v384 = vpop.f32.mrb[0].mxu0
  %v385 = vpop.f32.mrb[0].mxu0
  %v386 = vadd.f32 0.0, %v385
  %v387 = vpop.f32.mrb[0].mxu0
  %388 = vmatprep.mubr.bf16.mxu0 0
  %389 = vmatmul.mubr.bf16.gmra.mrb[0].mxu0 %v232
  %v390 = vpop.f32.mrb[0].mxu0
  %v391 = vadd.f32 0.0, %v390
  %v392 = vpop.f32.mrb[0].mxu0
  %v393 = vpop.f32.mrb[0].mxu0
  %v394 = vadd.f32 0.0, %v393
  %v395 = vpop.f32.mrb[0].mxu0
  %396 = vmatprep.mubr.bf16.mxu0 0
  %397 = vmatmul.mubr.bf16.gmra.mrb[0].mxu0 %v235
  %v398 = vpop.f32.mrb[0].mxu0
  %v399 = vadd.f32 0.0, %v398
  %v400 = vpop.f32.mrb[0].mxu0
  %v401 = vpop.f32.mrb[0].mxu0
  %v402 = vadd.f32 0.0, %v401
  %v403 = vpop.f32.mrb[0].mxu0
  %404 = vmatprep.mubr.bf16.mxu0 0
  %405 = vmatmul.mubr.bf16.gmra.mrb[0].mxu0 %v238
  %v406 = vpop.f32.mrb[0].mxu0
  %v407 = vadd.f32 0.0, %v406
  %v408 = vpop.f32.mrb[0].mxu0
  %v409 = vpop.f32.mrb[0].mxu0
  %v410 = vadd.f32 0.0, %v409
  %v411 = vpop.f32.mrb[0].mxu0
  %412 = vmatprep.mubr.bf16.mxu0 0
  %413 = vmatmul.mubr.bf16.gmra.mrb[0].mxu0 %v241
  %v414 = vpop.f32.mrb[0].mxu0
  %v415 = vadd.f32 0.0, %v414
  %v416 = vpop.f32.mrb[0].mxu0
  %v417 = vpop.f32.mrb[0].mxu0
  %v418 = vadd.f32 0.0, %v417
  %v419 = vpop.f32.mrb[0].mxu0
  %420 = vmatprep.mubr.bf16.mxu0 0
  %421 = vmatmul.mubr.bf16.gmra.mrb[0].mxu0 %v244
  %v422 = vpop.f32.mrb[0].mxu0
  %v423 = vadd.f32 0.0, %v422
  %v424 = vpop.f32.mrb[0].mxu0
  %v425 = vpop.f32.mrb[0].mxu0
  %v426 = vadd.f32 0.0, %v425
  %v427 = vpop.f32.mrb[0].mxu0
  %428 = vmatprep.mubr.bf16.mxu0 0
  %429 = vmatmul.mubr.bf16.gmra.mrb[0].mxu0 %v247
  %v430 = vpop.f32.mrb[0].mxu0
  %v431 = vadd.f32 0.0, %v430
  %v432 = vpop.f32.mrb[0].mxu0
  %v433 = vpop.f32.mrb[0].mxu0
  %v434 = vadd.f32 0.0, %v433
  %v435 = vpop.f32.mrb[0].mxu0
  %436 = vmatprep.mubr.bf16.mxu0 0
  %437 = vmatmul.mubr.bf16.gmra.mrb[0].mxu0 %v250
  %v438 = vpop.f32.mrb[0].mxu0
  %v439 = vadd.f32 0.0, %v438
  %v440 = vpop.f32.mrb[0].mxu0
  %v441 = vpop.f32.mrb[0].mxu0
  %v442 = vadd.f32 0.0, %v441
  %v443 = vpop.f32.mrb[0].mxu0
  %444 = vmatprep.mubr.bf16.mxu0 0
  %445 = vmatmul.mubr.bf16.gmra.mrb[0].mxu0 %v253
  %v446 = vpop.f32.mrb[0].mxu0
  %v447 = vadd.f32 0.0, %v446
  %v448 = vpop.f32.mrb[0].mxu0
  %v449 = vpop.f32.mrb[0].mxu0
  %v450 = vadd.f32 0.0, %v449
  %v451 = vpop.f32.mrb[0].mxu0
  %452 = vmatprep.mubr.bf16.mxu0 0
  %453 = vmatmul.mubr.bf16.gmra.mrb[0].mxu0 %v256
  %v454 = vpop.f32.mrb[0].mxu0
  %v455 = vadd.f32 0.0, %v454
  %v456 = vpop.f32.mrb[0].mxu0
  %v457 = vpop.f32.mrb[0].mxu0
  %v458 = vadd.f32 0.0, %v457
  %v459 = vpop.f32.mrb[0].mxu0
  %460 = vmatprep.mubr.bf16.mxu0 0
  %461 = vmatmul.mubr.bf16.gmra.mrb[0].mxu0 %v259
  %v462 = vpop.f32.mrb[0].mxu0
  %v463 = vadd.f32 0.0, %v462
  %v464 = vpop.f32.mrb[0].mxu0
  %v465 = vpop.f32.mrb[0].mxu0
  %v466 = vadd.f32 0.0, %v465
  %v467 = vpop.f32.mrb[0].mxu0
  %468 = vmatprep.mubr.bf16.mxu0 0
  %469 = vmatmul.mubr.bf16.gmra.mrb[0].mxu0 %v262
  %v470 = vpop.f32.mrb[0].mxu0
  %v471 = vadd.f32 0.0, %v470
  %v472 = vpop.f32.mrb[0].mxu0
  %v473 = vpop.f32.mrb[0].mxu0
  %v474 = vadd.f32 0.0, %v473
  %v475 = vpop.f32.mrb[0].mxu0
  %476 = vmatprep.mubr.bf16.mxu0 0
  %477 = vmatmul.mubr.bf16.gmra.mrb[0].mxu0 %v265
  %v478 = vpop.f32.mrb[0].mxu0
  %v479 = vadd.f32 0.0, %v478
  %v480 = vpop.f32.mrb[0].mxu0
  %v481 = vpop.f32.mrb[0].mxu0
  %v482 = vadd.f32 0.0, %v481
  %v483 = vpop.f32.mrb[0].mxu0
  %484 = vmatprep.mubr.bf16.mxu0 0
  %485 = vmatmul.mubr.bf16.gmra.mrb[0].mxu0 %v268
  %v486 = vpop.f32.mrb[0].mxu0
  %v487 = vadd.f32 0.0, %v486
  %v488 = vpop.f32.mrb[0].mxu0
  %v489 = vpop.f32.mrb[0].mxu0
  %v490 = vadd.f32 0.0, %v489
  %v491 = vpop.f32.mrb[0].mxu0
  %492 = vmatprep.mubr.bf16.mxu0 0
  %493 = vmatmul.mubr.bf16.gmra.mrb[0].mxu0 %v271
  %v494 = vpop.f32.mrb[0].mxu0
  %v495 = vadd.f32 0.0, %v494
  %v496 = vpop.f32.mrb[0].mxu0
  %v497 = vpop.f32.mrb[0].mxu0
  %v498 = vadd.f32 0.0, %v497
  %v499 = vpop.f32.mrb[0].mxu0
  %500 = vmatprep.mubr.bf16.mxu0 0
  %501 = vmatmul.mubr.bf16.gmra.mrb[0].mxu0 %v274
  %v502 = vpop.f32.mrb[0].mxu0
  %v503 = vadd.f32 0.0, %v502
  %v504 = vpop.f32.mrb[0].mxu0
  %v505 = vpop.f32.mrb[0].mxu0
  %v506 = vpop.f32.mrb[0].mxu0
  %507 = vdwg.mxu0
  %vm508 = vcmask 523264
  %509 = vst.msk [vmem:[%s2] sm:$0xff] %vm508, %v311
  %510 = vst.msk [vmem:[%s2 + $0x8] sm:$0xff] %vm508, %v314
  %511 = vst.msk [vmem:[%s2 + $0x10] sm:$0xff] %vm508, %v319
  %512 = vst.msk [vmem:[%s2 + $0x18] sm:$0xff] %vm508, %v322
  %513 = vst.msk [vmem:[%s2 + $0x20] sm:$0xff] %vm508, %v327
  %514 = vst.msk [vmem:[%s2 + $0x28] sm:$0xff] %vm508, %v330
  %515 = vst.msk [vmem:[%s2 + $0x30] sm:$0xff] %vm508, %v335
  %516 = vst.msk [vmem:[%s2 + $0x38] sm:$0xff] %vm508, %v338
  %517 = vst.msk [vmem:[%s2 + $0x40] sm:$0xff] %vm508, %v343
  %518 = vst.msk [vmem:[%s2 + $0x48] sm:$0xff] %vm508, %v346
  %519 = vst.msk [vmem:[%s2 + $0x50] sm:$0xff] %vm508, %v351
  %520 = vst.msk [vmem:[%s2 + $0x58] sm:$0xff] %vm508, %v354
  %521 = vst.msk [vmem:[%s2 + $0x60] sm:$0xff] %vm508, %v359
  %522 = vst.msk [vmem:[%s2 + $0x68] sm:$0xff] %vm508, %v362
  %523 = vst.msk [vmem:[%s2 + $0x70] sm:$0xff] %vm508, %v367
  %524 = vst.msk [vmem:[%s2 + $0x78] sm:$0xff] %vm508, %v370
  %525 = vst.msk [vmem:[%s2 + $0x80] sm:$0xff] %vm508, %v375
  %526 = vst.msk [vmem:[%s2 + $0x88] sm:$0xff] %vm508, %v378
  %527 = vst.msk [vmem:[%s2 + $0x90] sm:$0xff] %vm508, %v383
  %528 = vst.msk [vmem:[%s2 + $0x98] sm:$0xff] %vm508, %v386
  %529 = vst.msk [vmem:[%s2 + $0xa0] sm:$0xff] %vm508, %v391
  %530 = vst.msk [vmem:[%s2 + $0xa8] sm:$0xff] %vm508, %v394
  %531 = vst.msk [vmem:[%s2 + $0xb0] sm:$0xff] %vm508, %v399
  %532 = vst.msk [vmem:[%s2 + $0xb8] sm:$0xff] %vm508, %v402
  %533 = vst.msk [vmem:[%s2 + $0xc0] sm:$0xff] %vm508, %v407
  %534 = vst.msk [vmem:[%s2 + $0xc8] sm:$0xff] %vm508, %v410
  %535 = vst.msk [vmem:[%s2 + $0xd0] sm:$0xff] %vm508, %v415
  %536 = vst.msk [vmem:[%s2 + $0xd8] sm:$0xff] %vm508, %v418
  %537 = vst.msk [vmem:[%s2 + $0xe0] sm:$0xff] %vm508, %v423
  %538 = vst.msk [vmem:[%s2 + $0xe8] sm:$0xff] %vm508, %v426
  %539 = vst.msk [vmem:[%s2 + $0xf0] sm:$0xff] %vm508, %v431
  %540 = vst.msk [vmem:[%s2 + $0xf8] sm:$0xff] %vm508, %v434
  %541 = vst.msk [vmem:[%s2 + $0x100] sm:$0xff] %vm508, %v439
  %542 = vst.msk [vmem:[%s2 + $0x108] sm:$0xff] %vm508, %v442
  %543 = vst.msk [vmem:[%s2 + $0x110] sm:$0xff] %vm508, %v447
  %544 = vst.msk [vmem:[%s2 + $0x118] sm:$0xff] %vm508, %v450
  %545 = vst.msk [vmem:[%s2 + $0x120] sm:$0xff] %vm508, %v455
  %546 = vst.msk [vmem:[%s2 + $0x128] sm:$0xff] %vm508, %v458
  %547 = vst.msk [vmem:[%s2 + $0x130] sm:$0xff] %vm508, %v463
  %548 = vst.msk [vmem:[%s2 + $0x138] sm:$0xff] %vm508, %v466
  %549 = vst.msk [vmem:[%s2 + $0x140] sm:$0xff] %vm508, %v471
  %550 = vst.msk [vmem:[%s2 + $0x148] sm:$0xff] %vm508, %v474
  %551 = vst.msk [vmem:[%s2 + $0x150] sm:$0xff] %vm508, %v479
  %552 = vst.msk [vmem:[%s2 + $0x158] sm:$0xff] %vm508, %v482
  %553 = vst.msk [vmem:[%s2 + $0x160] sm:$0xff] %vm508, %v487
  %554 = vst.msk [vmem:[%s2 + $0x168] sm:$0xff] %vm508, %v490
  %555 = vst.msk [vmem:[%s2 + $0x170] sm:$0xff] %vm508, %v495
  %556 = vst.msk [vmem:[%s2 + $0x178] sm:$0xff] %vm508, %v498
  %557 = vst.msk [vmem:[%s2 + $0x180] sm:$0xff] %vm508, %v503
  // Predicated region
  $region10: #{vae_forward.13} parent=0 // pred_check
    _
  $region11: #{vae_forward.13} parent=0 // pred_check_branch
    %559 = sbr.rel (0) target = $region13
  $region12: #{vae_forward.13} parent=0 // pred_region
    _
  $region13: #{vae_forward.13} parent=0 // pred_fallthru
    _
  // Predicated region
  $region14: #{vae_forward.13} parent=0 // pred_check
    _
  $region15: #{vae_forward.13} parent=0 // pred_check_branch
    %561 = sbr.rel (0) target = $region17
  $region16: #{vae_forward.13} parent=0 // pred_region
    _
  $region17: #{vae_forward.13} parent=0 // pred_fallthru
    _

</llo_original>
